<compile_context>
chip_gen: v7x
topology: tpu7x:2x2x1
jax: 0.10.0
libtpu: 0.0.40
codegen_flags: <defaults>
</compile_context>

<pallas_src>
import numpy as np
import jax
import jax.numpy as jnp
from jax import lax
from jax.experimental import pallas as pl
from jax.experimental.pallas import tpu as pltpu


# ----------------------------------------------------------------------------
# Pallas kernel: per grid step, project TS timesteps of x, then run the serial
# recurrence with h/c carried in VMEM scratch.
# ----------------------------------------------------------------------------
def lstm_kernel(x_ref, w_hbm, b_ref, out_ref,
                w_vmem, dma_sem, gx_scr, h_scr, c_scr):
    TS, BB, HP = x_ref.shape
    GP = 4 * HP

    # First timestep of each batch block: pull the grid-invariant weights into
    # a SINGLE VMEM buffer (no double-buffering / re-streaming) and zero the
    # recurrent state.  Keyed on the time axis so it is correct both on a
    # single TC and when the batch axis is sharded across v7x's two TCs.
    @pl.when(pl.program_id(1) == 0)
    def _():
        cp = pltpu.make_async_copy(w_hbm, w_vmem, dma_sem)
        cp.start()
        cp.wait()
        h_scr[...] = jnp.zeros_like(h_scr)
        c_scr[...] = jnp.zeros_like(c_scr)

    # --- Input projection for the whole TS block (independent of h, so it is
    # off the serial critical path): gx[s] = x[s] @ Wx + b, parked in VMEM.
    bias = b_ref[...]                                      # (1, GP) f32

    def proj(s, carry):
        gx_scr[s] = (jnp.dot(x_ref[s], w_vmem[0],
                             preferred_element_type=jnp.float32) + bias)
        return carry

    lax.fori_loop(0, TS, proj, 0, unroll=min(TS, 8))

    # --- Serial recurrence.  Gate layout is [i, f, o, g]:
    #   * one sigmoid over the first 3*HP lanes, one tanh over the last HP,
    #   * the recurrent matmul reads lane-aligned SLICES of the weight ref, so
    #     the full (HP, 4HP) Wh is never held live across the unrolled loop.
    def step(s, carry):
        h, c = carry                                       # (BB, HP) f32
        h_b = h.astype(jnp.bfloat16)
        gx = gx_scr[s]                                     # (BB, GP) f32
        pre_sig = gx[:, :3 * HP] + jnp.dot(
            h_b, w_vmem[1, :, :3 * HP], preferred_element_type=jnp.float32)
        pre_tanh = gx[:, 3 * HP:] + jnp.dot(
            h_b, w_vmem[1, :, 3 * HP:], preferred_element_type=jnp.float32)
        sfo = jax.nn.sigmoid(pre_sig)                      # i, f, o in one dispatch
        g_t = jnp.tanh(pre_tanh)
        i_t = sfo[:, :HP]
        f_t = sfo[:, HP:2 * HP]
        o_t = sfo[:, 2 * HP:]
        c_new = f_t * c + i_t * g_t
        h_new = o_t * jnp.tanh(c_new)
        out_ref[0, s] = h_new
        out_ref[1, s] = c_new
        out_ref[2, s] = o_t
        return h_new, c_new

    h, c = lax.fori_loop(0, TS, step, (h_scr[...], c_scr[...]),
                         unroll=min(TS, 8))
    h_scr[...] = h
    c_scr[...] = c


# ----------------------------------------------------------------------------
# Parameter padding / preprocessing (layout plumbing, not the hot path).
# ----------------------------------------------------------------------------
def _round_up(x, m):
    return ((x + m - 1) // m) * m


def _pad_params(path_table, gate_w, gate_b, hp):
    """Pad H -> hp (lane-dense).  Padded rows/cols/bias are zero so padded h/c
    lanes stay exactly 0.  Gate order in the padded layout is [i, f, o, g] so
    the kernel applies one sigmoid to the first 3*hp lanes and one tanh to the
    last hp lanes."""
    type_size, h = path_table.shape
    gp = 4 * hp
    pt = np.zeros((type_size, hp), np.float32)
    pt[:, :h] = np.asarray(path_table)
    wx = np.asarray(gate_w[:h])                 # (H, 4H): x part
    wh = np.asarray(gate_w[h:])                 # (H, 4H): h part
    gb = np.asarray(gate_b)
    w_p = np.zeros((2, hp, gp), np.float32)     # [0]=Wx, [1]=Wh
    b_p = np.zeros((1, gp), np.float32)
    perm = (0, 1, 3, 2)                         # new [i,f,o,g] <- torch [i,f,g,o]
    for k, src in enumerate(perm):
        w_p[0, :h, k * hp:k * hp + h] = wx[:, src * h:(src + 1) * h]
        w_p[1, :h, k * hp:k * hp + h] = wh[:, src * h:(src + 1) * h]
        b_p[0, k * hp:k * hp + h] = gb[src * h:(src + 1) * h]
    return (jnp.asarray(pt, jnp.bfloat16),
            jnp.asarray(w_p, jnp.bfloat16),
            jnp.asarray(b_p, jnp.float32))


# ----------------------------------------------------------------------------
# Forward wrapper.
# ----------------------------------------------------------------------------
def lstmfs_forward(event_seqs, path_table, gate_w, gate_b, ts=8):
    """event_seqs: (T, B) int32 node indices (time-major, as in the PyTorch
    forward); path_table: (type_size, H) f32; gate_w: (2H, 4H) f32 (rows 0:H are
    the emb part, rows H:2H the h part); gate_b: (4H,) f32.
    Returns (3, T, B, H) = stack((h_seq, c_seq, o_seq))."""
    T, B = event_seqs.shape
    H = path_table.shape[1]
    HP = _round_up(H, 128)
    GP = 4 * HP
    BP = _round_up(B, 8)                        # fill the 8 f32 sublanes
    BB = min(BP, 8)                             # batch block per grid step/core
    TS = max(1, int(ts))                        # timesteps fused per grid step
    T_pad = _round_up(T, TS)                    # pad T (discard trailing outputs)

    pt_p, w_p, b_p = _pad_params(path_table, gate_w, gate_b, HP)

    ev = jnp.zeros((T_pad, BP), jnp.int32).at[:T, :B].set(event_seqs)
    x = pt_p[ev]                                # (T_pad, BP, HP) bf16 gather

    out = pl.pallas_call(
        lstm_kernel,
        out_shape=jax.ShapeDtypeStruct((3, T_pad, BP, HP), jnp.float32),
        grid_spec=pltpu.PrefetchScalarGridSpec(
            num_scalar_prefetch=0,
            grid=(BP // BB, T_pad // TS),       # (batch blocks, time blocks)
            in_specs=[
                pl.BlockSpec((TS, BB, HP), lambda b, t: (t, b, 0)),  # x (bf16)
                pl.BlockSpec(memory_space=pl.ANY),                   # [Wx;Wh] HBM
                pl.BlockSpec((1, GP), lambda b, t: (0, 0)),          # bias
            ],
            out_specs=pl.BlockSpec((3, TS, BB, HP), lambda b, t: (0, t, b, 0)),
            scratch_shapes=[
                pltpu.VMEM((2, HP, GP), jnp.bfloat16),  # weights, single copy
                pltpu.SemaphoreType.DMA,                # weight-copy semaphore
                pltpu.VMEM((TS, BB, GP), jnp.float32),  # per-block input gates
                pltpu.VMEM((BB, HP), jnp.float32),      # h carry
                pltpu.VMEM((BB, HP), jnp.float32),      # c carry
            ],
        ),
        compiler_params=pltpu.CompilerParams(
            dimension_semantics=("parallel", "arbitrary"),  # batch ∥, time serial
            vmem_limit_bytes=64 * 1024 * 1024),
    )(x, w_p, b_p)

    # Strip time/batch/lane padding (layout plumbing in the wrapper).
    return out[:, :T, :B, :H]


# ----------------------------------------------------------------------------
# Pure-JAX reference of the identical computation (same bf16-rounded params,
# same gate order, same fused projection) for validation.
# ----------------------------------------------------------------------------
def reference_forward(event_seqs, path_table, gate_w, gate_b):
    T, B = event_seqs.shape
    H = path_table.shape[1]
    HP = _round_up(H, 128)
    pt_p, w_p, b_p = _pad_params(path_table, gate_w, gate_b, HP)
    x = pt_p[event_seqs]                        # (T, B, HP) bf16
    h = jnp.zeros((B, HP), jnp.float32)
    c = jnp.zeros((B, HP), jnp.float32)
    hs, cs, os_ = [], [], []
    for t in range(T):
        gx = jnp.dot(x[t], w_p[0], preferred_element_type=jnp.float32) + b_p
        gates = gx + jnp.dot(h.astype(jnp.bfloat16), w_p[1],
                             preferred_element_type=jnp.float32)
        sfo = jax.nn.sigmoid(gates[:, :3 * HP])
        g_t = jnp.tanh(gates[:, 3 * HP:])
        i_t, f_t, o_t = sfo[:, :HP], sfo[:, HP:2 * HP], sfo[:, 2 * HP:]
        c = f_t * c + i_t * g_t
        h = o_t * jnp.tanh(c)
        hs.append(h); cs.append(c); os_.append(o_t)
    out = jnp.stack([jnp.stack(hs), jnp.stack(cs), jnp.stack(os_)])
    return out[..., :H]


def build_path_table(emb, node_weight, parents):
    """Fold LSTMfs._fs_map's data-dependent ancestor walk into a (type_size, H)
    lookup table (the walk depends only on the node index for a fixed fs tree).
    Matches the PyTorch loop: multiplier starts at 1.0 at the node itself, then
    is multiplied by node_weight[node] before stepping to the parent."""
    type_size, H = emb.shape
    table = np.zeros((type_size, H), np.float32)
    for n in range(type_size):
        w = 1.0
        node = n
        while node is not None:
            table[n] += w * emb[node]
            w = w * float(node_weight[node])
            node = parents[node]
    return table


if __name__ == "__main__":
    # Small, deterministic configuration.
    T, B = 16, 2             # sequence length, batch (padded to BP=8 internally)
    H = 32                   # hidden_dim = fs.size (padded to HP=128 internally)
    TYPE_SIZE = 16           # len(fs.inodes)

    key = jax.random.PRNGKey(0)
    k_emb, k_w, k_gw, k_gb, k_seq = jax.random.split(key, 5)

    # Parameters (deterministic, synthetic).
    emb = np.asarray(jax.random.normal(k_emb, (TYPE_SIZE, H), jnp.float32)) * 0.1
    node_weight = np.asarray(
        jax.random.uniform(k_w, (TYPE_SIZE,), jnp.float32, 0.5, 1.0))
    gate_w = jax.random.normal(k_gw, (2 * H, 4 * H), jnp.float32) * 0.1
    gate_b = jax.random.normal(k_gb, (4 * H,), jnp.float32) * 0.1

    # Synthetic filesystem tree: node 0 is root, parent(n) = (n-1)//2.
    parents = [None] + [(n - 1) // 2 for n in range(1, TYPE_SIZE)]
    path_table = jnp.asarray(build_path_table(emb, node_weight, parents))

    # Input event sequences: (T, B) node indices.
    event_seqs = jax.random.randint(k_seq, (T, B), 0, TYPE_SIZE, jnp.int32)

    out = lstmfs_forward(event_seqs, path_table, gate_w, gate_b, ts=8)
    out = jax.block_until_ready(out)

    ref = reference_forward(event_seqs, path_table, gate_w, gate_b)
    np.testing.assert_allclose(np.asarray(out), np.asarray(ref),
                               rtol=1e-3, atol=1e-3)
    assert out.shape == (3, T, B, H)
    print("KERNEL_OK")
</pallas_src>

<mosaic_0001>
module attributes {stable_mosaic.version = 11 : i64} {
  func.func @lstm_kernel(%arg0: i32, %arg1: i32, %arg2: memref<8x8x128xbf16, #tpu.memory_space<vmem>>, %arg3: memref<2x128x512xbf16, #tpu.memory_space<any>>, %arg4: memref<1x512xf32, #tpu.memory_space<vmem>>, %arg5: memref<3x8x8x128xf32, #tpu.memory_space<vmem>>, %arg6: memref<2x128x512xbf16, #tpu.memory_space<vmem>>, %arg7: memref<!tpu.dma_semaphore, #tpu.memory_space<semaphore_mem>>, %arg8: memref<8x8x512xf32, #tpu.memory_space<vmem>>, %arg9: memref<8x128xf32, #tpu.memory_space<vmem>>, %arg10: memref<8x128xf32, #tpu.memory_space<vmem>>) attributes {dimension_semantics = [#tpu.dimension_semantics<parallel>, #tpu.dimension_semantics<arbitrary>], iteration_bounds = array<i64: 1, 2>, scalar_prefetch = 0 : i64, scratch_operands = 5 : i64, tpu.core_type = #tpu.core_type<tc>, window_params = [{transform_indices = @transform_0, window_bounds = array<i64: 8, 8, 128>}, {}, {pipeline_mode = #tpu.pipeline_mode<synchronous>, transform_indices = @transform_2, window_bounds = array<i64: 1, 512>}, {transform_indices = @transform_3, window_bounds = array<i64: 3, 8, 8, 128>}]} {
    %c0_i32 = arith.constant 0 : i32
    %0 = arith.cmpi eq, %arg1, %c0_i32 : i32
    %1 = arith.extui %0 : i1 to i32
    %c0_i32_0 = arith.constant 0 : i32
    %2 = arith.cmpi ne, %1, %c0_i32_0 : i32
    scf.if %2 {
      tpu.enqueue_dma source(%arg3 : memref<2x128x512xbf16, #tpu.memory_space<any>>) target(%arg6 : memref<2x128x512xbf16, #tpu.memory_space<vmem>>) target_semaphore(%arg7 : memref<!tpu.dma_semaphore, #tpu.memory_space<semaphore_mem>>)
      tpu.wait_dma2 semaphore(%arg7 : memref<!tpu.dma_semaphore, #tpu.memory_space<semaphore_mem>>) src(%arg3 : memref<2x128x512xbf16, #tpu.memory_space<any>>) dst(%arg6 : memref<2x128x512xbf16, #tpu.memory_space<vmem>>)
      %cst_240 = arith.constant 0.000000e+00 : f32
      %424 = vector.broadcast %cst_240 : f32 to vector<8x128xf32>
      %c0_241 = arith.constant 0 : index
      %c0_242 = arith.constant 0 : index
      %425 = vector.load %arg9[%c0_241, %c0_242] : memref<8x128xf32, #tpu.memory_space<vmem>>, vector<8x128xf32>
      tpu.vector_store %arg9[%c0_241, %c0_242], %424 {strides = array<i32>} : memref<8x128xf32, #tpu.memory_space<vmem>>, vector<8x128xf32>,
      %cst_243 = arith.constant 0.000000e+00 : f32
      %426 = vector.broadcast %cst_243 : f32 to vector<8x128xf32>
      %c0_244 = arith.constant 0 : index
      %c0_245 = arith.constant 0 : index
      %427 = vector.load %arg10[%c0_244, %c0_245] : memref<8x128xf32, #tpu.memory_space<vmem>>, vector<8x128xf32>
      tpu.vector_store %arg10[%c0_244, %c0_245], %426 {strides = array<i32>} : memref<8x128xf32, #tpu.memory_space<vmem>>, vector<8x128xf32>,
    } else {
    }
    %c0 = arith.constant 0 : index
    %c0_1 = arith.constant 0 : index
    %3 = vector.load %arg4[%c0, %c0_1] : memref<1x512xf32, #tpu.memory_space<vmem>>, vector<1x512xf32>
    %c0_i32_2 = arith.constant 0 : i32
    %4 = arith.index_cast %c0_i32_2 : i32 to index
    %c0_3 = arith.constant 0 : index
    %c0_4 = arith.constant 0 : index
    %5 = vector.load %arg2[%4, %c0_3, %c0_4] : memref<8x8x128xbf16, #tpu.memory_space<vmem>>, vector<1x8x128xbf16>
    %6 = vector.shape_cast %5 : vector<1x8x128xbf16> to vector<8x128xbf16>
    %c0_5 = arith.constant 0 : index
    %c0_6 = arith.constant 0 : index
    %c0_7 = arith.constant 0 : index
    %7 = vector.load %arg6[%c0_5, %c0_6, %c0_7] : memref<2x128x512xbf16, #tpu.memory_space<vmem>>, vector<1x128x512xbf16>
    %8 = vector.shape_cast %7 : vector<1x128x512xbf16> to vector<128x512xbf16>
    %cst = arith.constant dense<0.000000e+00> : vector<8x512xf32>
    %9 = tpu.matmul %6, %8, %cst {dimension_numbers = #tpu.dot_dimension_numbers<[1], [0], [0], [1], [0, 0, 1, 1], [], []>} : vector<8x128xbf16>, vector<128x512xbf16>, vector<8x512xf32> -> vector<8x512xf32>
    %10 = vector.broadcast %3 : vector<1x512xf32> to vector<8x512xf32>
    %11 = arith.addf %9, %10 : vector<8x512xf32>
    %12 = arith.index_cast %c0_i32_2 : i32 to index
    %c0_8 = arith.constant 0 : index
    %c0_9 = arith.constant 0 : index
    %13 = vector.load %arg8[%12, %c0_8, %c0_9] : memref<8x8x512xf32, #tpu.memory_space<vmem>>, vector<1x8x512xf32>
    %14 = vector.shape_cast %13 : vector<1x8x512xf32> to vector<8x512xf32>
    %15 = vector.shape_cast %11 : vector<8x512xf32> to vector<1x8x512xf32>
    tpu.vector_store %arg8[%12, %c0_8, %c0_9], %15 {strides = array<i32>} : memref<8x8x512xf32, #tpu.memory_space<vmem>>, vector<1x8x512xf32>,
    %c1_i32 = arith.constant 1 : i32
    %16 = arith.index_cast %c1_i32 : i32 to index
    %c0_10 = arith.constant 0 : index
    %c0_11 = arith.constant 0 : index
    %17 = vector.load %arg2[%16, %c0_10, %c0_11] : memref<8x8x128xbf16, #tpu.memory_space<vmem>>, vector<1x8x128xbf16>
    %18 = vector.shape_cast %17 : vector<1x8x128xbf16> to vector<8x128xbf16>
    %c0_12 = arith.constant 0 : index
    %c0_13 = arith.constant 0 : index
    %c0_14 = arith.constant 0 : index
    %19 = vector.load %arg6[%c0_12, %c0_13, %c0_14] : memref<2x128x512xbf16, #tpu.memory_space<vmem>>, vector<1x128x512xbf16>
    %20 = vector.shape_cast %19 : vector<1x128x512xbf16> to vector<128x512xbf16>
    %cst_15 = arith.constant dense<0.000000e+00> : vector<8x512xf32>
    %21 = tpu.matmul %18, %20, %cst_15 {dimension_numbers = #tpu.dot_dimension_numbers<[1], [0], [0], [1], [0, 0, 1, 1], [], []>} : vector<8x128xbf16>, vector<128x512xbf16>, vector<8x512xf32> -> vector<8x512xf32>
    %22 = vector.broadcast %3 : vector<1x512xf32> to vector<8x512xf32>
    %23 = arith.addf %21, %22 : vector<8x512xf32>
    %24 = arith.index_cast %c1_i32 : i32 to index
    %c0_16 = arith.constant 0 : index
    %c0_17 = arith.constant 0 : index
    %25 = vector.load %arg8[%24, %c0_16, %c0_17] : memref<8x8x512xf32, #tpu.memory_space<vmem>>, vector<1x8x512xf32>
    %26 = vector.shape_cast %25 : vector<1x8x512xf32> to vector<8x512xf32>
    %27 = vector.shape_cast %23 : vector<8x512xf32> to vector<1x8x512xf32>
    tpu.vector_store %arg8[%24, %c0_16, %c0_17], %27 {strides = array<i32>} : memref<8x8x512xf32, #tpu.memory_space<vmem>>, vector<1x8x512xf32>,
    %c2_i32 = arith.constant 2 : i32
    %28 = arith.index_cast %c2_i32 : i32 to index
    %c0_18 = arith.constant 0 : index
    %c0_19 = arith.constant 0 : index
    %29 = vector.load %arg2[%28, %c0_18, %c0_19] : memref<8x8x128xbf16, #tpu.memory_space<vmem>>, vector<1x8x128xbf16>
    %30 = vector.shape_cast %29 : vector<1x8x128xbf16> to vector<8x128xbf16>
    %c0_20 = arith.constant 0 : index
    %c0_21 = arith.constant 0 : index
    %c0_22 = arith.constant 0 : index
    %31 = vector.load %arg6[%c0_20, %c0_21, %c0_22] : memref<2x128x512xbf16, #tpu.memory_space<vmem>>, vector<1x128x512xbf16>
    %32 = vector.shape_cast %31 : vector<1x128x512xbf16> to vector<128x512xbf16>
    %cst_23 = arith.constant dense<0.000000e+00> : vector<8x512xf32>
    %33 = tpu.matmul %30, %32, %cst_23 {dimension_numbers = #tpu.dot_dimension_numbers<[1], [0], [0], [1], [0, 0, 1, 1], [], []>} : vector<8x128xbf16>, vector<128x512xbf16>, vector<8x512xf32> -> vector<8x512xf32>
    %34 = vector.broadcast %3 : vector<1x512xf32> to vector<8x512xf32>
    %35 = arith.addf %33, %34 : vector<8x512xf32>
    %36 = arith.index_cast %c2_i32 : i32 to index
    %c0_24 = arith.constant 0 : index
    %c0_25 = arith.constant 0 : index
    %37 = vector.load %arg8[%36, %c0_24, %c0_25] : memref<8x8x512xf32, #tpu.memory_space<vmem>>, vector<1x8x512xf32>
    %38 = vector.shape_cast %37 : vector<1x8x512xf32> to vector<8x512xf32>
    %39 = vector.shape_cast %35 : vector<8x512xf32> to vector<1x8x512xf32>
    tpu.vector_store %arg8[%36, %c0_24, %c0_25], %39 {strides = array<i32>} : memref<8x8x512xf32, #tpu.memory_space<vmem>>, vector<1x8x512xf32>,
    %c3_i32 = arith.constant 3 : i32
    %40 = arith.index_cast %c3_i32 : i32 to index
    %c0_26 = arith.constant 0 : index
    %c0_27 = arith.constant 0 : index
    %41 = vector.load %arg2[%40, %c0_26, %c0_27] : memref<8x8x128xbf16, #tpu.memory_space<vmem>>, vector<1x8x128xbf16>
    %42 = vector.shape_cast %41 : vector<1x8x128xbf16> to vector<8x128xbf16>
    %c0_28 = arith.constant 0 : index
    %c0_29 = arith.constant 0 : index
    %c0_30 = arith.constant 0 : index
    %43 = vector.load %arg6[%c0_28, %c0_29, %c0_30] : memref<2x128x512xbf16, #tpu.memory_space<vmem>>, vector<1x128x512xbf16>
    %44 = vector.shape_cast %43 : vector<1x128x512xbf16> to vector<128x512xbf16>
    %cst_31 = arith.constant dense<0.000000e+00> : vector<8x512xf32>
    %45 = tpu.matmul %42, %44, %cst_31 {dimension_numbers = #tpu.dot_dimension_numbers<[1], [0], [0], [1], [0, 0, 1, 1], [], []>} : vector<8x128xbf16>, vector<128x512xbf16>, vector<8x512xf32> -> vector<8x512xf32>
    %46 = vector.broadcast %3 : vector<1x512xf32> to vector<8x512xf32>
    %47 = arith.addf %45, %46 : vector<8x512xf32>
    %48 = arith.index_cast %c3_i32 : i32 to index
    %c0_32 = arith.constant 0 : index
    %c0_33 = arith.constant 0 : index
    %49 = vector.load %arg8[%48, %c0_32, %c0_33] : memref<8x8x512xf32, #tpu.memory_space<vmem>>, vector<1x8x512xf32>
    %50 = vector.shape_cast %49 : vector<1x8x512xf32> to vector<8x512xf32>
    %51 = vector.shape_cast %47 : vector<8x512xf32> to vector<1x8x512xf32>
    tpu.vector_store %arg8[%48, %c0_32, %c0_33], %51 {strides = array<i32>} : memref<8x8x512xf32, #tpu.memory_space<vmem>>, vector<1x8x512xf32>,
    %c4_i32 = arith.constant 4 : i32
    %52 = arith.index_cast %c4_i32 : i32 to index
    %c0_34 = arith.constant 0 : index
    %c0_35 = arith.constant 0 : index
    %53 = vector.load %arg2[%52, %c0_34, %c0_35] : memref<8x8x128xbf16, #tpu.memory_space<vmem>>, vector<1x8x128xbf16>
    %54 = vector.shape_cast %53 : vector<1x8x128xbf16> to vector<8x128xbf16>
    %c0_36 = arith.constant 0 : index
    %c0_37 = arith.constant 0 : index
    %c0_38 = arith.constant 0 : index
    %55 = vector.load %arg6[%c0_36, %c0_37, %c0_38] : memref<2x128x512xbf16, #tpu.memory_space<vmem>>, vector<1x128x512xbf16>
    %56 = vector.shape_cast %55 : vector<1x128x512xbf16> to vector<128x512xbf16>
    %cst_39 = arith.constant dense<0.000000e+00> : vector<8x512xf32>
    %57 = tpu.matmul %54, %56, %cst_39 {dimension_numbers = #tpu.dot_dimension_numbers<[1], [0], [0], [1], [0, 0, 1, 1], [], []>} : vector<8x128xbf16>, vector<128x512xbf16>, vector<8x512xf32> -> vector<8x512xf32>
    %58 = vector.broadcast %3 : vector<1x512xf32> to vector<8x512xf32>
    %59 = arith.addf %57, %58 : vector<8x512xf32>
    %60 = arith.index_cast %c4_i32 : i32 to index
    %c0_40 = arith.constant 0 : index
    %c0_41 = arith.constant 0 : index
    %61 = vector.load %arg8[%60, %c0_40, %c0_41] : memref<8x8x512xf32, #tpu.memory_space<vmem>>, vector<1x8x512xf32>
    %62 = vector.shape_cast %61 : vector<1x8x512xf32> to vector<8x512xf32>
    %63 = vector.shape_cast %59 : vector<8x512xf32> to vector<1x8x512xf32>
    tpu.vector_store %arg8[%60, %c0_40, %c0_41], %63 {strides = array<i32>} : memref<8x8x512xf32, #tpu.memory_space<vmem>>, vector<1x8x512xf32>,
    %c5_i32 = arith.constant 5 : i32
    %64 = arith.index_cast %c5_i32 : i32 to index
    %c0_42 = arith.constant 0 : index
    %c0_43 = arith.constant 0 : index
    %65 = vector.load %arg2[%64, %c0_42, %c0_43] : memref<8x8x128xbf16, #tpu.memory_space<vmem>>, vector<1x8x128xbf16>
    %66 = vector.shape_cast %65 : vector<1x8x128xbf16> to vector<8x128xbf16>
    %c0_44 = arith.constant 0 : index
    %c0_45 = arith.constant 0 : index
    %c0_46 = arith.constant 0 : index
    %67 = vector.load %arg6[%c0_44, %c0_45, %c0_46] : memref<2x128x512xbf16, #tpu.memory_space<vmem>>, vector<1x128x512xbf16>
    %68 = vector.shape_cast %67 : vector<1x128x512xbf16> to vector<128x512xbf16>
    %cst_47 = arith.constant dense<0.000000e+00> : vector<8x512xf32>
    %69 = tpu.matmul %66, %68, %cst_47 {dimension_numbers = #tpu.dot_dimension_numbers<[1], [0], [0], [1], [0, 0, 1, 1], [], []>} : vector<8x128xbf16>, vector<128x512xbf16>, vector<8x512xf32> -> vector<8x512xf32>
    %70 = vector.broadcast %3 : vector<1x512xf32> to vector<8x512xf32>
    %71 = arith.addf %69, %70 : vector<8x512xf32>
    %72 = arith.index_cast %c5_i32 : i32 to index
    %c0_48 = arith.constant 0 : index
    %c0_49 = arith.constant 0 : index
    %73 = vector.load %arg8[%72, %c0_48, %c0_49] : memref<8x8x512xf32, #tpu.memory_space<vmem>>, vector<1x8x512xf32>
    %74 = vector.shape_cast %73 : vector<1x8x512xf32> to vector<8x512xf32>
    %75 = vector.shape_cast %71 : vector<8x512xf32> to vector<1x8x512xf32>
    tpu.vector_store %arg8[%72, %c0_48, %c0_49], %75 {strides = array<i32>} : memref<8x8x512xf32, #tpu.memory_space<vmem>>, vector<1x8x512xf32>,
    %c6_i32 = arith.constant 6 : i32
    %76 = arith.index_cast %c6_i32 : i32 to index
    %c0_50 = arith.constant 0 : index
    %c0_51 = arith.constant 0 : index
    %77 = vector.load %arg2[%76, %c0_50, %c0_51] : memref<8x8x128xbf16, #tpu.memory_space<vmem>>, vector<1x8x128xbf16>
    %78 = vector.shape_cast %77 : vector<1x8x128xbf16> to vector<8x128xbf16>
    %c0_52 = arith.constant 0 : index
    %c0_53 = arith.constant 0 : index
    %c0_54 = arith.constant 0 : index
    %79 = vector.load %arg6[%c0_52, %c0_53, %c0_54] : memref<2x128x512xbf16, #tpu.memory_space<vmem>>, vector<1x128x512xbf16>
    %80 = vector.shape_cast %79 : vector<1x128x512xbf16> to vector<128x512xbf16>
    %cst_55 = arith.constant dense<0.000000e+00> : vector<8x512xf32>
    %81 = tpu.matmul %78, %80, %cst_55 {dimension_numbers = #tpu.dot_dimension_numbers<[1], [0], [0], [1], [0, 0, 1, 1], [], []>} : vector<8x128xbf16>, vector<128x512xbf16>, vector<8x512xf32> -> vector<8x512xf32>
    %82 = vector.broadcast %3 : vector<1x512xf32> to vector<8x512xf32>
    %83 = arith.addf %81, %82 : vector<8x512xf32>
    %84 = arith.index_cast %c6_i32 : i32 to index
    %c0_56 = arith.constant 0 : index
    %c0_57 = arith.constant 0 : index
    %85 = vector.load %arg8[%84, %c0_56, %c0_57] : memref<8x8x512xf32, #tpu.memory_space<vmem>>, vector<1x8x512xf32>
    %86 = vector.shape_cast %85 : vector<1x8x512xf32> to vector<8x512xf32>
    %87 = vector.shape_cast %83 : vector<8x512xf32> to vector<1x8x512xf32>
    tpu.vector_store %arg8[%84, %c0_56, %c0_57], %87 {strides = array<i32>} : memref<8x8x512xf32, #tpu.memory_space<vmem>>, vector<1x8x512xf32>,
    %c7_i32 = arith.constant 7 : i32
    %88 = arith.index_cast %c7_i32 : i32 to index
    %c0_58 = arith.constant 0 : index
    %c0_59 = arith.constant 0 : index
    %89 = vector.load %arg2[%88, %c0_58, %c0_59] : memref<8x8x128xbf16, #tpu.memory_space<vmem>>, vector<1x8x128xbf16>
    %90 = vector.shape_cast %89 : vector<1x8x128xbf16> to vector<8x128xbf16>
    %c0_60 = arith.constant 0 : index
    %c0_61 = arith.constant 0 : index
    %c0_62 = arith.constant 0 : index
    %91 = vector.load %arg6[%c0_60, %c0_61, %c0_62] : memref<2x128x512xbf16, #tpu.memory_space<vmem>>, vector<1x128x512xbf16>
    %92 = vector.shape_cast %91 : vector<1x128x512xbf16> to vector<128x512xbf16>
    %cst_63 = arith.constant dense<0.000000e+00> : vector<8x512xf32>
    %93 = tpu.matmul %90, %92, %cst_63 {dimension_numbers = #tpu.dot_dimension_numbers<[1], [0], [0], [1], [0, 0, 1, 1], [], []>} : vector<8x128xbf16>, vector<128x512xbf16>, vector<8x512xf32> -> vector<8x512xf32>
    %94 = vector.broadcast %3 : vector<1x512xf32> to vector<8x512xf32>
    %95 = arith.addf %93, %94 : vector<8x512xf32>
    %96 = arith.index_cast %c7_i32 : i32 to index
    %c0_64 = arith.constant 0 : index
    %c0_65 = arith.constant 0 : index
    %97 = vector.load %arg8[%96, %c0_64, %c0_65] : memref<8x8x512xf32, #tpu.memory_space<vmem>>, vector<1x8x512xf32>
    %98 = vector.shape_cast %97 : vector<1x8x512xf32> to vector<8x512xf32>
    %99 = vector.shape_cast %95 : vector<8x512xf32> to vector<1x8x512xf32>
    tpu.vector_store %arg8[%96, %c0_64, %c0_65], %99 {strides = array<i32>} : memref<8x8x512xf32, #tpu.memory_space<vmem>>, vector<1x8x512xf32>,
    %c8_i32 = arith.constant 8 : i32
    %c0_66 = arith.constant 0 : index
    %c0_67 = arith.constant 0 : index
    %100 = vector.load %arg9[%c0_66, %c0_67] : memref<8x128xf32, #tpu.memory_space<vmem>>, vector<8x128xf32>
    %c0_68 = arith.constant 0 : index
    %c0_69 = arith.constant 0 : index
    %101 = vector.load %arg10[%c0_68, %c0_69] : memref<8x128xf32, #tpu.memory_space<vmem>>, vector<8x128xf32>
    %c0_i32_70 = arith.constant 0 : i32
    %102 = arith.truncf %100 : vector<8x128xf32> to vector<8x128xbf16>
    %103 = arith.index_cast %c0_i32_70 : i32 to index
    %c0_71 = arith.constant 0 : index
    %c0_72 = arith.constant 0 : index
    %104 = vector.load %arg8[%103, %c0_71, %c0_72] : memref<8x8x512xf32, #tpu.memory_space<vmem>>, vector<1x8x512xf32>
    %105 = vector.shape_cast %104 : vector<1x8x512xf32> to vector<8x512xf32>
    %106 = vector.extract_strided_slice %105 {offsets = [0, 0], sizes = [8, 384], strides = [1, 1]} : vector<8x512xf32> to vector<8x384xf32>
    %c1 = arith.constant 1 : index
    %c0_73 = arith.constant 0 : index
    %c0_74 = arith.constant 0 : index
    %107 = vector.load %arg6[%c1, %c0_73, %c0_74] : memref<2x128x512xbf16, #tpu.memory_space<vmem>>, vector<1x128x384xbf16>
    %108 = vector.shape_cast %107 : vector<1x128x384xbf16> to vector<128x384xbf16>
    %cst_75 = arith.constant dense<0.000000e+00> : vector<8x384xf32>
    %109 = tpu.matmul %102, %108, %cst_75 {dimension_numbers = #tpu.dot_dimension_numbers<[1], [0], [0], [1], [0, 0, 1, 1], [], []>} : vector<8x128xbf16>, vector<128x384xbf16>, vector<8x384xf32> -> vector<8x384xf32>
    %110 = arith.addf %106, %109 : vector<8x384xf32>
    %111 = vector.extract_strided_slice %105 {offsets = [0, 384], sizes = [8, 128], strides = [1, 1]} : vector<8x512xf32> to vector<8x128xf32>
    %c1_76 = arith.constant 1 : index
    %c0_77 = arith.constant 0 : index
    %c384 = arith.constant 384 : index
    %112 = vector.load %arg6[%c1_76, %c0_77, %c384] : memref<2x128x512xbf16, #tpu.memory_space<vmem>>, vector<1x128x128xbf16>
    %113 = vector.shape_cast %112 : vector<1x128x128xbf16> to vector<128x128xbf16>
    %cst_78 = arith.constant dense<0.000000e+00> : vector<8x128xf32>
    %114 = tpu.matmul %102, %113, %cst_78 {dimension_numbers = #tpu.dot_dimension_numbers<[1], [0], [0], [1], [0, 0, 1, 1], [], []>} : vector<8x128xbf16>, vector<128x128xbf16>, vector<8x128xf32> -> vector<8x128xf32>
    %115 = arith.addf %111, %114 : vector<8x128xf32>
    %116 = arith.negf %110 : vector<8x384xf32>
    %117 = math.exp %116 : vector<8x384xf32>
    %cst_79 = arith.constant 1.000000e+00 : f32
    %118 = vector.broadcast %cst_79 : f32 to vector<8x384xf32>
    %119 = arith.addf %118, %117 : vector<8x384xf32>
    %120 = arith.divf %118, %119 : vector<8x384xf32>
    %121 = math.tanh %115 : vector<8x128xf32>
    %122 = vector.extract_strided_slice %120 {offsets = [0, 0], sizes = [8, 128], strides = [1, 1]} : vector<8x384xf32> to vector<8x128xf32>
    %123 = vector.extract_strided_slice %120 {offsets = [0, 128], sizes = [8, 128], strides = [1, 1]} : vector<8x384xf32> to vector<8x128xf32>
    %124 = vector.extract_strided_slice %120 {offsets = [0, 256], sizes = [8, 128], strides = [1, 1]} : vector<8x384xf32> to vector<8x128xf32>
    %125 = arith.mulf %123, %101 : vector<8x128xf32>
    %126 = arith.mulf %122, %121 : vector<8x128xf32>
    %127 = arith.addf %125, %126 : vector<8x128xf32>
    %128 = math.tanh %127 : vector<8x128xf32>
    %129 = arith.mulf %124, %128 : vector<8x128xf32>
    %c0_80 = arith.constant 0 : index
    %130 = arith.index_cast %c0_i32_70 : i32 to index
    %c0_81 = arith.constant 0 : index
    %c0_82 = arith.constant 0 : index
    %131 = vector.load %arg5[%c0_80, %130, %c0_81, %c0_82] : memref<3x8x8x128xf32, #tpu.memory_space<vmem>>, vector<1x1x8x128xf32>
    %132 = vector.shape_cast %131 : vector<1x1x8x128xf32> to vector<8x128xf32>
    %133 = vector.shape_cast %129 : vector<8x128xf32> to vector<1x1x8x128xf32>
    tpu.vector_store %arg5[%c0_80, %130, %c0_81, %c0_82], %133 {strides = array<i32>} : memref<3x8x8x128xf32, #tpu.memory_space<vmem>>, vector<1x1x8x128xf32>,
    %c1_83 = arith.constant 1 : index
    %134 = arith.index_cast %c0_i32_70 : i32 to index
    %c0_84 = arith.constant 0 : index
    %c0_85 = arith.constant 0 : index
    %135 = vector.load %arg5[%c1_83, %134, %c0_84, %c0_85] : memref<3x8x8x128xf32, #tpu.memory_space<vmem>>, vector<1x1x8x128xf32>
    %136 = vector.shape_cast %135 : vector<1x1x8x128xf32> to vector<8x128xf32>
    %137 = vector.shape_cast %127 : vector<8x128xf32> to vector<1x1x8x128xf32>
    tpu.vector_store %arg5[%c1_83, %134, %c0_84, %c0_85], %137 {strides = array<i32>} : memref<3x8x8x128xf32, #tpu.memory_space<vmem>>, vector<1x1x8x128xf32>,
    %c2 = arith.constant 2 : index
    %138 = arith.index_cast %c0_i32_70 : i32 to index
    %c0_86 = arith.constant 0 : index
    %c0_87 = arith.constant 0 : index
    %139 = vector.load %arg5[%c2, %138, %c0_86, %c0_87] : memref<3x8x8x128xf32, #tpu.memory_space<vmem>>, vector<1x1x8x128xf32>
    %140 = vector.shape_cast %139 : vector<1x1x8x128xf32> to vector<8x128xf32>
    %141 = vector.shape_cast %124 : vector<8x128xf32> to vector<1x1x8x128xf32>
    tpu.vector_store %arg5[%c2, %138, %c0_86, %c0_87], %141 {strides = array<i32>} : memref<3x8x8x128xf32, #tpu.memory_space<vmem>>, vector<1x1x8x128xf32>,
    %c1_i32_88 = arith.constant 1 : i32
    %142 = arith.truncf %129 : vector<8x128xf32> to vector<8x128xbf16>
    %143 = arith.index_cast %c1_i32_88 : i32 to index
    %c0_89 = arith.constant 0 : index
    %c0_90 = arith.constant 0 : index
    %144 = vector.load %arg8[%143, %c0_89, %c0_90] : memref<8x8x512xf32, #tpu.memory_space<vmem>>, vector<1x8x512xf32>
    %145 = vector.shape_cast %144 : vector<1x8x512xf32> to vector<8x512xf32>
    %146 = vector.extract_strided_slice %145 {offsets = [0, 0], sizes = [8, 384], strides = [1, 1]} : vector<8x512xf32> to vector<8x384xf32>
    %c1_91 = arith.constant 1 : index
    %c0_92 = arith.constant 0 : index
    %c0_93 = arith.constant 0 : index
    %147 = vector.load %arg6[%c1_91, %c0_92, %c0_93] : memref<2x128x512xbf16, #tpu.memory_space<vmem>>, vector<1x128x384xbf16>
    %148 = vector.shape_cast %147 : vector<1x128x384xbf16> to vector<128x384xbf16>
    %cst_94 = arith.constant dense<0.000000e+00> : vector<8x384xf32>
    %149 = tpu.matmul %142, %148, %cst_94 {dimension_numbers = #tpu.dot_dimension_numbers<[1], [0], [0], [1], [0, 0, 1, 1], [], []>} : vector<8x128xbf16>, vector<128x384xbf16>, vector<8x384xf32> -> vector<8x384xf32>
    %150 = arith.addf %146, %149 : vector<8x384xf32>
    %151 = vector.extract_strided_slice %145 {offsets = [0, 384], sizes = [8, 128], strides = [1, 1]} : vector<8x512xf32> to vector<8x128xf32>
    %c1_95 = arith.constant 1 : index
    %c0_96 = arith.constant 0 : index
    %c384_97 = arith.constant 384 : index
    %152 = vector.load %arg6[%c1_95, %c0_96, %c384_97] : memref<2x128x512xbf16, #tpu.memory_space<vmem>>, vector<1x128x128xbf16>
    %153 = vector.shape_cast %152 : vector<1x128x128xbf16> to vector<128x128xbf16>
    %cst_98 = arith.constant dense<0.000000e+00> : vector<8x128xf32>
    %154 = tpu.matmul %142, %153, %cst_98 {dimension_numbers = #tpu.dot_dimension_numbers<[1], [0], [0], [1], [0, 0, 1, 1], [], []>} : vector<8x128xbf16>, vector<128x128xbf16>, vector<8x128xf32> -> vector<8x128xf32>
    %155 = arith.addf %151, %154 : vector<8x128xf32>
    %156 = arith.negf %150 : vector<8x384xf32>
    %157 = math.exp %156 : vector<8x384xf32>
    %cst_99 = arith.constant 1.000000e+00 : f32
    %158 = vector.broadcast %cst_99 : f32 to vector<8x384xf32>
    %159 = arith.addf %158, %157 : vector<8x384xf32>
    %160 = arith.divf %158, %159 : vector<8x384xf32>
    %161 = math.tanh %155 : vector<8x128xf32>
    %162 = vector.extract_strided_slice %160 {offsets = [0, 0], sizes = [8, 128], strides = [1, 1]} : vector<8x384xf32> to vector<8x128xf32>
    %163 = vector.extract_strided_slice %160 {offsets = [0, 128], sizes = [8, 128], strides = [1, 1]} : vector<8x384xf32> to vector<8x128xf32>
    %164 = vector.extract_strided_slice %160 {offsets = [0, 256], sizes = [8, 128], strides = [1, 1]} : vector<8x384xf32> to vector<8x128xf32>
    %165 = arith.mulf %163, %127 : vector<8x128xf32>
    %166 = arith.mulf %162, %161 : vector<8x128xf32>
    %167 = arith.addf %165, %166 : vector<8x128xf32>
    %168 = math.tanh %167 : vector<8x128xf32>
    %169 = arith.mulf %164, %168 : vector<8x128xf32>
    %c0_100 = arith.constant 0 : index
    %170 = arith.index_cast %c1_i32_88 : i32 to index
    %c0_101 = arith.constant 0 : index
    %c0_102 = arith.constant 0 : index
    %171 = vector.load %arg5[%c0_100, %170, %c0_101, %c0_102] : memref<3x8x8x128xf32, #tpu.memory_space<vmem>>, vector<1x1x8x128xf32>
    %172 = vector.shape_cast %171 : vector<1x1x8x128xf32> to vector<8x128xf32>
    %173 = vector.shape_cast %169 : vector<8x128xf32> to vector<1x1x8x128xf32>
    tpu.vector_store %arg5[%c0_100, %170, %c0_101, %c0_102], %173 {strides = array<i32>} : memref<3x8x8x128xf32, #tpu.memory_space<vmem>>, vector<1x1x8x128xf32>,
    %c1_103 = arith.constant 1 : index
    %174 = arith.index_cast %c1_i32_88 : i32 to index
    %c0_104 = arith.constant 0 : index
    %c0_105 = arith.constant 0 : index
    %175 = vector.load %arg5[%c1_103, %174, %c0_104, %c0_105] : memref<3x8x8x128xf32, #tpu.memory_space<vmem>>, vector<1x1x8x128xf32>
    %176 = vector.shape_cast %175 : vector<1x1x8x128xf32> to vector<8x128xf32>
    %177 = vector.shape_cast %167 : vector<8x128xf32> to vector<1x1x8x128xf32>
    tpu.vector_store %arg5[%c1_103, %174, %c0_104, %c0_105], %177 {strides = array<i32>} : memref<3x8x8x128xf32, #tpu.memory_space<vmem>>, vector<1x1x8x128xf32>,
    %c2_106 = arith.constant 2 : index
    %178 = arith.index_cast %c1_i32_88 : i32 to index
    %c0_107 = arith.constant 0 : index
    %c0_108 = arith.constant 0 : index
    %179 = vector.load %arg5[%c2_106, %178, %c0_107, %c0_108] : memref<3x8x8x128xf32, #tpu.memory_space<vmem>>, vector<1x1x8x128xf32>
    %180 = vector.shape_cast %179 : vector<1x1x8x128xf32> to vector<8x128xf32>
    %181 = vector.shape_cast %164 : vector<8x128xf32> to vector<1x1x8x128xf32>
    tpu.vector_store %arg5[%c2_106, %178, %c0_107, %c0_108], %181 {strides = array<i32>} : memref<3x8x8x128xf32, #tpu.memory_space<vmem>>, vector<1x1x8x128xf32>,
    %c2_i32_109 = arith.constant 2 : i32
    %182 = arith.truncf %169 : vector<8x128xf32> to vector<8x128xbf16>
    %183 = arith.index_cast %c2_i32_109 : i32 to index
    %c0_110 = arith.constant 0 : index
    %c0_111 = arith.constant 0 : index
    %184 = vector.load %arg8[%183, %c0_110, %c0_111] : memref<8x8x512xf32, #tpu.memory_space<vmem>>, vector<1x8x512xf32>
    %185 = vector.shape_cast %184 : vector<1x8x512xf32> to vector<8x512xf32>
    %186 = vector.extract_strided_slice %185 {offsets = [0, 0], sizes = [8, 384], strides = [1, 1]} : vector<8x512xf32> to vector<8x384xf32>
    %c1_112 = arith.constant 1 : index
    %c0_113 = arith.constant 0 : index
    %c0_114 = arith.constant 0 : index
    %187 = vector.load %arg6[%c1_112, %c0_113, %c0_114] : memref<2x128x512xbf16, #tpu.memory_space<vmem>>, vector<1x128x384xbf16>
    %188 = vector.shape_cast %187 : vector<1x128x384xbf16> to vector<128x384xbf16>
    %cst_115 = arith.constant dense<0.000000e+00> : vector<8x384xf32>
    %189 = tpu.matmul %182, %188, %cst_115 {dimension_numbers = #tpu.dot_dimension_numbers<[1], [0], [0], [1], [0, 0, 1, 1], [], []>} : vector<8x128xbf16>, vector<128x384xbf16>, vector<8x384xf32> -> vector<8x384xf32>
    %190 = arith.addf %186, %189 : vector<8x384xf32>
    %191 = vector.extract_strided_slice %185 {offsets = [0, 384], sizes = [8, 128], strides = [1, 1]} : vector<8x512xf32> to vector<8x128xf32>
    %c1_116 = arith.constant 1 : index
    %c0_117 = arith.constant 0 : index
    %c384_118 = arith.constant 384 : index
    %192 = vector.load %arg6[%c1_116, %c0_117, %c384_118] : memref<2x128x512xbf16, #tpu.memory_space<vmem>>, vector<1x128x128xbf16>
    %193 = vector.shape_cast %192 : vector<1x128x128xbf16> to vector<128x128xbf16>
    %cst_119 = arith.constant dense<0.000000e+00> : vector<8x128xf32>
    %194 = tpu.matmul %182, %193, %cst_119 {dimension_numbers = #tpu.dot_dimension_numbers<[1], [0], [0], [1], [0, 0, 1, 1], [], []>} : vector<8x128xbf16>, vector<128x128xbf16>, vector<8x128xf32> -> vector<8x128xf32>
    %195 = arith.addf %191, %194 : vector<8x128xf32>
    %196 = arith.negf %190 : vector<8x384xf32>
    %197 = math.exp %196 : vector<8x384xf32>
    %cst_120 = arith.constant 1.000000e+00 : f32
    %198 = vector.broadcast %cst_120 : f32 to vector<8x384xf32>
    %199 = arith.addf %198, %197 : vector<8x384xf32>
    %200 = arith.divf %198, %199 : vector<8x384xf32>
    %201 = math.tanh %195 : vector<8x128xf32>
    %202 = vector.extract_strided_slice %200 {offsets = [0, 0], sizes = [8, 128], strides = [1, 1]} : vector<8x384xf32> to vector<8x128xf32>
    %203 = vector.extract_strided_slice %200 {offsets = [0, 128], sizes = [8, 128], strides = [1, 1]} : vector<8x384xf32> to vector<8x128xf32>
    %204 = vector.extract_strided_slice %200 {offsets = [0, 256], sizes = [8, 128], strides = [1, 1]} : vector<8x384xf32> to vector<8x128xf32>
    %205 = arith.mulf %203, %167 : vector<8x128xf32>
    %206 = arith.mulf %202, %201 : vector<8x128xf32>
    %207 = arith.addf %205, %206 : vector<8x128xf32>
    %208 = math.tanh %207 : vector<8x128xf32>
    %209 = arith.mulf %204, %208 : vector<8x128xf32>
    %c0_121 = arith.constant 0 : index
    %210 = arith.index_cast %c2_i32_109 : i32 to index
    %c0_122 = arith.constant 0 : index
    %c0_123 = arith.constant 0 : index
    %211 = vector.load %arg5[%c0_121, %210, %c0_122, %c0_123] : memref<3x8x8x128xf32, #tpu.memory_space<vmem>>, vector<1x1x8x128xf32>
    %212 = vector.shape_cast %211 : vector<1x1x8x128xf32> to vector<8x128xf32>
    %213 = vector.shape_cast %209 : vector<8x128xf32> to vector<1x1x8x128xf32>
    tpu.vector_store %arg5[%c0_121, %210, %c0_122, %c0_123], %213 {strides = array<i32>} : memref<3x8x8x128xf32, #tpu.memory_space<vmem>>, vector<1x1x8x128xf32>,
    %c1_124 = arith.constant 1 : index
    %214 = arith.index_cast %c2_i32_109 : i32 to index
    %c0_125 = arith.constant 0 : index
    %c0_126 = arith.constant 0 : index
    %215 = vector.load %arg5[%c1_124, %214, %c0_125, %c0_126] : memref<3x8x8x128xf32, #tpu.memory_space<vmem>>, vector<1x1x8x128xf32>
    %216 = vector.shape_cast %215 : vector<1x1x8x128xf32> to vector<8x128xf32>
    %217 = vector.shape_cast %207 : vector<8x128xf32> to vector<1x1x8x128xf32>
    tpu.vector_store %arg5[%c1_124, %214, %c0_125, %c0_126], %217 {strides = array<i32>} : memref<3x8x8x128xf32, #tpu.memory_space<vmem>>, vector<1x1x8x128xf32>,
    %c2_127 = arith.constant 2 : index
    %218 = arith.index_cast %c2_i32_109 : i32 to index
    %c0_128 = arith.constant 0 : index
    %c0_129 = arith.constant 0 : index
    %219 = vector.load %arg5[%c2_127, %218, %c0_128, %c0_129] : memref<3x8x8x128xf32, #tpu.memory_space<vmem>>, vector<1x1x8x128xf32>
    %220 = vector.shape_cast %219 : vector<1x1x8x128xf32> to vector<8x128xf32>
    %221 = vector.shape_cast %204 : vector<8x128xf32> to vector<1x1x8x128xf32>
    tpu.vector_store %arg5[%c2_127, %218, %c0_128, %c0_129], %221 {strides = array<i32>} : memref<3x8x8x128xf32, #tpu.memory_space<vmem>>, vector<1x1x8x128xf32>,
    %c3_i32_130 = arith.constant 3 : i32
    %222 = arith.truncf %209 : vector<8x128xf32> to vector<8x128xbf16>
    %223 = arith.index_cast %c3_i32_130 : i32 to index
    %c0_131 = arith.constant 0 : index
    %c0_132 = arith.constant 0 : index
    %224 = vector.load %arg8[%223, %c0_131, %c0_132] : memref<8x8x512xf32, #tpu.memory_space<vmem>>, vector<1x8x512xf32>
    %225 = vector.shape_cast %224 : vector<1x8x512xf32> to vector<8x512xf32>
    %226 = vector.extract_strided_slice %225 {offsets = [0, 0], sizes = [8, 384], strides = [1, 1]} : vector<8x512xf32> to vector<8x384xf32>
    %c1_133 = arith.constant 1 : index
    %c0_134 = arith.constant 0 : index
    %c0_135 = arith.constant 0 : index
    %227 = vector.load %arg6[%c1_133, %c0_134, %c0_135] : memref<2x128x512xbf16, #tpu.memory_space<vmem>>, vector<1x128x384xbf16>
    %228 = vector.shape_cast %227 : vector<1x128x384xbf16> to vector<128x384xbf16>
    %cst_136 = arith.constant dense<0.000000e+00> : vector<8x384xf32>
    %229 = tpu.matmul %222, %228, %cst_136 {dimension_numbers = #tpu.dot_dimension_numbers<[1], [0], [0], [1], [0, 0, 1, 1], [], []>} : vector<8x128xbf16>, vector<128x384xbf16>, vector<8x384xf32> -> vector<8x384xf32>
    %230 = arith.addf %226, %229 : vector<8x384xf32>
    %231 = vector.extract_strided_slice %225 {offsets = [0, 384], sizes = [8, 128], strides = [1, 1]} : vector<8x512xf32> to vector<8x128xf32>
    %c1_137 = arith.constant 1 : index
    %c0_138 = arith.constant 0 : index
    %c384_139 = arith.constant 384 : index
    %232 = vector.load %arg6[%c1_137, %c0_138, %c384_139] : memref<2x128x512xbf16, #tpu.memory_space<vmem>>, vector<1x128x128xbf16>
    %233 = vector.shape_cast %232 : vector<1x128x128xbf16> to vector<128x128xbf16>
    %cst_140 = arith.constant dense<0.000000e+00> : vector<8x128xf32>
    %234 = tpu.matmul %222, %233, %cst_140 {dimension_numbers = #tpu.dot_dimension_numbers<[1], [0], [0], [1], [0, 0, 1, 1], [], []>} : vector<8x128xbf16>, vector<128x128xbf16>, vector<8x128xf32> -> vector<8x128xf32>
    %235 = arith.addf %231, %234 : vector<8x128xf32>
    %236 = arith.negf %230 : vector<8x384xf32>
    %237 = math.exp %236 : vector<8x384xf32>
    %cst_141 = arith.constant 1.000000e+00 : f32
    %238 = vector.broadcast %cst_141 : f32 to vector<8x384xf32>
    %239 = arith.addf %238, %237 : vector<8x384xf32>
    %240 = arith.divf %238, %239 : vector<8x384xf32>
    %241 = math.tanh %235 : vector<8x128xf32>
    %242 = vector.extract_strided_slice %240 {offsets = [0, 0], sizes = [8, 128], strides = [1, 1]} : vector<8x384xf32> to vector<8x128xf32>
    %243 = vector.extract_strided_slice %240 {offsets = [0, 128], sizes = [8, 128], strides = [1, 1]} : vector<8x384xf32> to vector<8x128xf32>
    %244 = vector.extract_strided_slice %240 {offsets = [0, 256], sizes = [8, 128], strides = [1, 1]} : vector<8x384xf32> to vector<8x128xf32>
    %245 = arith.mulf %243, %207 : vector<8x128xf32>
    %246 = arith.mulf %242, %241 : vector<8x128xf32>
    %247 = arith.addf %245, %246 : vector<8x128xf32>
    %248 = math.tanh %247 : vector<8x128xf32>
    %249 = arith.mulf %244, %248 : vector<8x128xf32>
    %c0_142 = arith.constant 0 : index
    %250 = arith.index_cast %c3_i32_130 : i32 to index
    %c0_143 = arith.constant 0 : index
    %c0_144 = arith.constant 0 : index
    %251 = vector.load %arg5[%c0_142, %250, %c0_143, %c0_144] : memref<3x8x8x128xf32, #tpu.memory_space<vmem>>, vector<1x1x8x128xf32>
    %252 = vector.shape_cast %251 : vector<1x1x8x128xf32> to vector<8x128xf32>
    %253 = vector.shape_cast %249 : vector<8x128xf32> to vector<1x1x8x128xf32>
    tpu.vector_store %arg5[%c0_142, %250, %c0_143, %c0_144], %253 {strides = array<i32>} : memref<3x8x8x128xf32, #tpu.memory_space<vmem>>, vector<1x1x8x128xf32>,
    %c1_145 = arith.constant 1 : index
    %254 = arith.index_cast %c3_i32_130 : i32 to index
    %c0_146 = arith.constant 0 : index
    %c0_147 = arith.constant 0 : index
    %255 = vector.load %arg5[%c1_145, %254, %c0_146, %c0_147] : memref<3x8x8x128xf32, #tpu.memory_space<vmem>>, vector<1x1x8x128xf32>
    %256 = vector.shape_cast %255 : vector<1x1x8x128xf32> to vector<8x128xf32>
    %257 = vector.shape_cast %247 : vector<8x128xf32> to vector<1x1x8x128xf32>
    tpu.vector_store %arg5[%c1_145, %254, %c0_146, %c0_147], %257 {strides = array<i32>} : memref<3x8x8x128xf32, #tpu.memory_space<vmem>>, vector<1x1x8x128xf32>,
    %c2_148 = arith.constant 2 : index
    %258 = arith.index_cast %c3_i32_130 : i32 to index
    %c0_149 = arith.constant 0 : index
    %c0_150 = arith.constant 0 : index
    %259 = vector.load %arg5[%c2_148, %258, %c0_149, %c0_150] : memref<3x8x8x128xf32, #tpu.memory_space<vmem>>, vector<1x1x8x128xf32>
    %260 = vector.shape_cast %259 : vector<1x1x8x128xf32> to vector<8x128xf32>
    %261 = vector.shape_cast %244 : vector<8x128xf32> to vector<1x1x8x128xf32>
    tpu.vector_store %arg5[%c2_148, %258, %c0_149, %c0_150], %261 {strides = array<i32>} : memref<3x8x8x128xf32, #tpu.memory_space<vmem>>, vector<1x1x8x128xf32>,
    %c4_i32_151 = arith.constant 4 : i32
    %262 = arith.truncf %249 : vector<8x128xf32> to vector<8x128xbf16>
    %263 = arith.index_cast %c4_i32_151 : i32 to index
    %c0_152 = arith.constant 0 : index
    %c0_153 = arith.constant 0 : index
    %264 = vector.load %arg8[%263, %c0_152, %c0_153] : memref<8x8x512xf32, #tpu.memory_space<vmem>>, vector<1x8x512xf32>
    %265 = vector.shape_cast %264 : vector<1x8x512xf32> to vector<8x512xf32>
    %266 = vector.extract_strided_slice %265 {offsets = [0, 0], sizes = [8, 384], strides = [1, 1]} : vector<8x512xf32> to vector<8x384xf32>
    %c1_154 = arith.constant 1 : index
    %c0_155 = arith.constant 0 : index
    %c0_156 = arith.constant 0 : index
    %267 = vector.load %arg6[%c1_154, %c0_155, %c0_156] : memref<2x128x512xbf16, #tpu.memory_space<vmem>>, vector<1x128x384xbf16>
    %268 = vector.shape_cast %267 : vector<1x128x384xbf16> to vector<128x384xbf16>
    %cst_157 = arith.constant dense<0.000000e+00> : vector<8x384xf32>
    %269 = tpu.matmul %262, %268, %cst_157 {dimension_numbers = #tpu.dot_dimension_numbers<[1], [0], [0], [1], [0, 0, 1, 1], [], []>} : vector<8x128xbf16>, vector<128x384xbf16>, vector<8x384xf32> -> vector<8x384xf32>
    %270 = arith.addf %266, %269 : vector<8x384xf32>
    %271 = vector.extract_strided_slice %265 {offsets = [0, 384], sizes = [8, 128], strides = [1, 1]} : vector<8x512xf32> to vector<8x128xf32>
    %c1_158 = arith.constant 1 : index
    %c0_159 = arith.constant 0 : index
    %c384_160 = arith.constant 384 : index
    %272 = vector.load %arg6[%c1_158, %c0_159, %c384_160] : memref<2x128x512xbf16, #tpu.memory_space<vmem>>, vector<1x128x128xbf16>
    %273 = vector.shape_cast %272 : vector<1x128x128xbf16> to vector<128x128xbf16>
    %cst_161 = arith.constant dense<0.000000e+00> : vector<8x128xf32>
    %274 = tpu.matmul %262, %273, %cst_161 {dimension_numbers = #tpu.dot_dimension_numbers<[1], [0], [0], [1], [0, 0, 1, 1], [], []>} : vector<8x128xbf16>, vector<128x128xbf16>, vector<8x128xf32> -> vector<8x128xf32>
    %275 = arith.addf %271, %274 : vector<8x128xf32>
    %276 = arith.negf %270 : vector<8x384xf32>
    %277 = math.exp %276 : vector<8x384xf32>
    %cst_162 = arith.constant 1.000000e+00 : f32
    %278 = vector.broadcast %cst_162 : f32 to vector<8x384xf32>
    %279 = arith.addf %278, %277 : vector<8x384xf32>
    %280 = arith.divf %278, %279 : vector<8x384xf32>
    %281 = math.tanh %275 : vector<8x128xf32>
    %282 = vector.extract_strided_slice %280 {offsets = [0, 0], sizes = [8, 128], strides = [1, 1]} : vector<8x384xf32> to vector<8x128xf32>
    %283 = vector.extract_strided_slice %280 {offsets = [0, 128], sizes = [8, 128], strides = [1, 1]} : vector<8x384xf32> to vector<8x128xf32>
    %284 = vector.extract_strided_slice %280 {offsets = [0, 256], sizes = [8, 128], strides = [1, 1]} : vector<8x384xf32> to vector<8x128xf32>
    %285 = arith.mulf %283, %247 : vector<8x128xf32>
    %286 = arith.mulf %282, %281 : vector<8x128xf32>
    %287 = arith.addf %285, %286 : vector<8x128xf32>
    %288 = math.tanh %287 : vector<8x128xf32>
    %289 = arith.mulf %284, %288 : vector<8x128xf32>
    %c0_163 = arith.constant 0 : index
    %290 = arith.index_cast %c4_i32_151 : i32 to index
    %c0_164 = arith.constant 0 : index
    %c0_165 = arith.constant 0 : index
    %291 = vector.load %arg5[%c0_163, %290, %c0_164, %c0_165] : memref<3x8x8x128xf32, #tpu.memory_space<vmem>>, vector<1x1x8x128xf32>
    %292 = vector.shape_cast %291 : vector<1x1x8x128xf32> to vector<8x128xf32>
    %293 = vector.shape_cast %289 : vector<8x128xf32> to vector<1x1x8x128xf32>
    tpu.vector_store %arg5[%c0_163, %290, %c0_164, %c0_165], %293 {strides = array<i32>} : memref<3x8x8x128xf32, #tpu.memory_space<vmem>>, vector<1x1x8x128xf32>,
    %c1_166 = arith.constant 1 : index
    %294 = arith.index_cast %c4_i32_151 : i32 to index
    %c0_167 = arith.constant 0 : index
    %c0_168 = arith.constant 0 : index
    %295 = vector.load %arg5[%c1_166, %294, %c0_167, %c0_168] : memref<3x8x8x128xf32, #tpu.memory_space<vmem>>, vector<1x1x8x128xf32>
    %296 = vector.shape_cast %295 : vector<1x1x8x128xf32> to vector<8x128xf32>
    %297 = vector.shape_cast %287 : vector<8x128xf32> to vector<1x1x8x128xf32>
    tpu.vector_store %arg5[%c1_166, %294, %c0_167, %c0_168], %297 {strides = array<i32>} : memref<3x8x8x128xf32, #tpu.memory_space<vmem>>, vector<1x1x8x128xf32>,
    %c2_169 = arith.constant 2 : index
    %298 = arith.index_cast %c4_i32_151 : i32 to index
    %c0_170 = arith.constant 0 : index
    %c0_171 = arith.constant 0 : index
    %299 = vector.load %arg5[%c2_169, %298, %c0_170, %c0_171] : memref<3x8x8x128xf32, #tpu.memory_space<vmem>>, vector<1x1x8x128xf32>
    %300 = vector.shape_cast %299 : vector<1x1x8x128xf32> to vector<8x128xf32>
    %301 = vector.shape_cast %284 : vector<8x128xf32> to vector<1x1x8x128xf32>
    tpu.vector_store %arg5[%c2_169, %298, %c0_170, %c0_171], %301 {strides = array<i32>} : memref<3x8x8x128xf32, #tpu.memory_space<vmem>>, vector<1x1x8x128xf32>,
    %c5_i32_172 = arith.constant 5 : i32
    %302 = arith.truncf %289 : vector<8x128xf32> to vector<8x128xbf16>
    %303 = arith.index_cast %c5_i32_172 : i32 to index
    %c0_173 = arith.constant 0 : index
    %c0_174 = arith.constant 0 : index
    %304 = vector.load %arg8[%303, %c0_173, %c0_174] : memref<8x8x512xf32, #tpu.memory_space<vmem>>, vector<1x8x512xf32>
    %305 = vector.shape_cast %304 : vector<1x8x512xf32> to vector<8x512xf32>
    %306 = vector.extract_strided_slice %305 {offsets = [0, 0], sizes = [8, 384], strides = [1, 1]} : vector<8x512xf32> to vector<8x384xf32>
    %c1_175 = arith.constant 1 : index
    %c0_176 = arith.constant 0 : index
    %c0_177 = arith.constant 0 : index
    %307 = vector.load %arg6[%c1_175, %c0_176, %c0_177] : memref<2x128x512xbf16, #tpu.memory_space<vmem>>, vector<1x128x384xbf16>
    %308 = vector.shape_cast %307 : vector<1x128x384xbf16> to vector<128x384xbf16>
    %cst_178 = arith.constant dense<0.000000e+00> : vector<8x384xf32>
    %309 = tpu.matmul %302, %308, %cst_178 {dimension_numbers = #tpu.dot_dimension_numbers<[1], [0], [0], [1], [0, 0, 1, 1], [], []>} : vector<8x128xbf16>, vector<128x384xbf16>, vector<8x384xf32> -> vector<8x384xf32>
    %310 = arith.addf %306, %309 : vector<8x384xf32>
    %311 = vector.extract_strided_slice %305 {offsets = [0, 384], sizes = [8, 128], strides = [1, 1]} : vector<8x512xf32> to vector<8x128xf32>
    %c1_179 = arith.constant 1 : index
    %c0_180 = arith.constant 0 : index
    %c384_181 = arith.constant 384 : index
    %312 = vector.load %arg6[%c1_179, %c0_180, %c384_181] : memref<2x128x512xbf16, #tpu.memory_space<vmem>>, vector<1x128x128xbf16>
    %313 = vector.shape_cast %312 : vector<1x128x128xbf16> to vector<128x128xbf16>
    %cst_182 = arith.constant dense<0.000000e+00> : vector<8x128xf32>
    %314 = tpu.matmul %302, %313, %cst_182 {dimension_numbers = #tpu.dot_dimension_numbers<[1], [0], [0], [1], [0, 0, 1, 1], [], []>} : vector<8x128xbf16>, vector<128x128xbf16>, vector<8x128xf32> -> vector<8x128xf32>
    %315 = arith.addf %311, %314 : vector<8x128xf32>
    %316 = arith.negf %310 : vector<8x384xf32>
    %317 = math.exp %316 : vector<8x384xf32>
    %cst_183 = arith.constant 1.000000e+00 : f32
    %318 = vector.broadcast %cst_183 : f32 to vector<8x384xf32>
    %319 = arith.addf %318, %317 : vector<8x384xf32>
    %320 = arith.divf %318, %319 : vector<8x384xf32>
    %321 = math.tanh %315 : vector<8x128xf32>
    %322 = vector.extract_strided_slice %320 {offsets = [0, 0], sizes = [8, 128], strides = [1, 1]} : vector<8x384xf32> to vector<8x128xf32>
    %323 = vector.extract_strided_slice %320 {offsets = [0, 128], sizes = [8, 128], strides = [1, 1]} : vector<8x384xf32> to vector<8x128xf32>
    %324 = vector.extract_strided_slice %320 {offsets = [0, 256], sizes = [8, 128], strides = [1, 1]} : vector<8x384xf32> to vector<8x128xf32>
    %325 = arith.mulf %323, %287 : vector<8x128xf32>
    %326 = arith.mulf %322, %321 : vector<8x128xf32>
    %327 = arith.addf %325, %326 : vector<8x128xf32>
    %328 = math.tanh %327 : vector<8x128xf32>
    %329 = arith.mulf %324, %328 : vector<8x128xf32>
    %c0_184 = arith.constant 0 : index
    %330 = arith.index_cast %c5_i32_172 : i32 to index
    %c0_185 = arith.constant 0 : index
    %c0_186 = arith.constant 0 : index
    %331 = vector.load %arg5[%c0_184, %330, %c0_185, %c0_186] : memref<3x8x8x128xf32, #tpu.memory_space<vmem>>, vector<1x1x8x128xf32>
    %332 = vector.shape_cast %331 : vector<1x1x8x128xf32> to vector<8x128xf32>
    %333 = vector.shape_cast %329 : vector<8x128xf32> to vector<1x1x8x128xf32>
    tpu.vector_store %arg5[%c0_184, %330, %c0_185, %c0_186], %333 {strides = array<i32>} : memref<3x8x8x128xf32, #tpu.memory_space<vmem>>, vector<1x1x8x128xf32>,
    %c1_187 = arith.constant 1 : index
    %334 = arith.index_cast %c5_i32_172 : i32 to index
    %c0_188 = arith.constant 0 : index
    %c0_189 = arith.constant 0 : index
    %335 = vector.load %arg5[%c1_187, %334, %c0_188, %c0_189] : memref<3x8x8x128xf32, #tpu.memory_space<vmem>>, vector<1x1x8x128xf32>
    %336 = vector.shape_cast %335 : vector<1x1x8x128xf32> to vector<8x128xf32>
    %337 = vector.shape_cast %327 : vector<8x128xf32> to vector<1x1x8x128xf32>
    tpu.vector_store %arg5[%c1_187, %334, %c0_188, %c0_189], %337 {strides = array<i32>} : memref<3x8x8x128xf32, #tpu.memory_space<vmem>>, vector<1x1x8x128xf32>,
    %c2_190 = arith.constant 2 : index
    %338 = arith.index_cast %c5_i32_172 : i32 to index
    %c0_191 = arith.constant 0 : index
    %c0_192 = arith.constant 0 : index
    %339 = vector.load %arg5[%c2_190, %338, %c0_191, %c0_192] : memref<3x8x8x128xf32, #tpu.memory_space<vmem>>, vector<1x1x8x128xf32>
    %340 = vector.shape_cast %339 : vector<1x1x8x128xf32> to vector<8x128xf32>
    %341 = vector.shape_cast %324 : vector<8x128xf32> to vector<1x1x8x128xf32>
    tpu.vector_store %arg5[%c2_190, %338, %c0_191, %c0_192], %341 {strides = array<i32>} : memref<3x8x8x128xf32, #tpu.memory_space<vmem>>, vector<1x1x8x128xf32>,
    %c6_i32_193 = arith.constant 6 : i32
    %342 = arith.truncf %329 : vector<8x128xf32> to vector<8x128xbf16>
    %343 = arith.index_cast %c6_i32_193 : i32 to index
    %c0_194 = arith.constant 0 : index
    %c0_195 = arith.constant 0 : index
    %344 = vector.load %arg8[%343, %c0_194, %c0_195] : memref<8x8x512xf32, #tpu.memory_space<vmem>>, vector<1x8x512xf32>
    %345 = vector.shape_cast %344 : vector<1x8x512xf32> to vector<8x512xf32>
    %346 = vector.extract_strided_slice %345 {offsets = [0, 0], sizes = [8, 384], strides = [1, 1]} : vector<8x512xf32> to vector<8x384xf32>
    %c1_196 = arith.constant 1 : index
    %c0_197 = arith.constant 0 : index
    %c0_198 = arith.constant 0 : index
    %347 = vector.load %arg6[%c1_196, %c0_197, %c0_198] : memref<2x128x512xbf16, #tpu.memory_space<vmem>>, vector<1x128x384xbf16>
    %348 = vector.shape_cast %347 : vector<1x128x384xbf16> to vector<128x384xbf16>
    %cst_199 = arith.constant dense<0.000000e+00> : vector<8x384xf32>
    %349 = tpu.matmul %342, %348, %cst_199 {dimension_numbers = #tpu.dot_dimension_numbers<[1], [0], [0], [1], [0, 0, 1, 1], [], []>} : vector<8x128xbf16>, vector<128x384xbf16>, vector<8x384xf32> -> vector<8x384xf32>
    %350 = arith.addf %346, %349 : vector<8x384xf32>
    %351 = vector.extract_strided_slice %345 {offsets = [0, 384], sizes = [8, 128], strides = [1, 1]} : vector<8x512xf32> to vector<8x128xf32>
    %c1_200 = arith.constant 1 : index
    %c0_201 = arith.constant 0 : index
    %c384_202 = arith.constant 384 : index
    %352 = vector.load %arg6[%c1_200, %c0_201, %c384_202] : memref<2x128x512xbf16, #tpu.memory_space<vmem>>, vector<1x128x128xbf16>
    %353 = vector.shape_cast %352 : vector<1x128x128xbf16> to vector<128x128xbf16>
    %cst_203 = arith.constant dense<0.000000e+00> : vector<8x128xf32>
    %354 = tpu.matmul %342, %353, %cst_203 {dimension_numbers = #tpu.dot_dimension_numbers<[1], [0], [0], [1], [0, 0, 1, 1], [], []>} : vector<8x128xbf16>, vector<128x128xbf16>, vector<8x128xf32> -> vector<8x128xf32>
    %355 = arith.addf %351, %354 : vector<8x128xf32>
    %356 = arith.negf %350 : vector<8x384xf32>
    %357 = math.exp %356 : vector<8x384xf32>
    %cst_204 = arith.constant 1.000000e+00 : f32
    %358 = vector.broadcast %cst_204 : f32 to vector<8x384xf32>
    %359 = arith.addf %358, %357 : vector<8x384xf32>
    %360 = arith.divf %358, %359 : vector<8x384xf32>
    %361 = math.tanh %355 : vector<8x128xf32>
    %362 = vector.extract_strided_slice %360 {offsets = [0, 0], sizes = [8, 128], strides = [1, 1]} : vector<8x384xf32> to vector<8x128xf32>
    %363 = vector.extract_strided_slice %360 {offsets = [0, 128], sizes = [8, 128], strides = [1, 1]} : vector<8x384xf32> to vector<8x128xf32>
    %364 = vector.extract_strided_slice %360 {offsets = [0, 256], sizes = [8, 128], strides = [1, 1]} : vector<8x384xf32> to vector<8x128xf32>
    %365 = arith.mulf %363, %327 : vector<8x128xf32>
    %366 = arith.mulf %362, %361 : vector<8x128xf32>
    %367 = arith.addf %365, %366 : vector<8x128xf32>
    %368 = math.tanh %367 : vector<8x128xf32>
    %369 = arith.mulf %364, %368 : vector<8x128xf32>
    %c0_205 = arith.constant 0 : index
    %370 = arith.index_cast %c6_i32_193 : i32 to index
    %c0_206 = arith.constant 0 : index
    %c0_207 = arith.constant 0 : index
    %371 = vector.load %arg5[%c0_205, %370, %c0_206, %c0_207] : memref<3x8x8x128xf32, #tpu.memory_space<vmem>>, vector<1x1x8x128xf32>
    %372 = vector.shape_cast %371 : vector<1x1x8x128xf32> to vector<8x128xf32>
    %373 = vector.shape_cast %369 : vector<8x128xf32> to vector<1x1x8x128xf32>
    tpu.vector_store %arg5[%c0_205, %370, %c0_206, %c0_207], %373 {strides = array<i32>} : memref<3x8x8x128xf32, #tpu.memory_space<vmem>>, vector<1x1x8x128xf32>,
    %c1_208 = arith.constant 1 : index
    %374 = arith.index_cast %c6_i32_193 : i32 to index
    %c0_209 = arith.constant 0 : index
    %c0_210 = arith.constant 0 : index
    %375 = vector.load %arg5[%c1_208, %374, %c0_209, %c0_210] : memref<3x8x8x128xf32, #tpu.memory_space<vmem>>, vector<1x1x8x128xf32>
    %376 = vector.shape_cast %375 : vector<1x1x8x128xf32> to vector<8x128xf32>
    %377 = vector.shape_cast %367 : vector<8x128xf32> to vector<1x1x8x128xf32>
    tpu.vector_store %arg5[%c1_208, %374, %c0_209, %c0_210], %377 {strides = array<i32>} : memref<3x8x8x128xf32, #tpu.memory_space<vmem>>, vector<1x1x8x128xf32>,
    %c2_211 = arith.constant 2 : index
    %378 = arith.index_cast %c6_i32_193 : i32 to index
    %c0_212 = arith.constant 0 : index
    %c0_213 = arith.constant 0 : index
    %379 = vector.load %arg5[%c2_211, %378, %c0_212, %c0_213] : memref<3x8x8x128xf32, #tpu.memory_space<vmem>>, vector<1x1x8x128xf32>
    %380 = vector.shape_cast %379 : vector<1x1x8x128xf32> to vector<8x128xf32>
    %381 = vector.shape_cast %364 : vector<8x128xf32> to vector<1x1x8x128xf32>
    tpu.vector_store %arg5[%c2_211, %378, %c0_212, %c0_213], %381 {strides = array<i32>} : memref<3x8x8x128xf32, #tpu.memory_space<vmem>>, vector<1x1x8x128xf32>,
    %c7_i32_214 = arith.constant 7 : i32
    %382 = arith.truncf %369 : vector<8x128xf32> to vector<8x128xbf16>
    %383 = arith.index_cast %c7_i32_214 : i32 to index
    %c0_215 = arith.constant 0 : index
    %c0_216 = arith.constant 0 : index
    %384 = vector.load %arg8[%383, %c0_215, %c0_216] : memref<8x8x512xf32, #tpu.memory_space<vmem>>, vector<1x8x512xf32>
    %385 = vector.shape_cast %384 : vector<1x8x512xf32> to vector<8x512xf32>
    %386 = vector.extract_strided_slice %385 {offsets = [0, 0], sizes = [8, 384], strides = [1, 1]} : vector<8x512xf32> to vector<8x384xf32>
    %c1_217 = arith.constant 1 : index
    %c0_218 = arith.constant 0 : index
    %c0_219 = arith.constant 0 : index
    %387 = vector.load %arg6[%c1_217, %c0_218, %c0_219] : memref<2x128x512xbf16, #tpu.memory_space<vmem>>, vector<1x128x384xbf16>
    %388 = vector.shape_cast %387 : vector<1x128x384xbf16> to vector<128x384xbf16>
    %cst_220 = arith.constant dense<0.000000e+00> : vector<8x384xf32>
    %389 = tpu.matmul %382, %388, %cst_220 {dimension_numbers = #tpu.dot_dimension_numbers<[1], [0], [0], [1], [0, 0, 1, 1], [], []>} : vector<8x128xbf16>, vector<128x384xbf16>, vector<8x384xf32> -> vector<8x384xf32>
    %390 = arith.addf %386, %389 : vector<8x384xf32>
    %391 = vector.extract_strided_slice %385 {offsets = [0, 384], sizes = [8, 128], strides = [1, 1]} : vector<8x512xf32> to vector<8x128xf32>
    %c1_221 = arith.constant 1 : index
    %c0_222 = arith.constant 0 : index
    %c384_223 = arith.constant 384 : index
    %392 = vector.load %arg6[%c1_221, %c0_222, %c384_223] : memref<2x128x512xbf16, #tpu.memory_space<vmem>>, vector<1x128x128xbf16>
    %393 = vector.shape_cast %392 : vector<1x128x128xbf16> to vector<128x128xbf16>
    %cst_224 = arith.constant dense<0.000000e+00> : vector<8x128xf32>
    %394 = tpu.matmul %382, %393, %cst_224 {dimension_numbers = #tpu.dot_dimension_numbers<[1], [0], [0], [1], [0, 0, 1, 1], [], []>} : vector<8x128xbf16>, vector<128x128xbf16>, vector<8x128xf32> -> vector<8x128xf32>
    %395 = arith.addf %391, %394 : vector<8x128xf32>
    %396 = arith.negf %390 : vector<8x384xf32>
    %397 = math.exp %396 : vector<8x384xf32>
    %cst_225 = arith.constant 1.000000e+00 : f32
    %398 = vector.broadcast %cst_225 : f32 to vector<8x384xf32>
    %399 = arith.addf %398, %397 : vector<8x384xf32>
    %400 = arith.divf %398, %399 : vector<8x384xf32>
    %401 = math.tanh %395 : vector<8x128xf32>
    %402 = vector.extract_strided_slice %400 {offsets = [0, 0], sizes = [8, 128], strides = [1, 1]} : vector<8x384xf32> to vector<8x128xf32>
    %403 = vector.extract_strided_slice %400 {offsets = [0, 128], sizes = [8, 128], strides = [1, 1]} : vector<8x384xf32> to vector<8x128xf32>
    %404 = vector.extract_strided_slice %400 {offsets = [0, 256], sizes = [8, 128], strides = [1, 1]} : vector<8x384xf32> to vector<8x128xf32>
    %405 = arith.mulf %403, %367 : vector<8x128xf32>
    %406 = arith.mulf %402, %401 : vector<8x128xf32>
    %407 = arith.addf %405, %406 : vector<8x128xf32>
    %408 = math.tanh %407 : vector<8x128xf32>
    %409 = arith.mulf %404, %408 : vector<8x128xf32>
    %c0_226 = arith.constant 0 : index
    %410 = arith.index_cast %c7_i32_214 : i32 to index
    %c0_227 = arith.constant 0 : index
    %c0_228 = arith.constant 0 : index
    %411 = vector.load %arg5[%c0_226, %410, %c0_227, %c0_228] : memref<3x8x8x128xf32, #tpu.memory_space<vmem>>, vector<1x1x8x128xf32>
    %412 = vector.shape_cast %411 : vector<1x1x8x128xf32> to vector<8x128xf32>
    %413 = vector.shape_cast %409 : vector<8x128xf32> to vector<1x1x8x128xf32>
    tpu.vector_store %arg5[%c0_226, %410, %c0_227, %c0_228], %413 {strides = array<i32>} : memref<3x8x8x128xf32, #tpu.memory_space<vmem>>, vector<1x1x8x128xf32>,
    %c1_229 = arith.constant 1 : index
    %414 = arith.index_cast %c7_i32_214 : i32 to index
    %c0_230 = arith.constant 0 : index
    %c0_231 = arith.constant 0 : index
    %415 = vector.load %arg5[%c1_229, %414, %c0_230, %c0_231] : memref<3x8x8x128xf32, #tpu.memory_space<vmem>>, vector<1x1x8x128xf32>
    %416 = vector.shape_cast %415 : vector<1x1x8x128xf32> to vector<8x128xf32>
    %417 = vector.shape_cast %407 : vector<8x128xf32> to vector<1x1x8x128xf32>
    tpu.vector_store %arg5[%c1_229, %414, %c0_230, %c0_231], %417 {strides = array<i32>} : memref<3x8x8x128xf32, #tpu.memory_space<vmem>>, vector<1x1x8x128xf32>,
    %c2_232 = arith.constant 2 : index
    %418 = arith.index_cast %c7_i32_214 : i32 to index
    %c0_233 = arith.constant 0 : index
    %c0_234 = arith.constant 0 : index
    %419 = vector.load %arg5[%c2_232, %418, %c0_233, %c0_234] : memref<3x8x8x128xf32, #tpu.memory_space<vmem>>, vector<1x1x8x128xf32>
    %420 = vector.shape_cast %419 : vector<1x1x8x128xf32> to vector<8x128xf32>
    %421 = vector.shape_cast %404 : vector<8x128xf32> to vector<1x1x8x128xf32>
    tpu.vector_store %arg5[%c2_232, %418, %c0_233, %c0_234], %421 {strides = array<i32>} : memref<3x8x8x128xf32, #tpu.memory_space<vmem>>, vector<1x1x8x128xf32>,
    %c8_i32_235 = arith.constant 8 : i32
    %c0_236 = arith.constant 0 : index
    %c0_237 = arith.constant 0 : index
    %422 = vector.load %arg9[%c0_236, %c0_237] : memref<8x128xf32, #tpu.memory_space<vmem>>, vector<8x128xf32>
    tpu.vector_store %arg9[%c0_236, %c0_237], %409 {strides = array<i32>} : memref<8x128xf32, #tpu.memory_space<vmem>>, vector<8x128xf32>,
    %c0_238 = arith.constant 0 : index
    %c0_239 = arith.constant 0 : index
    %423 = vector.load %arg10[%c0_238, %c0_239] : memref<8x128xf32, #tpu.memory_space<vmem>>, vector<8x128xf32>
    tpu.vector_store %arg10[%c0_238, %c0_239], %407 {strides = array<i32>} : memref<8x128xf32, #tpu.memory_space<vmem>>, vector<8x128xf32>,
    return
  }
  func.func @transform_0(%arg0: i32, %arg1: i32) -> (i32, i32, i32) {
    %c0_i32 = arith.constant 0 : i32
    %c0_i32_0 = arith.constant 0 : i32
    return %arg1, %arg0, %c0_i32 : i32, i32, i32
  }
  func.func @transform_2(%arg0: i32, %arg1: i32) -> (i32, i32) {
    %c0_i32 = arith.constant 0 : i32
    %c0_i32_0 = arith.constant 0 : i32
    %c0_i32_1 = arith.constant 0 : i32
    return %c0_i32, %c0_i32_0 : i32, i32
  }
  func.func @transform_3(%arg0: i32, %arg1: i32) -> (i32, i32, i32, i32) {
    %c0_i32 = arith.constant 0 : i32
    %c0_i32_0 = arith.constant 0 : i32
    %c0_i32_1 = arith.constant 0 : i32
    return %c0_i32, %arg1, %arg0, %c0_i32_0 : i32, i32, i32, i32
  }
}

</mosaic_0001>

<llo_original>
// kernel: tpu_custom_call.1
$region0: #{tpu_custom_call.1}
  #allocation0 [shape = 'u32[]', space=smem, size = 0x4, offset = 0x4, fixed_abs, tag = 'smem constant byte address 0x4 - core index']
  #allocation1 [shape = 'u32[144,128]{1,0:T(1,128)}', space=vmem, size = 0x12000, scoped, tag = 'internal scratch']
  #allocation2 [shape = 'bf16[2,128,512]{2,1,0:T(16,128)(2,1)}', space=vmem, size = 0x40000, scoped, tag = 'scratch operand']
  #allocation3 [shape = 's32[1]{0}', space=sflag, size = 0x4, scoped, tag = 'scratch operand']
  #allocation4 [shape = 'f32[8,8,512]{2,1,0:T(8,128)}', space=vmem, size = 0x20000, scoped, tag = 'scratch operand']
  #allocation5 [shape = 'f32[8,128]{1,0:T(8,128)}', space=vmem, size = 0x1000, scoped, tag = 'scratch operand']
  #allocation6 [shape = 'f32[8,128]{1,0:T(8,128)}', space=vmem, size = 0x1000, scoped, tag = 'scratch operand']
  #allocation13 [shape = 's32[]', space=sflag, size = 0x4, offset = 0, fixed_abs, tag = 'sflag constant byte address 0x0 - dummy sync flag']
  #allocation15 [shape = 's32[]', space=sflag, size = 0x4, offset = 0, fixed_abs, tag = 'sflag constant byte address 0x0 - dummy sync flag']
  %s0 = inlined_call_operand.hbm [shape: bf16[16,8,128], index: 0, kind: input, shape index: {}]
  %s1 = inlined_call_operand.hbm [shape: bf16[2,128,512], index: 1, kind: input, shape index: {}]
  %s2 = inlined_call_operand.hbm [shape: f32[1,512], index: 2, kind: input, shape index: {}]
  %s3 = inlined_call_operand.hbm [shape: f32[3,16,8,128], index: 3, kind: output, shape index: {}]
  %s4 = sld [smem:[#allocation0]]
  $region53: #{tpu_custom_call.1} parent=0
    _
  %s6 = ssub.s32 1, %s4
  %s7 = scalar_select 0, %s6, %s4
  $region1: #{tpu_custom_call.1} parent=0
    #allocation7 [shape = 'u8[32768]{0}', space=vmem, size = 0x8000, scoped, tag = 'input window, operand 0']
    #allocation8 [shape = 's32[2]{0}', space=sflag, size = 0x8, scoped, tag = 'scoped memory for tpu_custom_call.1']
    #allocation9 [shape = 's32[2]{0}', space=sflag, size = 0x8, scoped, tag = 'scoped memory for tpu_custom_call.1']
    #allocation10 [shape = 'u8[2048]{0}', space=vmem, size = 0x800, scoped, tag = 'input window, operand 2, single buffered']
    #allocation11 [shape = 's32[1]{0}', space=sflag, size = 0x4, scoped, tag = 'scoped memory for tpu_custom_call.1']
    #allocation12 [shape = 'u8[196608]{0}', space=vmem, size = 0x30000, scoped, tag = 'output window, operand 0']
    %8 = vsyncpa [#allocation8], 0
    %s9 = scalar_lea.sflag [#allocation8], 1
    %10 = vsyncpa %s9, 0
    %11 = vsyncpa [#allocation11], 0
    %12 = vsyncpa [#allocation9], 0
    %s13 = scalar_lea.sflag [#allocation9], 1
    %14 = vsyncpa %s13, 0
    loop: start=0, step=1, limit=4
    $region2: #{tpu_custom_call.1} parent=1 // loop_pre_header
      _
    $region3: #{tpu_custom_call.1} parent=1 // loop_header
      %s16 = sphi 0, %s20
      %p17 = scmp.ge.s32.totalorder %s16, 4
      %s23 = sphi 0, %s35
      %s24 = sphi 0, %s31
      %s25 = sphi 0, %s23
      %s26 = sphi 0, %s24
      %s27 = sphi 0, %s25
      %s28 = sphi 0, %s26
      %s40 = sphi 0, %s42
      %s43 = sphi 0, %s40
      %s44 = sphi 0, %s43
      %s60 = sphi 0, %s44
      %s64 = sphi 0, %s64
      %s66 = sphi 0, %s64
      %s67 = sphi 0, %s66
      %s81 = sphi 0, %s67
      %s89 = sphi 0, %s91
      %s92 = sphi 0, %s89
      %s93 = sphi 0, %s92
      %s109 = sphi 0, %s93
    $region4: #{tpu_custom_call.1} parent=1 // loop_header_branch
      %19 = sbr.rel (%p17) target = $region8
    $region5: #{tpu_custom_call.1} parent=1 // loop_body
      %s21 = ssub.s32 %s16, 1
      %s22 = ssub.s32 %s16, 2
      %s29 = sadd.s32 1, %s24
      %p30 = scmp.ge.s32.totalorder %s29, 2
      %s31 = scalar_select %p30, 0, %s29
      %s32 = sadd.s32 1, %s23
      %s33 = scalar_select %p30, %s32, %s23
      %p34 = scmp.ge.s32.totalorder %s33, 1
      %s35 = scalar_select %p34, 0, %s33
      %s36 = ssub.s32 %s24, %s31
      %s37 = ssub.s32 %s23, %s35
      %s38 = sor.u32 %s36, %s37
      %p39 = scmp.eq.s32.totalorder %s38, 0
      %s41 = sadd.s32 %s40, 1
      %s42 = scalar_select %p39, %s40, %s41
      %p45 = pneg %p39
      %p46 = scmp.eq.s32.totalorder %s16, 1
      %p47 = por %p45, %p46
      %p48 = scmp.ne.s32.totalorder %s40, %s43
      %p49 = scmp.eq.s32.totalorder %s16, 0
      %p50 = por %p48, %p49
      %p51 = scmp.ne.s32.totalorder %s40, %s43
      %p52 = scmp.eq.s32.totalorder %s21, 1
      %p53 = por %p51, %p52
      %p54 = scmp.ne.s32.totalorder %s43, %s44
      %p55 = scmp.eq.s32.totalorder %s21, 0
      %p56 = por %p54, %p55
      %p57 = scmp.ne.s32.totalorder %s43, %s44
      %p58 = scmp.eq.s32.totalorder %s22, 1
      %p59 = por %p57, %p58
      %p61 = scmp.ne.s32.totalorder %s44, %s60
      %p62 = scmp.eq.s32.totalorder %s22, 0
      %p63 = por %p61, %p62
      %s65 = sadd.s32 %s64, 1
      %p68 = scmp.eq.s32.totalorder %s16, 1
      %p69 = scmp.ne.s32.totalorder %s64, %s66
      %p70 = scmp.eq.s32.totalorder %s16, 0
      %p71 = por %p69, %p70
      %p72 = scmp.ne.s32.totalorder %s64, %s66
      %p73 = scmp.eq.s32.totalorder %s21, 1
      %p74 = por %p72, %p73
      %p75 = scmp.ne.s32.totalorder %s66, %s67
      %p76 = scmp.eq.s32.totalorder %s21, 0
      %p77 = por %p75, %p76
      %p78 = scmp.ne.s32.totalorder %s66, %s67
      %p79 = scmp.eq.s32.totalorder %s22, 1
      %p80 = por %p78, %p79
      %p82 = scmp.ne.s32.totalorder %s67, %s81
      %p83 = scmp.eq.s32.totalorder %s22, 0
      %p84 = por %p82, %p83
      %s85 = ssub.s32 %s24, %s31
      %s86 = ssub.s32 %s23, %s35
      %s87 = sor.u32 %s85, %s86
      %p88 = scmp.eq.s32.totalorder %s87, 0
      %s90 = sadd.s32 %s89, 1
      %s91 = scalar_select %p88, %s89, %s90
      %p94 = pneg %p88
      %p95 = scmp.eq.s32.totalorder %s16, 1
      %p96 = por %p94, %p95
      %p97 = scmp.ne.s32.totalorder %s89, %s92
      %p98 = scmp.eq.s32.totalorder %s16, 0
      %p99 = por %p97, %p98
      %p100 = scmp.ne.s32.totalorder %s89, %s92
      %p101 = scmp.eq.s32.totalorder %s21, 1
      %p102 = por %p100, %p101
      %p103 = scmp.ne.s32.totalorder %s92, %s93
      %p104 = scmp.eq.s32.totalorder %s21, 0
      %p105 = por %p103, %p104
      %p106 = scmp.ne.s32.totalorder %s92, %s93
      %p107 = scmp.eq.s32.totalorder %s22, 1
      %p108 = por %p106, %p107
      %p110 = scmp.ne.s32.totalorder %s93, %s109
      %p111 = scmp.eq.s32.totalorder %s22, 0
      %p112 = por %p110, %p111
      %p113 = scmp.le.s32.totalorder 1, %s16
      %p114 = scmp.lt.s32.totalorder %s16, 3
      %p115 = pnand %p113, %p114
      %p116 = pneg %p115
      // Predicated region
      $region9: #{tpu_custom_call.1} parent=5 // pred_check
        _
      $region10: #{tpu_custom_call.1} parent=5 // pred_check_branch
        %118 = sbr.rel (%p115) target = $region12
      $region11: #{tpu_custom_call.1} parent=5 // pred_region
        %s119 = ssub.s32 %s16, 1
        // Predicated region
        $region13: #{tpu_custom_call.1} parent=11 // pred_check
          %p120 = pneg %p77
        $region14: #{tpu_custom_call.1} parent=11 // pred_check_branch
          %122 = sbr.rel (%p120) target = $region16
        $region15: #{tpu_custom_call.1} parent=11 // pred_region
          %s124 = ssub.s32 64, 64
          %125 = vsyncadd [#allocation11], %s124
          %s127 = sshll.u32 [#allocation10], 4
          %s128 = int_to_ptr.vmem [resolvable:$true] %s127
          %130 = dma.hbm_to_vmem [thread:$0]  %s2, 64, %s128, [#allocation11]
        $region16: #{tpu_custom_call.1} parent=11 // pred_fallthru
          _
      $region12: #{tpu_custom_call.1} parent=5 // pred_fallthru
        _
      %p131 = scmp.lt.s32.totalorder %s16, 2
      // Predicated region
      $region17: #{tpu_custom_call.1} parent=5 // pred_check
        %p132 = pneg %p131
      $region18: #{tpu_custom_call.1} parent=5 // pred_check_branch
        %134 = sbr.rel (%p132) target = $region20
      $region19: #{tpu_custom_call.1} parent=5 // pred_region
        // Predicated region
        $region21: #{tpu_custom_call.1} parent=19 // pred_check
          %p135 = pneg %p50
        $region22: #{tpu_custom_call.1} parent=19 // pred_check_branch
          %137 = sbr.rel (%p135) target = $region24
        $region23: #{tpu_custom_call.1} parent=19 // pred_region
          %s138 = sand.u32 %s40, 1
          %s139 = scalar_lea.sflag [#allocation8], %s138
          %s140 = sand.u32 %s40, 1
          %s141 = smul.addr %s140, 32
          %s142 = scalar_lea.vmem [#allocation7], %s141
          %s143 = smul.u32 8, %s24
          %s145 = ssub.s32 512, 512
          %146 = vsyncadd %s139, %s145
          %s147 = sadd.s32 %s23, %s143
          %s148 = smul.addr %s147, 64
          %s149 = scalar_lea.hbm %s0, %s148
          %s150 = sshll.u32 %s142, 4
          %s151 = int_to_ptr.vmem [resolvable:$true] %s150
          %156 = dma.hbm_to_vmem [thread:$0]  %s149, 512, %s151, %s139, 64, 64, 4
        $region24: #{tpu_custom_call.1} parent=19 // pred_fallthru
          _
      $region20: #{tpu_custom_call.1} parent=5 // pred_fallthru
        _
      %p157 = scmp.le.s32.totalorder 1, %s16
      %p158 = scmp.lt.s32.totalorder %s16, 3
      %p159 = pnand %p157, %p158
      %p160 = pneg %p159
      // Predicated region
      $region25: #{tpu_custom_call.1} parent=5 // pred_check
        _
      $region26: #{tpu_custom_call.1} parent=5 // pred_check_branch
        %162 = sbr.rel (%p159) target = $region28
      $region27: #{tpu_custom_call.1} parent=5 // pred_region
        %s163 = ssub.s32 %s16, 1
        %s164 = sand.u32 %s43, 1
        %s165 = scalar_lea.sflag [#allocation8], %s164
        %s166 = sand.u32 %s43, 1
        %s167 = smul.addr %s166, 32
        %s168 = scalar_lea.vmem [#allocation7], %s167
        // Predicated region
        $region29: #{tpu_custom_call.1} parent=27 // pred_check
          %p169 = pneg %p56
        $region30: #{tpu_custom_call.1} parent=27 // pred_check_branch
          %171 = sbr.rel (%p169) target = $region32
        $region31: #{tpu_custom_call.1} parent=27 // pred_region
          %172 = dma.done %s165, 512
        $region32: #{tpu_custom_call.1} parent=27 // pred_fallthru
          _
        // Predicated region
        $region33: #{tpu_custom_call.1} parent=27 // pred_check
          %p173 = pneg %p77
        $region34: #{tpu_custom_call.1} parent=27 // pred_check_branch
          %175 = sbr.rel (%p173) target = $region36
        $region35: #{tpu_custom_call.1} parent=27 // pred_region
          %176 = dma.done [#allocation11], 64
        $region36: #{tpu_custom_call.1} parent=27 // pred_fallthru
          _
        %s177 = sand.u32 %s43, 1
        %s178 = scalar_lea.sflag [#allocation8], %s177
        %s179 = sand.u32 %s43, 1
        %s180 = smul.addr %s179, 32
        %s181 = scalar_lea.vmem [#allocation7], %s180
        %p182 = pneg %p56
        %p183 = pneg %p53
        %p184 = pneg %p77
        %p185 = pneg %p74
        %p186 = pneg %p105
        %p187 = pneg %p102
        %s188 = sand.u32 %s92, 1
        %s189 = scalar_lea.sflag [#allocation9], %s188
        %s190 = sand.u32 %s92, 1
        %s191 = smul.addr %s190, 192
        %s192 = scalar_lea.vmem [#allocation12], %s191
        %s193 = smul.u32 8, %s26
        %s194 = smul.u32 8, %s26
        %p196 = scmp.eq.s32.totalorder %s26, 0
        // Predicated region
        $region37: #{tpu_custom_call.1} parent=27 // pred_check
          %p197 = pneg %p196
        $region38: #{tpu_custom_call.1} parent=27 // pred_check_branch
          %199 = sbr.rel (%p197) target = $region40
        $region39: #{tpu_custom_call.1} parent=27 // pred_region
          #allocation14 [shape = 'u32[9]{0}', space=smem, size = 0x24, scoped, tag = 'DMA stride descriptor']
          %s201 = sshll.u32 1, 14
          %s202 = sxor.u32 4294967295, %s201
          %s204 = sld [smem:[#allocation0]]
          %s205 = sadd.s32 2, %s204
          %s207 = sshll.u32 7, 26
          %s208 = sxor.u32 4294967295, %s207
          %s209 = sand.u32 0, %s208
          %s210 = sshll.u32 %s205, 26
          %s211 = sor.u32 %s209, %s210
          %s212 = sshll.u32 [#allocation2], 4
          %s213 = int_to_ptr.vmem [resolvable:$true] %s212
          %216 = sst [smem:[#allocation14]] 512
          %s217 = scalar_lea.smem [#allocation14], 1
          %218 = sst [smem:[%s217]] 512
          %s219 = scalar_lea.smem [#allocation14], 2
          %220 = sst [smem:[%s219]] 4
          %s221 = scalar_lea.smem [#allocation14], 3
          %222 = sst [smem:[%s221]] 64
          %s223 = scalar_lea.smem [#allocation14], 4
          %224 = sst [smem:[%s223]] 128
          %s225 = scalar_lea.smem [#allocation14], 5
          %226 = sst [smem:[%s225]] 2
          %s227 = scalar_lea.smem [#allocation14], 6
          %228 = sst [smem:[%s227]] 256
          %s229 = scalar_lea.smem [#allocation14], 7
          %230 = sst [smem:[%s229]] 64
          %s231 = scalar_lea.smem [#allocation14], 8
          %232 = sst [smem:[%s231]] 4
          %234 = dma.general %s1, 8192, %s213, [#allocation3], [#allocation13], [#allocation14], %s211, 0
          %s235 = smul.u32 4, 2
          %s236 = smul.u32 %s235, 16
          %s237 = smul.u32 %s236, 4
          %s238 = sshll.u32 %s237, 4
          %239 = dma.done [#allocation3], %s238
          %240 = vst [vmem:[#allocation5] sm:$0xff] 0.0
          %241 = vst [vmem:[#allocation6] sm:$0xff] 0.0
        $region40: #{tpu_custom_call.1} parent=27 // pred_fallthru
          _
        %v242 = vld [vmem:[#allocation10] sm:$0xf]
        %v243 = vld [vmem:[%s168] sm:$0xf]
        %v244 = vld [vmem:[#allocation2] sm:$0xff]
        %v245 = vld [vmem:[#allocation2 + $0x8] sm:$0xff]
        %v246 = vld [vmem:[#allocation2 + $0x10] sm:$0xff]
        %v247 = vld [vmem:[#allocation2 + $0x18] sm:$0xff]
        %v248 = vld [vmem:[#allocation2 + $0x20] sm:$0xff]
        %v249 = vld [vmem:[#allocation2 + $0x28] sm:$0xff]
        %v250 = vld [vmem:[#allocation2 + $0x30] sm:$0xff]
        %v251 = vld [vmem:[#allocation2 + $0x38] sm:$0xff]
        %v252 = vld [vmem:[#allocation2 + $0x40] sm:$0xff]
        %v253 = vld [vmem:[#allocation2 + $0x48] sm:$0xff]
        %v254 = vld [vmem:[#allocation2 + $0x50] sm:$0xff]
        %v255 = vld [vmem:[#allocation2 + $0x58] sm:$0xff]
        %v256 = vld [vmem:[#allocation2 + $0x60] sm:$0xff]
        %v257 = vld [vmem:[#allocation2 + $0x68] sm:$0xff]
        %v258 = vld [vmem:[#allocation2 + $0x70] sm:$0xff]
        %v259 = vld [vmem:[#allocation2 + $0x78] sm:$0xff]
        %v260 = vld [vmem:[#allocation2 + $0x80] sm:$0xff]
        %v261 = vld [vmem:[#allocation2 + $0x88] sm:$0xff]
        %v262 = vld [vmem:[#allocation2 + $0x90] sm:$0xff]
        %v263 = vld [vmem:[#allocation2 + $0x98] sm:$0xff]
        %v264 = vld [vmem:[#allocation2 + $0xa0] sm:$0xff]
        %v265 = vld [vmem:[#allocation2 + $0xa8] sm:$0xff]
        %v266 = vld [vmem:[#allocation2 + $0xb0] sm:$0xff]
        %v267 = vld [vmem:[#allocation2 + $0xb8] sm:$0xff]
        %v268 = vld [vmem:[#allocation2 + $0xc0] sm:$0xff]
        %v269 = vld [vmem:[#allocation2 + $0xc8] sm:$0xff]
        %v270 = vld [vmem:[#allocation2 + $0xd0] sm:$0xff]
        %v271 = vld [vmem:[#allocation2 + $0xd8] sm:$0xff]
        %v272 = vld [vmem:[#allocation2 + $0xe0] sm:$0xff]
        %v273 = vld [vmem:[#allocation2 + $0xe8] sm:$0xff]
        %v274 = vld [vmem:[#allocation2 + $0xf0] sm:$0xff]
        %v275 = vld [vmem:[#allocation2 + $0xf8] sm:$0xff]
        %v277 = vlaneseq
        %v278 = vshrl.u32 %v277, 7
        %v279 = vsub.s32 0, %v278
        %v280 = vrot.slane %v242, %v279
        %v281 = vlaneseq
        %v282 = vshrl.u32 %v281, 7
        %v283 = vsub.s32 1, %v282
        %v284 = vrot.slane %v242, %v283
        %v285 = vlaneseq
        %v286 = vshrl.u32 %v285, 7
        %v287 = vsub.s32 2, %v286
        %v288 = vrot.slane %v242, %v287
        %v289 = vlaneseq
        %v290 = vshrl.u32 %v289, 7
        %v291 = vsub.s32 3, %v290
        %v292 = vrot.slane %v242, %v291
        %297 = vmatprep.subr.bf16.mxu0 %v245
        %298 = vmatpush1.bf16.msra.mxu0 %v244
        %299 = vmatprep.subr.bf16.mxu0 %v249
        %300 = vmatpush1.bf16.msra.mxu0 %v248
        %301 = vmatprep.subr.bf16.mxu0 %v253
        %302 = vmatpush1.bf16.msra.mxu0 %v252
        %303 = vmatprep.subr.bf16.mxu0 %v257
        %304 = vmatpush1.bf16.msra.mxu0 %v256
        %305 = vmatprep.subr.bf16.mxu0 %v261
        %306 = vmatpush1.bf16.msra.mxu0 %v260
        %307 = vmatprep.subr.bf16.mxu0 %v265
        %308 = vmatpush1.bf16.msra.mxu0 %v264
        %309 = vmatprep.subr.bf16.mxu0 %v269
        %310 = vmatpush1.bf16.msra.mxu0 %v268
        %311 = vmatprep.subr.bf16.mxu0 %v273
        %312 = vmatpush1.bf16.msra.mxu0 %v272
        %313 = vmatprep.subr.bf16.mxu0 0
        %314 = vmatpush1.bf16.msra.mxu0 0
        %315 = vmatprep.subr.bf16.mxu0 0
        %316 = vmatpush1.bf16.msra.mxu0 0
        %317 = vmatprep.subr.bf16.mxu0 0
        %318 = vmatpush1.bf16.msra.mxu0 0
        %319 = vmatprep.subr.bf16.mxu0 0
        %320 = vmatpush1.bf16.msra.mxu0 0
        %321 = vmatprep.subr.bf16.mxu0 0
        %322 = vmatpush1.bf16.msra.mxu0 0
        %323 = vmatprep.subr.bf16.mxu0 0
        %324 = vmatpush1.bf16.msra.mxu0 0
        %325 = vmatprep.subr.bf16.mxu0 0
        %326 = vmatpush1.bf16.msra.mxu0 0
        %327 = vmatprep.subr.bf16.mxu0 0
        %328 = vmatpush1.bf16.msra.mxu0 0
        %329 = vmatprep.mubr.bf16.mxu0 0
        %330 = vmatmul.mubr.bf16.gmra.mrb[0].mxu0 %v243
        %v331 = vpop.f32.mrb[0].mxu0
        %v332 = vadd.f32 %v280, %v331
        %v333 = vpop.f32.mrb[0].mxu0
        %v334 = vadd.f32 %v284, %v333
        %v335 = vpop.f32.mrb[0].mxu0
        %v336 = vpop.f32.mrb[0].mxu0
        %337 = vdwg.mxu0
        %338 = vmatprep.subr.bf16.mxu0 %v247
        %339 = vmatpush1.bf16.msra.mxu0 %v246
        %340 = vmatprep.subr.bf16.mxu0 %v251
        %341 = vmatpush1.bf16.msra.mxu0 %v250
        %342 = vmatprep.subr.bf16.mxu0 %v255
        %343 = vmatpush1.bf16.msra.mxu0 %v254
        %344 = vmatprep.subr.bf16.mxu0 %v259
        %345 = vmatpush1.bf16.msra.mxu0 %v258
        %346 = vmatprep.subr.bf16.mxu0 %v263
        %347 = vmatpush1.bf16.msra.mxu0 %v262
        %348 = vmatprep.subr.bf16.mxu0 %v267
        %349 = vmatpush1.bf16.msra.mxu0 %v266
        %350 = vmatprep.subr.bf16.mxu0 %v271
        %351 = vmatpush1.bf16.msra.mxu0 %v270
        %352 = vmatprep.subr.bf16.mxu0 %v275
        %353 = vmatpush1.bf16.msra.mxu0 %v274
        %354 = vmatprep.subr.bf16.mxu0 0
        %355 = vmatpush1.bf16.msra.mxu0 0
        %356 = vmatprep.subr.bf16.mxu0 0
        %357 = vmatpush1.bf16.msra.mxu0 0
        %358 = vmatprep.subr.bf16.mxu0 0
        %359 = vmatpush1.bf16.msra.mxu0 0
        %360 = vmatprep.subr.bf16.mxu0 0
        %361 = vmatpush1.bf16.msra.mxu0 0
        %362 = vmatprep.subr.bf16.mxu0 0
        %363 = vmatpush1.bf16.msra.mxu0 0
        %364 = vmatprep.subr.bf16.mxu0 0
        %365 = vmatpush1.bf16.msra.mxu0 0
        %366 = vmatprep.subr.bf16.mxu0 0
        %367 = vmatpush1.bf16.msra.mxu0 0
        %368 = vmatprep.subr.bf16.mxu0 0
        %369 = vmatpush1.bf16.msra.mxu0 0
        %370 = vmatprep.mubr.bf16.mxu0 0
        %371 = vmatmul.mubr.bf16.gmra.mrb[0].mxu0 %v243
        %v372 = vpop.f32.mrb[0].mxu0
        %v373 = vadd.f32 %v288, %v372
        %v374 = vpop.f32.mrb[0].mxu0
        %v375 = vadd.f32 %v292, %v374
        %v376 = vpop.f32.mrb[0].mxu0
        %v377 = vpop.f32.mrb[0].mxu0
        %378 = vdwg.mxu0
        %379 = vst [vmem:[#allocation4] sm:$0xff] %v332
        %380 = vst [vmem:[#allocation4 + $0x8] sm:$0xff] %v334
        %381 = vst [vmem:[#allocation4 + $0x10] sm:$0xff] %v373
        %382 = vst [vmem:[#allocation4 + $0x18] sm:$0xff] %v375
        %s383 = scalar_lea.vmem %s168, 4 [#allocation7]
        %v384 = vld [vmem:[%s383] sm:$0xf]
        %v385 = vld [vmem:[#allocation2] sm:$0xff]
        %v386 = vld [vmem:[#allocation2 + $0x8] sm:$0xff]
        %v387 = vld [vmem:[#allocation2 + $0x10] sm:$0xff]
        %v388 = vld [vmem:[#allocation2 + $0x18] sm:$0xff]
        %v389 = vld [vmem:[#allocation2 + $0x20] sm:$0xff]
        %v390 = vld [vmem:[#allocation2 + $0x28] sm:$0xff]
        %v391 = vld [vmem:[#allocation2 + $0x30] sm:$0xff]
        %v392 = vld [vmem:[#allocation2 + $0x38] sm:$0xff]
        %v393 = vld [vmem:[#allocation2 + $0x40] sm:$0xff]
        %v394 = vld [vmem:[#allocation2 + $0x48] sm:$0xff]
        %v395 = vld [vmem:[#allocation2 + $0x50] sm:$0xff]
        %v396 = vld [vmem:[#allocation2 + $0x58] sm:$0xff]
        %v397 = vld [vmem:[#allocation2 + $0x60] sm:$0xff]
        %v398 = vld [vmem:[#allocation2 + $0x68] sm:$0xff]
        %v399 = vld [vmem:[#allocation2 + $0x70] sm:$0xff]
        %v400 = vld [vmem:[#allocation2 + $0x78] sm:$0xff]
        %v401 = vld [vmem:[#allocation2 + $0x80] sm:$0xff]
        %v402 = vld [vmem:[#allocation2 + $0x88] sm:$0xff]
        %v403 = vld [vmem:[#allocation2 + $0x90] sm:$0xff]
        %v404 = vld [vmem:[#allocation2 + $0x98] sm:$0xff]
        %v405 = vld [vmem:[#allocation2 + $0xa0] sm:$0xff]
        %v406 = vld [vmem:[#allocation2 + $0xa8] sm:$0xff]
        %v407 = vld [vmem:[#allocation2 + $0xb0] sm:$0xff]
        %v408 = vld [vmem:[#allocation2 + $0xb8] sm:$0xff]
        %v409 = vld [vmem:[#allocation2 + $0xc0] sm:$0xff]
        %v410 = vld [vmem:[#allocation2 + $0xc8] sm:$0xff]
        %v411 = vld [vmem:[#allocation2 + $0xd0] sm:$0xff]
        %v412 = vld [vmem:[#allocation2 + $0xd8] sm:$0xff]
        %v413 = vld [vmem:[#allocation2 + $0xe0] sm:$0xff]
        %v414 = vld [vmem:[#allocation2 + $0xe8] sm:$0xff]
        %v415 = vld [vmem:[#allocation2 + $0xf0] sm:$0xff]
        %v416 = vld [vmem:[#allocation2 + $0xf8] sm:$0xff]
        %417 = vmatprep.subr.bf16.mxu0 %v386
        %418 = vmatpush1.bf16.msra.mxu0 %v385
        %419 = vmatprep.subr.bf16.mxu0 %v390
        %420 = vmatpush1.bf16.msra.mxu0 %v389
        %421 = vmatprep.subr.bf16.mxu0 %v394
        %422 = vmatpush1.bf16.msra.mxu0 %v393
        %423 = vmatprep.subr.bf16.mxu0 %v398
        %424 = vmatpush1.bf16.msra.mxu0 %v397
        %425 = vmatprep.subr.bf16.mxu0 %v402
        %426 = vmatpush1.bf16.msra.mxu0 %v401
        %427 = vmatprep.subr.bf16.mxu0 %v406
        %428 = vmatpush1.bf16.msra.mxu0 %v405
        %429 = vmatprep.subr.bf16.mxu0 %v410
        %430 = vmatpush1.bf16.msra.mxu0 %v409
        %431 = vmatprep.subr.bf16.mxu0 %v414
        %432 = vmatpush1.bf16.msra.mxu0 %v413
        %433 = vmatprep.subr.bf16.mxu0 0
        %434 = vmatpush1.bf16.msra.mxu0 0
        %435 = vmatprep.subr.bf16.mxu0 0
        %436 = vmatpush1.bf16.msra.mxu0 0
        %437 = vmatprep.subr.bf16.mxu0 0
        %438 = vmatpush1.bf16.msra.mxu0 0
        %439 = vmatprep.subr.bf16.mxu0 0
        %440 = vmatpush1.bf16.msra.mxu0 0
        %441 = vmatprep.subr.bf16.mxu0 0
        %442 = vmatpush1.bf16.msra.mxu0 0
        %443 = vmatprep.subr.bf16.mxu0 0
        %444 = vmatpush1.bf16.msra.mxu0 0
        %445 = vmatprep.subr.bf16.mxu0 0
        %446 = vmatpush1.bf16.msra.mxu0 0
        %447 = vmatprep.subr.bf16.mxu0 0
        %448 = vmatpush1.bf16.msra.mxu0 0
        %449 = vmatprep.mubr.bf16.mxu0 0
        %450 = vmatmul.mubr.bf16.gmra.mrb[0].mxu0 %v384
        %v451 = vpop.f32.mrb[0].mxu0
        %v452 = vadd.f32 %v280, %v451
        %v453 = vpop.f32.mrb[0].mxu0
        %v454 = vadd.f32 %v284, %v453
        %v455 = vpop.f32.mrb[0].mxu0
        %v456 = vpop.f32.mrb[0].mxu0
        %457 = vdwg.mxu0
        %458 = vmatprep.subr.bf16.mxu0 %v388
        %459 = vmatpush1.bf16.msra.mxu0 %v387
        %460 = vmatprep.subr.bf16.mxu0 %v392
        %461 = vmatpush1.bf16.msra.mxu0 %v391
        %462 = vmatprep.subr.bf16.mxu0 %v396
        %463 = vmatpush1.bf16.msra.mxu0 %v395
        %464 = vmatprep.subr.bf16.mxu0 %v400
        %465 = vmatpush1.bf16.msra.mxu0 %v399
        %466 = vmatprep.subr.bf16.mxu0 %v404
        %467 = vmatpush1.bf16.msra.mxu0 %v403
        %468 = vmatprep.subr.bf16.mxu0 %v408
        %469 = vmatpush1.bf16.msra.mxu0 %v407
        %470 = vmatprep.subr.bf16.mxu0 %v412
        %471 = vmatpush1.bf16.msra.mxu0 %v411
        %472 = vmatprep.subr.bf16.mxu0 %v416
        %473 = vmatpush1.bf16.msra.mxu0 %v415
        %474 = vmatprep.subr.bf16.mxu0 0
        %475 = vmatpush1.bf16.msra.mxu0 0
        %476 = vmatprep.subr.bf16.mxu0 0
        %477 = vmatpush1.bf16.msra.mxu0 0
        %478 = vmatprep.subr.bf16.mxu0 0
        %479 = vmatpush1.bf16.msra.mxu0 0
        %480 = vmatprep.subr.bf16.mxu0 0
        %481 = vmatpush1.bf16.msra.mxu0 0
        %482 = vmatprep.subr.bf16.mxu0 0
        %483 = vmatpush1.bf16.msra.mxu0 0
        %484 = vmatprep.subr.bf16.mxu0 0
        %485 = vmatpush1.bf16.msra.mxu0 0
        %486 = vmatprep.subr.bf16.mxu0 0
        %487 = vmatpush1.bf16.msra.mxu0 0
        %488 = vmatprep.subr.bf16.mxu0 0
        %489 = vmatpush1.bf16.msra.mxu0 0
        %490 = vmatprep.mubr.bf16.mxu0 0
        %491 = vmatmul.mubr.bf16.gmra.mrb[0].mxu0 %v384
        %v492 = vpop.f32.mrb[0].mxu0
        %v493 = vadd.f32 %v288, %v492
        %v494 = vpop.f32.mrb[0].mxu0
        %v495 = vadd.f32 %v292, %v494
        %v496 = vpop.f32.mrb[0].mxu0
        %v497 = vpop.f32.mrb[0].mxu0
        %498 = vdwg.mxu0
        %s499 = scalar_lea.vmem [#allocation4], 32
        %500 = vst [vmem:[%s499] sm:$0xff] %v452
        %501 = vst [vmem:[%s499 + $0x8] sm:$0xff] %v454
        %502 = vst [vmem:[%s499 + $0x10] sm:$0xff] %v493
        %503 = vst [vmem:[%s499 + $0x18] sm:$0xff] %v495
        %s504 = scalar_lea.vmem %s168, 8 [#allocation7]
        %v505 = vld [vmem:[%s504] sm:$0xf]
        %v506 = vld [vmem:[#allocation2] sm:$0xff]
        %v507 = vld [vmem:[#allocation2 + $0x8] sm:$0xff]
        %v508 = vld [vmem:[#allocation2 + $0x10] sm:$0xff]
        %v509 = vld [vmem:[#allocation2 + $0x18] sm:$0xff]
        %v510 = vld [vmem:[#allocation2 + $0x20] sm:$0xff]
        %v511 = vld [vmem:[#allocation2 + $0x28] sm:$0xff]
        %v512 = vld [vmem:[#allocation2 + $0x30] sm:$0xff]
        %v513 = vld [vmem:[#allocation2 + $0x38] sm:$0xff]
        %v514 = vld [vmem:[#allocation2 + $0x40] sm:$0xff]
        %v515 = vld [vmem:[#allocation2 + $0x48] sm:$0xff]
        %v516 = vld [vmem:[#allocation2 + $0x50] sm:$0xff]
        %v517 = vld [vmem:[#allocation2 + $0x58] sm:$0xff]
        %v518 = vld [vmem:[#allocation2 + $0x60] sm:$0xff]
        %v519 = vld [vmem:[#allocation2 + $0x68] sm:$0xff]
        %v520 = vld [vmem:[#allocation2 + $0x70] sm:$0xff]
        %v521 = vld [vmem:[#allocation2 + $0x78] sm:$0xff]
        %v522 = vld [vmem:[#allocation2 + $0x80] sm:$0xff]
        %v523 = vld [vmem:[#allocation2 + $0x88] sm:$0xff]
        %v524 = vld [vmem:[#allocation2 + $0x90] sm:$0xff]
        %v525 = vld [vmem:[#allocation2 + $0x98] sm:$0xff]
        %v526 = vld [vmem:[#allocation2 + $0xa0] sm:$0xff]
        %v527 = vld [vmem:[#allocation2 + $0xa8] sm:$0xff]
        %v528 = vld [vmem:[#allocation2 + $0xb0] sm:$0xff]
        %v529 = vld [vmem:[#allocation2 + $0xb8] sm:$0xff]
        %v530 = vld [vmem:[#allocation2 + $0xc0] sm:$0xff]
        %v531 = vld [vmem:[#allocation2 + $0xc8] sm:$0xff]
        %v532 = vld [vmem:[#allocation2 + $0xd0] sm:$0xff]
        %v533 = vld [vmem:[#allocation2 + $0xd8] sm:$0xff]
        %v534 = vld [vmem:[#allocation2 + $0xe0] sm:$0xff]
        %v535 = vld [vmem:[#allocation2 + $0xe8] sm:$0xff]
        %v536 = vld [vmem:[#allocation2 + $0xf0] sm:$0xff]
        %v537 = vld [vmem:[#allocation2 + $0xf8] sm:$0xff]
        %538 = vmatprep.subr.bf16.mxu0 %v507
        %539 = vmatpush1.bf16.msra.mxu0 %v506
        %540 = vmatprep.subr.bf16.mxu0 %v511
        %541 = vmatpush1.bf16.msra.mxu0 %v510
        %542 = vmatprep.subr.bf16.mxu0 %v515
        %543 = vmatpush1.bf16.msra.mxu0 %v514
        %544 = vmatprep.subr.bf16.mxu0 %v519
        %545 = vmatpush1.bf16.msra.mxu0 %v518
        %546 = vmatprep.subr.bf16.mxu0 %v523
        %547 = vmatpush1.bf16.msra.mxu0 %v522
        %548 = vmatprep.subr.bf16.mxu0 %v527
        %549 = vmatpush1.bf16.msra.mxu0 %v526
        %550 = vmatprep.subr.bf16.mxu0 %v531
        %551 = vmatpush1.bf16.msra.mxu0 %v530
        %552 = vmatprep.subr.bf16.mxu0 %v535
        %553 = vmatpush1.bf16.msra.mxu0 %v534
        %554 = vmatprep.subr.bf16.mxu0 0
        %555 = vmatpush1.bf16.msra.mxu0 0
        %556 = vmatprep.subr.bf16.mxu0 0
        %557 = vmatpush1.bf16.msra.mxu0 0
        %558 = vmatprep.subr.bf16.mxu0 0
        %559 = vmatpush1.bf16.msra.mxu0 0
        %560 = vmatprep.subr.bf16.mxu0 0
        %561 = vmatpush1.bf16.msra.mxu0 0
        %562 = vmatprep.subr.bf16.mxu0 0
        %563 = vmatpush1.bf16.msra.mxu0 0
        %564 = vmatprep.subr.bf16.mxu0 0
        %565 = vmatpush1.bf16.msra.mxu0 0
        %566 = vmatprep.subr.bf16.mxu0 0
        %567 = vmatpush1.bf16.msra.mxu0 0
        %568 = vmatprep.subr.bf16.mxu0 0
        %569 = vmatpush1.bf16.msra.mxu0 0
        %570 = vmatprep.mubr.bf16.mxu0 0
        %571 = vmatmul.mubr.bf16.gmra.mrb[0].mxu0 %v505
        %v572 = vpop.f32.mrb[0].mxu0
        %v573 = vadd.f32 %v280, %v572
        %v574 = vpop.f32.mrb[0].mxu0
        %v575 = vadd.f32 %v284, %v574
        %v576 = vpop.f32.mrb[0].mxu0
        %v577 = vpop.f32.mrb[0].mxu0
        %578 = vdwg.mxu0
        %579 = vmatprep.subr.bf16.mxu0 %v509
        %580 = vmatpush1.bf16.msra.mxu0 %v508
        %581 = vmatprep.subr.bf16.mxu0 %v513
        %582 = vmatpush1.bf16.msra.mxu0 %v512
        %583 = vmatprep.subr.bf16.mxu0 %v517
        %584 = vmatpush1.bf16.msra.mxu0 %v516
        %585 = vmatprep.subr.bf16.mxu0 %v521
        %586 = vmatpush1.bf16.msra.mxu0 %v520
        %587 = vmatprep.subr.bf16.mxu0 %v525
        %588 = vmatpush1.bf16.msra.mxu0 %v524
        %589 = vmatprep.subr.bf16.mxu0 %v529
        %590 = vmatpush1.bf16.msra.mxu0 %v528
        %591 = vmatprep.subr.bf16.mxu0 %v533
        %592 = vmatpush1.bf16.msra.mxu0 %v532
        %593 = vmatprep.subr.bf16.mxu0 %v537
        %594 = vmatpush1.bf16.msra.mxu0 %v536
        %595 = vmatprep.subr.bf16.mxu0 0
        %596 = vmatpush1.bf16.msra.mxu0 0
        %597 = vmatprep.subr.bf16.mxu0 0
        %598 = vmatpush1.bf16.msra.mxu0 0
        %599 = vmatprep.subr.bf16.mxu0 0
        %600 = vmatpush1.bf16.msra.mxu0 0
        %601 = vmatprep.subr.bf16.mxu0 0
        %602 = vmatpush1.bf16.msra.mxu0 0
        %603 = vmatprep.subr.bf16.mxu0 0
        %604 = vmatpush1.bf16.msra.mxu0 0
        %605 = vmatprep.subr.bf16.mxu0 0
        %606 = vmatpush1.bf16.msra.mxu0 0
        %607 = vmatprep.subr.bf16.mxu0 0
        %608 = vmatpush1.bf16.msra.mxu0 0
        %609 = vmatprep.subr.bf16.mxu0 0
        %610 = vmatpush1.bf16.msra.mxu0 0
        %611 = vmatprep.mubr.bf16.mxu0 0
        %612 = vmatmul.mubr.bf16.gmra.mrb[0].mxu0 %v505
        %v613 = vpop.f32.mrb[0].mxu0
        %v614 = vadd.f32 %v288, %v613
        %v615 = vpop.f32.mrb[0].mxu0
        %v616 = vadd.f32 %v292, %v615
        %v617 = vpop.f32.mrb[0].mxu0
        %v618 = vpop.f32.mrb[0].mxu0
        %619 = vdwg.mxu0
        %s620 = scalar_lea.vmem [#allocation4], 64
        %621 = vst [vmem:[%s620] sm:$0xff] %v573
        %622 = vst [vmem:[%s620 + $0x8] sm:$0xff] %v575
        %623 = vst [vmem:[%s620 + $0x10] sm:$0xff] %v614
        %624 = vst [vmem:[%s620 + $0x18] sm:$0xff] %v616
        %s625 = scalar_lea.vmem %s168, 12 [#allocation7]
        %v626 = vld [vmem:[%s625] sm:$0xf]
        %v627 = vld [vmem:[#allocation2] sm:$0xff]
        %v628 = vld [vmem:[#allocation2 + $0x8] sm:$0xff]
        %v629 = vld [vmem:[#allocation2 + $0x10] sm:$0xff]
        %v630 = vld [vmem:[#allocation2 + $0x18] sm:$0xff]
        %v631 = vld [vmem:[#allocation2 + $0x20] sm:$0xff]
        %v632 = vld [vmem:[#allocation2 + $0x28] sm:$0xff]
        %v633 = vld [vmem:[#allocation2 + $0x30] sm:$0xff]
        %v634 = vld [vmem:[#allocation2 + $0x38] sm:$0xff]
        %v635 = vld [vmem:[#allocation2 + $0x40] sm:$0xff]
        %v636 = vld [vmem:[#allocation2 + $0x48] sm:$0xff]
        %v637 = vld [vmem:[#allocation2 + $0x50] sm:$0xff]
        %v638 = vld [vmem:[#allocation2 + $0x58] sm:$0xff]
        %v639 = vld [vmem:[#allocation2 + $0x60] sm:$0xff]
        %v640 = vld [vmem:[#allocation2 + $0x68] sm:$0xff]
        %v641 = vld [vmem:[#allocation2 + $0x70] sm:$0xff]
        %v642 = vld [vmem:[#allocation2 + $0x78] sm:$0xff]
        %v643 = vld [vmem:[#allocation2 + $0x80] sm:$0xff]
        %v644 = vld [vmem:[#allocation2 + $0x88] sm:$0xff]
        %v645 = vld [vmem:[#allocation2 + $0x90] sm:$0xff]
        %v646 = vld [vmem:[#allocation2 + $0x98] sm:$0xff]
        %v647 = vld [vmem:[#allocation2 + $0xa0] sm:$0xff]
        %v648 = vld [vmem:[#allocation2 + $0xa8] sm:$0xff]
        %v649 = vld [vmem:[#allocation2 + $0xb0] sm:$0xff]
        %v650 = vld [vmem:[#allocation2 + $0xb8] sm:$0xff]
        %v651 = vld [vmem:[#allocation2 + $0xc0] sm:$0xff]
        %v652 = vld [vmem:[#allocation2 + $0xc8] sm:$0xff]
        %v653 = vld [vmem:[#allocation2 + $0xd0] sm:$0xff]
        %v654 = vld [vmem:[#allocation2 + $0xd8] sm:$0xff]
        %v655 = vld [vmem:[#allocation2 + $0xe0] sm:$0xff]
        %v656 = vld [vmem:[#allocation2 + $0xe8] sm:$0xff]
        %v657 = vld [vmem:[#allocation2 + $0xf0] sm:$0xff]
        %v658 = vld [vmem:[#allocation2 + $0xf8] sm:$0xff]
        %659 = vmatprep.subr.bf16.mxu0 %v628
        %660 = vmatpush1.bf16.msra.mxu0 %v627
        %661 = vmatprep.subr.bf16.mxu0 %v632
        %662 = vmatpush1.bf16.msra.mxu0 %v631
        %663 = vmatprep.subr.bf16.mxu0 %v636
        %664 = vmatpush1.bf16.msra.mxu0 %v635
        %665 = vmatprep.subr.bf16.mxu0 %v640
        %666 = vmatpush1.bf16.msra.mxu0 %v639
        %667 = vmatprep.subr.bf16.mxu0 %v644
        %668 = vmatpush1.bf16.msra.mxu0 %v643
        %669 = vmatprep.subr.bf16.mxu0 %v648
        %670 = vmatpush1.bf16.msra.mxu0 %v647
        %671 = vmatprep.subr.bf16.mxu0 %v652
        %672 = vmatpush1.bf16.msra.mxu0 %v651
        %673 = vmatprep.subr.bf16.mxu0 %v656
        %674 = vmatpush1.bf16.msra.mxu0 %v655
        %675 = vmatprep.subr.bf16.mxu0 0
        %676 = vmatpush1.bf16.msra.mxu0 0
        %677 = vmatprep.subr.bf16.mxu0 0
        %678 = vmatpush1.bf16.msra.mxu0 0
        %679 = vmatprep.subr.bf16.mxu0 0
        %680 = vmatpush1.bf16.msra.mxu0 0
        %681 = vmatprep.subr.bf16.mxu0 0
        %682 = vmatpush1.bf16.msra.mxu0 0
        %683 = vmatprep.subr.bf16.mxu0 0
        %684 = vmatpush1.bf16.msra.mxu0 0
        %685 = vmatprep.subr.bf16.mxu0 0
        %686 = vmatpush1.bf16.msra.mxu0 0
        %687 = vmatprep.subr.bf16.mxu0 0
        %688 = vmatpush1.bf16.msra.mxu0 0
        %689 = vmatprep.subr.bf16.mxu0 0
        %690 = vmatpush1.bf16.msra.mxu0 0
        %691 = vmatprep.mubr.bf16.mxu0 0
        %692 = vmatmul.mubr.bf16.gmra.mrb[0].mxu0 %v626
        %v693 = vpop.f32.mrb[0].mxu0
        %v694 = vadd.f32 %v280, %v693
        %v695 = vpop.f32.mrb[0].mxu0
        %v696 = vadd.f32 %v284, %v695
        %v697 = vpop.f32.mrb[0].mxu0
        %v698 = vpop.f32.mrb[0].mxu0
        %699 = vdwg.mxu0
        %700 = vmatprep.subr.bf16.mxu0 %v630
        %701 = vmatpush1.bf16.msra.mxu0 %v629
        %702 = vmatprep.subr.bf16.mxu0 %v634
        %703 = vmatpush1.bf16.msra.mxu0 %v633
        %704 = vmatprep.subr.bf16.mxu0 %v638
        %705 = vmatpush1.bf16.msra.mxu0 %v637
        %706 = vmatprep.subr.bf16.mxu0 %v642
        %707 = vmatpush1.bf16.msra.mxu0 %v641
        %708 = vmatprep.subr.bf16.mxu0 %v646
        %709 = vmatpush1.bf16.msra.mxu0 %v645
        %710 = vmatprep.subr.bf16.mxu0 %v650
        %711 = vmatpush1.bf16.msra.mxu0 %v649
        %712 = vmatprep.subr.bf16.mxu0 %v654
        %713 = vmatpush1.bf16.msra.mxu0 %v653
        %714 = vmatprep.subr.bf16.mxu0 %v658
        %715 = vmatpush1.bf16.msra.mxu0 %v657
        %716 = vmatprep.subr.bf16.mxu0 0
        %717 = vmatpush1.bf16.msra.mxu0 0
        %718 = vmatprep.subr.bf16.mxu0 0
        %719 = vmatpush1.bf16.msra.mxu0 0
        %720 = vmatprep.subr.bf16.mxu0 0
        %721 = vmatpush1.bf16.msra.mxu0 0
        %722 = vmatprep.subr.bf16.mxu0 0
        %723 = vmatpush1.bf16.msra.mxu0 0
        %724 = vmatprep.subr.bf16.mxu0 0
        %725 = vmatpush1.bf16.msra.mxu0 0
        %726 = vmatprep.subr.bf16.mxu0 0
        %727 = vmatpush1.bf16.msra.mxu0 0
        %728 = vmatprep.subr.bf16.mxu0 0
        %729 = vmatpush1.bf16.msra.mxu0 0
        %730 = vmatprep.subr.bf16.mxu0 0
        %731 = vmatpush1.bf16.msra.mxu0 0
        %732 = vmatprep.mubr.bf16.mxu0 0
        %733 = vmatmul.mubr.bf16.gmra.mrb[0].mxu0 %v626
        %v734 = vpop.f32.mrb[0].mxu0
        %v735 = vadd.f32 %v288, %v734
        %v736 = vpop.f32.mrb[0].mxu0
        %v737 = vadd.f32 %v292, %v736
        %v738 = vpop.f32.mrb[0].mxu0
        %v739 = vpop.f32.mrb[0].mxu0
        %740 = vdwg.mxu0
        %s741 = scalar_lea.vmem [#allocation4], 96
        %742 = vst [vmem:[%s741] sm:$0xff] %v694
        %743 = vst [vmem:[%s741 + $0x8] sm:$0xff] %v696
        %744 = vst [vmem:[%s741 + $0x10] sm:$0xff] %v735
        %745 = vst [vmem:[%s741 + $0x18] sm:$0xff] %v737
        %s746 = scalar_lea.vmem %s168, 16 [#allocation7]
        %v747 = vld [vmem:[%s746] sm:$0xf]
        %v748 = vld [vmem:[#allocation2] sm:$0xff]
        %v749 = vld [vmem:[#allocation2 + $0x8] sm:$0xff]
        %v750 = vld [vmem:[#allocation2 + $0x10] sm:$0xff]
        %v751 = vld [vmem:[#allocation2 + $0x18] sm:$0xff]
        %v752 = vld [vmem:[#allocation2 + $0x20] sm:$0xff]
        %v753 = vld [vmem:[#allocation2 + $0x28] sm:$0xff]
        %v754 = vld [vmem:[#allocation2 + $0x30] sm:$0xff]
        %v755 = vld [vmem:[#allocation2 + $0x38] sm:$0xff]
        %v756 = vld [vmem:[#allocation2 + $0x40] sm:$0xff]
        %v757 = vld [vmem:[#allocation2 + $0x48] sm:$0xff]
        %v758 = vld [vmem:[#allocation2 + $0x50] sm:$0xff]
        %v759 = vld [vmem:[#allocation2 + $0x58] sm:$0xff]
        %v760 = vld [vmem:[#allocation2 + $0x60] sm:$0xff]
        %v761 = vld [vmem:[#allocation2 + $0x68] sm:$0xff]
        %v762 = vld [vmem:[#allocation2 + $0x70] sm:$0xff]
        %v763 = vld [vmem:[#allocation2 + $0x78] sm:$0xff]
        %v764 = vld [vmem:[#allocation2 + $0x80] sm:$0xff]
        %v765 = vld [vmem:[#allocation2 + $0x88] sm:$0xff]
        %v766 = vld [vmem:[#allocation2 + $0x90] sm:$0xff]
        %v767 = vld [vmem:[#allocation2 + $0x98] sm:$0xff]
        %v768 = vld [vmem:[#allocation2 + $0xa0] sm:$0xff]
        %v769 = vld [vmem:[#allocation2 + $0xa8] sm:$0xff]
        %v770 = vld [vmem:[#allocation2 + $0xb0] sm:$0xff]
        %v771 = vld [vmem:[#allocation2 + $0xb8] sm:$0xff]
        %v772 = vld [vmem:[#allocation2 + $0xc0] sm:$0xff]
        %v773 = vld [vmem:[#allocation2 + $0xc8] sm:$0xff]
        %v774 = vld [vmem:[#allocation2 + $0xd0] sm:$0xff]
        %v775 = vld [vmem:[#allocation2 + $0xd8] sm:$0xff]
        %v776 = vld [vmem:[#allocation2 + $0xe0] sm:$0xff]
        %v777 = vld [vmem:[#allocation2 + $0xe8] sm:$0xff]
        %v778 = vld [vmem:[#allocation2 + $0xf0] sm:$0xff]
        %v779 = vld [vmem:[#allocation2 + $0xf8] sm:$0xff]
        %780 = vmatprep.subr.bf16.mxu0 %v749
        %781 = vmatpush1.bf16.msra.mxu0 %v748
        %782 = vmatprep.subr.bf16.mxu0 %v753
        %783 = vmatpush1.bf16.msra.mxu0 %v752
        %784 = vmatprep.subr.bf16.mxu0 %v757
        %785 = vmatpush1.bf16.msra.mxu0 %v756
        %786 = vmatprep.subr.bf16.mxu0 %v761
        %787 = vmatpush1.bf16.msra.mxu0 %v760
        %788 = vmatprep.subr.bf16.mxu0 %v765
        %789 = vmatpush1.bf16.msra.mxu0 %v764
        %790 = vmatprep.subr.bf16.mxu0 %v769
        %791 = vmatpush1.bf16.msra.mxu0 %v768
        %792 = vmatprep.subr.bf16.mxu0 %v773
        %793 = vmatpush1.bf16.msra.mxu0 %v772
        %794 = vmatprep.subr.bf16.mxu0 %v777
        %795 = vmatpush1.bf16.msra.mxu0 %v776
        %796 = vmatprep.subr.bf16.mxu0 0
        %797 = vmatpush1.bf16.msra.mxu0 0
        %798 = vmatprep.subr.bf16.mxu0 0
        %799 = vmatpush1.bf16.msra.mxu0 0
        %800 = vmatprep.subr.bf16.mxu0 0
        %801 = vmatpush1.bf16.msra.mxu0 0
        %802 = vmatprep.subr.bf16.mxu0 0
        %803 = vmatpush1.bf16.msra.mxu0 0
        %804 = vmatprep.subr.bf16.mxu0 0
        %805 = vmatpush1.bf16.msra.mxu0 0
        %806 = vmatprep.subr.bf16.mxu0 0
        %807 = vmatpush1.bf16.msra.mxu0 0
        %808 = vmatprep.subr.bf16.mxu0 0
        %809 = vmatpush1.bf16.msra.mxu0 0
        %810 = vmatprep.subr.bf16.mxu0 0
        %811 = vmatpush1.bf16.msra.mxu0 0
        %812 = vmatprep.mubr.bf16.mxu0 0
        %813 = vmatmul.mubr.bf16.gmra.mrb[0].mxu0 %v747
        %v814 = vpop.f32.mrb[0].mxu0
        %v815 = vadd.f32 %v280, %v814
        %v816 = vpop.f32.mrb[0].mxu0
        %v817 = vadd.f32 %v284, %v816
        %v818 = vpop.f32.mrb[0].mxu0
        %v819 = vpop.f32.mrb[0].mxu0
        %820 = vdwg.mxu0
        %821 = vmatprep.subr.bf16.mxu0 %v751
        %822 = vmatpush1.bf16.msra.mxu0 %v750
        %823 = vmatprep.subr.bf16.mxu0 %v755
        %824 = vmatpush1.bf16.msra.mxu0 %v754
        %825 = vmatprep.subr.bf16.mxu0 %v759
        %826 = vmatpush1.bf16.msra.mxu0 %v758
        %827 = vmatprep.subr.bf16.mxu0 %v763
        %828 = vmatpush1.bf16.msra.mxu0 %v762
        %829 = vmatprep.subr.bf16.mxu0 %v767
        %830 = vmatpush1.bf16.msra.mxu0 %v766
        %831 = vmatprep.subr.bf16.mxu0 %v771
        %832 = vmatpush1.bf16.msra.mxu0 %v770
        %833 = vmatprep.subr.bf16.mxu0 %v775
        %834 = vmatpush1.bf16.msra.mxu0 %v774
        %835 = vmatprep.subr.bf16.mxu0 %v779
        %836 = vmatpush1.bf16.msra.mxu0 %v778
        %837 = vmatprep.subr.bf16.mxu0 0
        %838 = vmatpush1.bf16.msra.mxu0 0
        %839 = vmatprep.subr.bf16.mxu0 0
        %840 = vmatpush1.bf16.msra.mxu0 0
        %841 = vmatprep.subr.bf16.mxu0 0
        %842 = vmatpush1.bf16.msra.mxu0 0
        %843 = vmatprep.subr.bf16.mxu0 0
        %844 = vmatpush1.bf16.msra.mxu0 0
        %845 = vmatprep.subr.bf16.mxu0 0
        %846 = vmatpush1.bf16.msra.mxu0 0
        %847 = vmatprep.subr.bf16.mxu0 0
        %848 = vmatpush1.bf16.msra.mxu0 0
        %849 = vmatprep.subr.bf16.mxu0 0
        %850 = vmatpush1.bf16.msra.mxu0 0
        %851 = vmatprep.subr.bf16.mxu0 0
        %852 = vmatpush1.bf16.msra.mxu0 0
        %853 = vmatprep.mubr.bf16.mxu0 0
        %854 = vmatmul.mubr.bf16.gmra.mrb[0].mxu0 %v747
        %v855 = vpop.f32.mrb[0].mxu0
        %v856 = vadd.f32 %v288, %v855
        %v857 = vpop.f32.mrb[0].mxu0
        %v858 = vadd.f32 %v292, %v857
        %v859 = vpop.f32.mrb[0].mxu0
        %v860 = vpop.f32.mrb[0].mxu0
        %861 = vdwg.mxu0
        %s862 = scalar_lea.vmem [#allocation4], 128
        %863 = vst [vmem:[%s862] sm:$0xff] %v815
        %864 = vst [vmem:[%s862 + $0x8] sm:$0xff] %v817
        %865 = vst [vmem:[%s862 + $0x10] sm:$0xff] %v856
        %866 = vst [vmem:[%s862 + $0x18] sm:$0xff] %v858
        %s867 = scalar_lea.vmem %s168, 20 [#allocation7]
        %v868 = vld [vmem:[%s867] sm:$0xf]
        %v869 = vld [vmem:[#allocation2] sm:$0xff]
        %v870 = vld [vmem:[#allocation2 + $0x8] sm:$0xff]
        %v871 = vld [vmem:[#allocation2 + $0x10] sm:$0xff]
        %v872 = vld [vmem:[#allocation2 + $0x18] sm:$0xff]
        %v873 = vld [vmem:[#allocation2 + $0x20] sm:$0xff]
        %v874 = vld [vmem:[#allocation2 + $0x28] sm:$0xff]
        %v875 = vld [vmem:[#allocation2 + $0x30] sm:$0xff]
        %v876 = vld [vmem:[#allocation2 + $0x38] sm:$0xff]
        %v877 = vld [vmem:[#allocation2 + $0x40] sm:$0xff]
        %v878 = vld [vmem:[#allocation2 + $0x48] sm:$0xff]
        %v879 = vld [vmem:[#allocation2 + $0x50] sm:$0xff]
        %v880 = vld [vmem:[#allocation2 + $0x58] sm:$0xff]
        %v881 = vld [vmem:[#allocation2 + $0x60] sm:$0xff]
        %v882 = vld [vmem:[#allocation2 + $0x68] sm:$0xff]
        %v883 = vld [vmem:[#allocation2 + $0x70] sm:$0xff]
        %v884 = vld [vmem:[#allocation2 + $0x78] sm:$0xff]
        %v885 = vld [vmem:[#allocation2 + $0x80] sm:$0xff]
        %v886 = vld [vmem:[#allocation2 + $0x88] sm:$0xff]
        %v887 = vld [vmem:[#allocation2 + $0x90] sm:$0xff]
        %v888 = vld [vmem:[#allocation2 + $0x98] sm:$0xff]
        %v889 = vld [vmem:[#allocation2 + $0xa0] sm:$0xff]
        %v890 = vld [vmem:[#allocation2 + $0xa8] sm:$0xff]
        %v891 = vld [vmem:[#allocation2 + $0xb0] sm:$0xff]
        %v892 = vld [vmem:[#allocation2 + $0xb8] sm:$0xff]
        %v893 = vld [vmem:[#allocation2 + $0xc0] sm:$0xff]
        %v894 = vld [vmem:[#allocation2 + $0xc8] sm:$0xff]
        %v895 = vld [vmem:[#allocation2 + $0xd0] sm:$0xff]
        %v896 = vld [vmem:[#allocation2 + $0xd8] sm:$0xff]
        %v897 = vld [vmem:[#allocation2 + $0xe0] sm:$0xff]
        %v898 = vld [vmem:[#allocation2 + $0xe8] sm:$0xff]
        %v899 = vld [vmem:[#allocation2 + $0xf0] sm:$0xff]
        %v900 = vld [vmem:[#allocation2 + $0xf8] sm:$0xff]
        %901 = vmatprep.subr.bf16.mxu0 %v870
        %902 = vmatpush1.bf16.msra.mxu0 %v869
        %903 = vmatprep.subr.bf16.mxu0 %v874
        %904 = vmatpush1.bf16.msra.mxu0 %v873
        %905 = vmatprep.subr.bf16.mxu0 %v878
        %906 = vmatpush1.bf16.msra.mxu0 %v877
        %907 = vmatprep.subr.bf16.mxu0 %v882
        %908 = vmatpush1.bf16.msra.mxu0 %v881
        %909 = vmatprep.subr.bf16.mxu0 %v886
        %910 = vmatpush1.bf16.msra.mxu0 %v885
        %911 = vmatprep.subr.bf16.mxu0 %v890
        %912 = vmatpush1.bf16.msra.mxu0 %v889
        %913 = vmatprep.subr.bf16.mxu0 %v894
        %914 = vmatpush1.bf16.msra.mxu0 %v893
        %915 = vmatprep.subr.bf16.mxu0 %v898
        %916 = vmatpush1.bf16.msra.mxu0 %v897
        %917 = vmatprep.subr.bf16.mxu0 0
        %918 = vmatpush1.bf16.msra.mxu0 0
        %919 = vmatprep.subr.bf16.mxu0 0
        %920 = vmatpush1.bf16.msra.mxu0 0
        %921 = vmatprep.subr.bf16.mxu0 0
        %922 = vmatpush1.bf16.msra.mxu0 0
        %923 = vmatprep.subr.bf16.mxu0 0
        %924 = vmatpush1.bf16.msra.mxu0 0
        %925 = vmatprep.subr.bf16.mxu0 0
        %926 = vmatpush1.bf16.msra.mxu0 0
        %927 = vmatprep.subr.bf16.mxu0 0
        %928 = vmatpush1.bf16.msra.mxu0 0
        %929 = vmatprep.subr.bf16.mxu0 0
        %930 = vmatpush1.bf16.msra.mxu0 0
        %931 = vmatprep.subr.bf16.mxu0 0
        %932 = vmatpush1.bf16.msra.mxu0 0
        %933 = vmatprep.mubr.bf16.mxu0 0
        %934 = vmatmul.mubr.bf16.gmra.mrb[0].mxu0 %v868
        %v935 = vpop.f32.mrb[0].mxu0
        %v936 = vadd.f32 %v280, %v935
        %v937 = vpop.f32.mrb[0].mxu0
        %v938 = vadd.f32 %v284, %v937
        %v939 = vpop.f32.mrb[0].mxu0
        %v940 = vpop.f32.mrb[0].mxu0
        %941 = vdwg.mxu0
        %942 = vmatprep.subr.bf16.mxu0 %v872
        %943 = vmatpush1.bf16.msra.mxu0 %v871
        %944 = vmatprep.subr.bf16.mxu0 %v876
        %945 = vmatpush1.bf16.msra.mxu0 %v875
        %946 = vmatprep.subr.bf16.mxu0 %v880
        %947 = vmatpush1.bf16.msra.mxu0 %v879
        %948 = vmatprep.subr.bf16.mxu0 %v884
        %949 = vmatpush1.bf16.msra.mxu0 %v883
        %950 = vmatprep.subr.bf16.mxu0 %v888
        %951 = vmatpush1.bf16.msra.mxu0 %v887
        %952 = vmatprep.subr.bf16.mxu0 %v892
        %953 = vmatpush1.bf16.msra.mxu0 %v891
        %954 = vmatprep.subr.bf16.mxu0 %v896
        %955 = vmatpush1.bf16.msra.mxu0 %v895
        %956 = vmatprep.subr.bf16.mxu0 %v900
        %957 = vmatpush1.bf16.msra.mxu0 %v899
        %958 = vmatprep.subr.bf16.mxu0 0
        %959 = vmatpush1.bf16.msra.mxu0 0
        %960 = vmatprep.subr.bf16.mxu0 0
        %961 = vmatpush1.bf16.msra.mxu0 0
        %962 = vmatprep.subr.bf16.mxu0 0
        %963 = vmatpush1.bf16.msra.mxu0 0
        %964 = vmatprep.subr.bf16.mxu0 0
        %965 = vmatpush1.bf16.msra.mxu0 0
        %966 = vmatprep.subr.bf16.mxu0 0
        %967 = vmatpush1.bf16.msra.mxu0 0
        %968 = vmatprep.subr.bf16.mxu0 0
        %969 = vmatpush1.bf16.msra.mxu0 0
        %970 = vmatprep.subr.bf16.mxu0 0
        %971 = vmatpush1.bf16.msra.mxu0 0
        %972 = vmatprep.subr.bf16.mxu0 0
        %973 = vmatpush1.bf16.msra.mxu0 0
        %974 = vmatprep.mubr.bf16.mxu0 0
        %975 = vmatmul.mubr.bf16.gmra.mrb[0].mxu0 %v868
        %v976 = vpop.f32.mrb[0].mxu0
        %v977 = vadd.f32 %v288, %v976
        %v978 = vpop.f32.mrb[0].mxu0
        %v979 = vadd.f32 %v292, %v978
        %v980 = vpop.f32.mrb[0].mxu0
        %v981 = vpop.f32.mrb[0].mxu0
        %982 = vdwg.mxu0
        %s983 = scalar_lea.vmem [#allocation4], 160
        %984 = vst [vmem:[%s983] sm:$0xff] %v936
        %985 = vst [vmem:[%s983 + $0x8] sm:$0xff] %v938
        %986 = vst [vmem:[%s983 + $0x10] sm:$0xff] %v977
        %987 = vst [vmem:[%s983 + $0x18] sm:$0xff] %v979
        %s988 = scalar_lea.vmem %s168, 24 [#allocation7]
        %v989 = vld [vmem:[%s988] sm:$0xf]
        %v990 = vld [vmem:[#allocation2] sm:$0xff]
        %v991 = vld [vmem:[#allocation2 + $0x8] sm:$0xff]
        %v992 = vld [vmem:[#allocation2 + $0x10] sm:$0xff]
        %v993 = vld [vmem:[#allocation2 + $0x18] sm:$0xff]
        %v994 = vld [vmem:[#allocation2 + $0x20] sm:$0xff]
        %v995 = vld [vmem:[#allocation2 + $0x28] sm:$0xff]
        %v996 = vld [vmem:[#allocation2 + $0x30] sm:$0xff]
        %v997 = vld [vmem:[#allocation2 + $0x38] sm:$0xff]
        %v998 = vld [vmem:[#allocation2 + $0x40] sm:$0xff]
        %v999 = vld [vmem:[#allocation2 + $0x48] sm:$0xff]
        %v1000 = vld [vmem:[#allocation2 + $0x50] sm:$0xff]
        %v1001 = vld [vmem:[#allocation2 + $0x58] sm:$0xff]
        %v1002 = vld [vmem:[#allocation2 + $0x60] sm:$0xff]
        %v1003 = vld [vmem:[#allocation2 + $0x68] sm:$0xff]
        %v1004 = vld [vmem:[#allocation2 + $0x70] sm:$0xff]
        %v1005 = vld [vmem:[#allocation2 + $0x78] sm:$0xff]
        %v1006 = vld [vmem:[#allocation2 + $0x80] sm:$0xff]
        %v1007 = vld [vmem:[#allocation2 + $0x88] sm:$0xff]
        %v1008 = vld [vmem:[#allocation2 + $0x90] sm:$0xff]
        %v1009 = vld [vmem:[#allocation2 + $0x98] sm:$0xff]
        %v1010 = vld [vmem:[#allocation2 + $0xa0] sm:$0xff]
        %v1011 = vld [vmem:[#allocation2 + $0xa8] sm:$0xff]
        %v1012 = vld [vmem:[#allocation2 + $0xb0] sm:$0xff]
        %v1013 = vld [vmem:[#allocation2 + $0xb8] sm:$0xff]
        %v1014 = vld [vmem:[#allocation2 + $0xc0] sm:$0xff]
        %v1015 = vld [vmem:[#allocation2 + $0xc8] sm:$0xff]
        %v1016 = vld [vmem:[#allocation2 + $0xd0] sm:$0xff]
        %v1017 = vld [vmem:[#allocation2 + $0xd8] sm:$0xff]
        %v1018 = vld [vmem:[#allocation2 + $0xe0] sm:$0xff]
        %v1019 = vld [vmem:[#allocation2 + $0xe8] sm:$0xff]
        %v1020 = vld [vmem:[#allocation2 + $0xf0] sm:$0xff]
        %v1021 = vld [vmem:[#allocation2 + $0xf8] sm:$0xff]
        %1022 = vmatprep.subr.bf16.mxu0 %v991
        %1023 = vmatpush1.bf16.msra.mxu0 %v990
        %1024 = vmatprep.subr.bf16.mxu0 %v995
        %1025 = vmatpush1.bf16.msra.mxu0 %v994
        %1026 = vmatprep.subr.bf16.mxu0 %v999
        %1027 = vmatpush1.bf16.msra.mxu0 %v998
        %1028 = vmatprep.subr.bf16.mxu0 %v1003
        %1029 = vmatpush1.bf16.msra.mxu0 %v1002
        %1030 = vmatprep.subr.bf16.mxu0 %v1007
        %1031 = vmatpush1.bf16.msra.mxu0 %v1006
        %1032 = vmatprep.subr.bf16.mxu0 %v1011
        %1033 = vmatpush1.bf16.msra.mxu0 %v1010
        %1034 = vmatprep.subr.bf16.mxu0 %v1015
        %1035 = vmatpush1.bf16.msra.mxu0 %v1014
        %1036 = vmatprep.subr.bf16.mxu0 %v1019
        %1037 = vmatpush1.bf16.msra.mxu0 %v1018
        %1038 = vmatprep.subr.bf16.mxu0 0
        %1039 = vmatpush1.bf16.msra.mxu0 0
        %1040 = vmatprep.subr.bf16.mxu0 0
        %1041 = vmatpush1.bf16.msra.mxu0 0
        %1042 = vmatprep.subr.bf16.mxu0 0
        %1043 = vmatpush1.bf16.msra.mxu0 0
        %1044 = vmatprep.subr.bf16.mxu0 0
        %1045 = vmatpush1.bf16.msra.mxu0 0
        %1046 = vmatprep.subr.bf16.mxu0 0
        %1047 = vmatpush1.bf16.msra.mxu0 0
        %1048 = vmatprep.subr.bf16.mxu0 0
        %1049 = vmatpush1.bf16.msra.mxu0 0
        %1050 = vmatprep.subr.bf16.mxu0 0
        %1051 = vmatpush1.bf16.msra.mxu0 0
        %1052 = vmatprep.subr.bf16.mxu0 0
        %1053 = vmatpush1.bf16.msra.mxu0 0
        %1054 = vmatprep.mubr.bf16.mxu0 0
        %1055 = vmatmul.mubr.bf16.gmra.mrb[0].mxu0 %v989
        %v1056 = vpop.f32.mrb[0].mxu0
        %v1057 = vadd.f32 %v280, %v1056
        %v1058 = vpop.f32.mrb[0].mxu0
        %v1059 = vadd.f32 %v284, %v1058
        %v1060 = vpop.f32.mrb[0].mxu0
        %v1061 = vpop.f32.mrb[0].mxu0
        %1062 = vdwg.mxu0
        %1063 = vmatprep.subr.bf16.mxu0 %v993
        %1064 = vmatpush1.bf16.msra.mxu0 %v992
        %1065 = vmatprep.subr.bf16.mxu0 %v997
        %1066 = vmatpush1.bf16.msra.mxu0 %v996
        %1067 = vmatprep.subr.bf16.mxu0 %v1001
        %1068 = vmatpush1.bf16.msra.mxu0 %v1000
        %1069 = vmatprep.subr.bf16.mxu0 %v1005
        %1070 = vmatpush1.bf16.msra.mxu0 %v1004
        %1071 = vmatprep.subr.bf16.mxu0 %v1009
        %1072 = vmatpush1.bf16.msra.mxu0 %v1008
        %1073 = vmatprep.subr.bf16.mxu0 %v1013
        %1074 = vmatpush1.bf16.msra.mxu0 %v1012
        %1075 = vmatprep.subr.bf16.mxu0 %v1017
        %1076 = vmatpush1.bf16.msra.mxu0 %v1016
        %1077 = vmatprep.subr.bf16.mxu0 %v1021
        %1078 = vmatpush1.bf16.msra.mxu0 %v1020
        %1079 = vmatprep.subr.bf16.mxu0 0
        %1080 = vmatpush1.bf16.msra.mxu0 0
        %1081 = vmatprep.subr.bf16.mxu0 0
        %1082 = vmatpush1.bf16.msra.mxu0 0
        %1083 = vmatprep.subr.bf16.mxu0 0
        %1084 = vmatpush1.bf16.msra.mxu0 0
        %1085 = vmatprep.subr.bf16.mxu0 0
        %1086 = vmatpush1.bf16.msra.mxu0 0
        %1087 = vmatprep.subr.bf16.mxu0 0
        %1088 = vmatpush1.bf16.msra.mxu0 0
        %1089 = vmatprep.subr.bf16.mxu0 0
        %1090 = vmatpush1.bf16.msra.mxu0 0
        %1091 = vmatprep.subr.bf16.mxu0 0
        %1092 = vmatpush1.bf16.msra.mxu0 0
        %1093 = vmatprep.subr.bf16.mxu0 0
        %1094 = vmatpush1.bf16.msra.mxu0 0
        %1095 = vmatprep.mubr.bf16.mxu0 0
        %1096 = vmatmul.mubr.bf16.gmra.mrb[0].mxu0 %v989
        %v1097 = vpop.f32.mrb[0].mxu0
        %v1098 = vadd.f32 %v288, %v1097
        %v1099 = vpop.f32.mrb[0].mxu0
        %v1100 = vadd.f32 %v292, %v1099
        %v1101 = vpop.f32.mrb[0].mxu0
        %v1102 = vpop.f32.mrb[0].mxu0
        %1103 = vdwg.mxu0
        %s1104 = scalar_lea.vmem [#allocation4], 192
        %1105 = vst [vmem:[%s1104] sm:$0xff] %v1057
        %1106 = vst [vmem:[%s1104 + $0x8] sm:$0xff] %v1059
        %1107 = vst [vmem:[%s1104 + $0x10] sm:$0xff] %v1098
        %1108 = vst [vmem:[%s1104 + $0x18] sm:$0xff] %v1100
        %s1109 = scalar_lea.vmem %s168, 28 [#allocation7]
        %v1110 = vld [vmem:[%s1109] sm:$0xf]
        %v1111 = vld [vmem:[#allocation2] sm:$0xff]
        %v1112 = vld [vmem:[#allocation2 + $0x8] sm:$0xff]
        %v1113 = vld [vmem:[#allocation2 + $0x10] sm:$0xff]
        %v1114 = vld [vmem:[#allocation2 + $0x18] sm:$0xff]
        %v1115 = vld [vmem:[#allocation2 + $0x20] sm:$0xff]
        %v1116 = vld [vmem:[#allocation2 + $0x28] sm:$0xff]
        %v1117 = vld [vmem:[#allocation2 + $0x30] sm:$0xff]
        %v1118 = vld [vmem:[#allocation2 + $0x38] sm:$0xff]
        %v1119 = vld [vmem:[#allocation2 + $0x40] sm:$0xff]
        %v1120 = vld [vmem:[#allocation2 + $0x48] sm:$0xff]
        %v1121 = vld [vmem:[#allocation2 + $0x50] sm:$0xff]
        %v1122 = vld [vmem:[#allocation2 + $0x58] sm:$0xff]
        %v1123 = vld [vmem:[#allocation2 + $0x60] sm:$0xff]
        %v1124 = vld [vmem:[#allocation2 + $0x68] sm:$0xff]
        %v1125 = vld [vmem:[#allocation2 + $0x70] sm:$0xff]
        %v1126 = vld [vmem:[#allocation2 + $0x78] sm:$0xff]
        %v1127 = vld [vmem:[#allocation2 + $0x80] sm:$0xff]
        %v1128 = vld [vmem:[#allocation2 + $0x88] sm:$0xff]
        %v1129 = vld [vmem:[#allocation2 + $0x90] sm:$0xff]
        %v1130 = vld [vmem:[#allocation2 + $0x98] sm:$0xff]
        %v1131 = vld [vmem:[#allocation2 + $0xa0] sm:$0xff]
        %v1132 = vld [vmem:[#allocation2 + $0xa8] sm:$0xff]
        %v1133 = vld [vmem:[#allocation2 + $0xb0] sm:$0xff]
        %v1134 = vld [vmem:[#allocation2 + $0xb8] sm:$0xff]
        %v1135 = vld [vmem:[#allocation2 + $0xc0] sm:$0xff]
        %v1136 = vld [vmem:[#allocation2 + $0xc8] sm:$0xff]
        %v1137 = vld [vmem:[#allocation2 + $0xd0] sm:$0xff]
        %v1138 = vld [vmem:[#allocation2 + $0xd8] sm:$0xff]
        %v1139 = vld [vmem:[#allocation2 + $0xe0] sm:$0xff]
        %v1140 = vld [vmem:[#allocation2 + $0xe8] sm:$0xff]
        %v1141 = vld [vmem:[#allocation2 + $0xf0] sm:$0xff]
        %v1142 = vld [vmem:[#allocation2 + $0xf8] sm:$0xff]
        %1143 = vmatprep.subr.bf16.mxu0 %v1112
        %1144 = vmatpush1.bf16.msra.mxu0 %v1111
        %1145 = vmatprep.subr.bf16.mxu0 %v1116
        %1146 = vmatpush1.bf16.msra.mxu0 %v1115
        %1147 = vmatprep.subr.bf16.mxu0 %v1120
        %1148 = vmatpush1.bf16.msra.mxu0 %v1119
        %1149 = vmatprep.subr.bf16.mxu0 %v1124
        %1150 = vmatpush1.bf16.msra.mxu0 %v1123
        %1151 = vmatprep.subr.bf16.mxu0 %v1128
        %1152 = vmatpush1.bf16.msra.mxu0 %v1127
        %1153 = vmatprep.subr.bf16.mxu0 %v1132
        %1154 = vmatpush1.bf16.msra.mxu0 %v1131
        %1155 = vmatprep.subr.bf16.mxu0 %v1136
        %1156 = vmatpush1.bf16.msra.mxu0 %v1135
        %1157 = vmatprep.subr.bf16.mxu0 %v1140
        %1158 = vmatpush1.bf16.msra.mxu0 %v1139
        %1159 = vmatprep.subr.bf16.mxu0 0
        %1160 = vmatpush1.bf16.msra.mxu0 0
        %1161 = vmatprep.subr.bf16.mxu0 0
        %1162 = vmatpush1.bf16.msra.mxu0 0
        %1163 = vmatprep.subr.bf16.mxu0 0
        %1164 = vmatpush1.bf16.msra.mxu0 0
        %1165 = vmatprep.subr.bf16.mxu0 0
        %1166 = vmatpush1.bf16.msra.mxu0 0
        %1167 = vmatprep.subr.bf16.mxu0 0
        %1168 = vmatpush1.bf16.msra.mxu0 0
        %1169 = vmatprep.subr.bf16.mxu0 0
        %1170 = vmatpush1.bf16.msra.mxu0 0
        %1171 = vmatprep.subr.bf16.mxu0 0
        %1172 = vmatpush1.bf16.msra.mxu0 0
        %1173 = vmatprep.subr.bf16.mxu0 0
        %1174 = vmatpush1.bf16.msra.mxu0 0
        %1175 = vmatprep.mubr.bf16.mxu0 0
        %1176 = vmatmul.mubr.bf16.gmra.mrb[0].mxu0 %v1110
        %v1177 = vpop.f32.mrb[0].mxu0
        %v1178 = vadd.f32 %v280, %v1177
        %v1179 = vpop.f32.mrb[0].mxu0
        %v1180 = vadd.f32 %v284, %v1179
        %v1181 = vpop.f32.mrb[0].mxu0
        %v1182 = vpop.f32.mrb[0].mxu0
        %1183 = vdwg.mxu0
        %1184 = vmatprep.subr.bf16.mxu0 %v1114
        %1185 = vmatpush1.bf16.msra.mxu0 %v1113
        %1186 = vmatprep.subr.bf16.mxu0 %v1118
        %1187 = vmatpush1.bf16.msra.mxu0 %v1117
        %1188 = vmatprep.subr.bf16.mxu0 %v1122
        %1189 = vmatpush1.bf16.msra.mxu0 %v1121
        %1190 = vmatprep.subr.bf16.mxu0 %v1126
        %1191 = vmatpush1.bf16.msra.mxu0 %v1125
        %1192 = vmatprep.subr.bf16.mxu0 %v1130
        %1193 = vmatpush1.bf16.msra.mxu0 %v1129
        %1194 = vmatprep.subr.bf16.mxu0 %v1134
        %1195 = vmatpush1.bf16.msra.mxu0 %v1133
        %1196 = vmatprep.subr.bf16.mxu0 %v1138
        %1197 = vmatpush1.bf16.msra.mxu0 %v1137
        %1198 = vmatprep.subr.bf16.mxu0 %v1142
        %1199 = vmatpush1.bf16.msra.mxu0 %v1141
        %1200 = vmatprep.subr.bf16.mxu0 0
        %1201 = vmatpush1.bf16.msra.mxu0 0
        %1202 = vmatprep.subr.bf16.mxu0 0
        %1203 = vmatpush1.bf16.msra.mxu0 0
        %1204 = vmatprep.subr.bf16.mxu0 0
        %1205 = vmatpush1.bf16.msra.mxu0 0
        %1206 = vmatprep.subr.bf16.mxu0 0
        %1207 = vmatpush1.bf16.msra.mxu0 0
        %1208 = vmatprep.subr.bf16.mxu0 0
        %1209 = vmatpush1.bf16.msra.mxu0 0
        %1210 = vmatprep.subr.bf16.mxu0 0
        %1211 = vmatpush1.bf16.msra.mxu0 0
        %1212 = vmatprep.subr.bf16.mxu0 0
        %1213 = vmatpush1.bf16.msra.mxu0 0
        %1214 = vmatprep.subr.bf16.mxu0 0
        %1215 = vmatpush1.bf16.msra.mxu0 0
        %1216 = vmatprep.mubr.bf16.mxu0 0
        %1217 = vmatmul.mubr.bf16.gmra.mrb[0].mxu0 %v1110
        %v1218 = vpop.f32.mrb[0].mxu0
        %v1219 = vadd.f32 %v288, %v1218
        %v1220 = vpop.f32.mrb[0].mxu0
        %v1221 = vadd.f32 %v292, %v1220
        %v1222 = vpop.f32.mrb[0].mxu0
        %v1223 = vpop.f32.mrb[0].mxu0
        %1224 = vdwg.mxu0
        %s1225 = scalar_lea.vmem [#allocation4], 224
        %1226 = vst [vmem:[%s1225] sm:$0xff] %v1178
        %1227 = vst [vmem:[%s1225 + $0x8] sm:$0xff] %v1180
        %1228 = vst [vmem:[%s1225 + $0x10] sm:$0xff] %v1219
        %1229 = vst [vmem:[%s1225 + $0x18] sm:$0xff] %v1221
        %v1230 = vld [vmem:[#allocation5] sm:$0xff]
        %v1231 = vld [vmem:[#allocation6] sm:$0xff]
        %v1232 = vpack.c.bf16 %v1230, %v1230
        %v1233 = vld [vmem:[#allocation4] sm:$0xff]
        %v1234 = vld [vmem:[#allocation4 + $0x8] sm:$0xff]
        %v1235 = vld [vmem:[#allocation4 + $0x10] sm:$0xff]
        %v1236 = vld [vmem:[#allocation4 + $0x18] sm:$0xff]
        %s1237 = scalar_lea.vmem [#allocation2], 256
        %v1238 = vld [vmem:[%s1237] sm:$0xff]
        %v1239 = vld [vmem:[%s1237 + $0x8] sm:$0xff]
        %v1240 = vld [vmem:[%s1237 + $0x10] sm:$0xff]
        %v1241 = vld [vmem:[%s1237 + $0x20] sm:$0xff]
        %v1242 = vld [vmem:[%s1237 + $0x28] sm:$0xff]
        %v1243 = vld [vmem:[%s1237 + $0x30] sm:$0xff]
        %v1244 = vld [vmem:[%s1237 + $0x40] sm:$0xff]
        %v1245 = vld [vmem:[%s1237 + $0x48] sm:$0xff]
        %v1246 = vld [vmem:[%s1237 + $0x50] sm:$0xff]
        %v1247 = vld [vmem:[%s1237 + $0x60] sm:$0xff]
        %v1248 = vld [vmem:[%s1237 + $0x68] sm:$0xff]
        %v1249 = vld [vmem:[%s1237 + $0x70] sm:$0xff]
        %v1250 = vld [vmem:[%s1237 + $0x80] sm:$0xff]
        %v1251 = vld [vmem:[%s1237 + $0x88] sm:$0xff]
        %v1252 = vld [vmem:[%s1237 + $0x90] sm:$0xff]
        %v1253 = vld [vmem:[%s1237 + $0xa0] sm:$0xff]
        %v1254 = vld [vmem:[%s1237 + $0xa8] sm:$0xff]
        %v1255 = vld [vmem:[%s1237 + $0xb0] sm:$0xff]
        %v1256 = vld [vmem:[%s1237 + $0xc0] sm:$0xff]
        %v1257 = vld [vmem:[%s1237 + $0xc8] sm:$0xff]
        %v1258 = vld [vmem:[%s1237 + $0xd0] sm:$0xff]
        %v1259 = vld [vmem:[%s1237 + $0xe0] sm:$0xff]
        %v1260 = vld [vmem:[%s1237 + $0xe8] sm:$0xff]
        %v1261 = vld [vmem:[%s1237 + $0xf0] sm:$0xff]
        %1262 = vmatprep.subr.bf16.mxu0 %v1239
        %1263 = vmatpush1.bf16.msra.mxu0 %v1238
        %1264 = vmatprep.subr.bf16.mxu0 %v1242
        %1265 = vmatpush1.bf16.msra.mxu0 %v1241
        %1266 = vmatprep.subr.bf16.mxu0 %v1245
        %1267 = vmatpush1.bf16.msra.mxu0 %v1244
        %1268 = vmatprep.subr.bf16.mxu0 %v1248
        %1269 = vmatpush1.bf16.msra.mxu0 %v1247
        %1270 = vmatprep.subr.bf16.mxu0 %v1251
        %1271 = vmatpush1.bf16.msra.mxu0 %v1250
        %1272 = vmatprep.subr.bf16.mxu0 %v1254
        %1273 = vmatpush1.bf16.msra.mxu0 %v1253
        %1274 = vmatprep.subr.bf16.mxu0 %v1257
        %1275 = vmatpush1.bf16.msra.mxu0 %v1256
        %1276 = vmatprep.subr.bf16.mxu0 %v1260
        %1277 = vmatpush1.bf16.msra.mxu0 %v1259
        %1278 = vmatprep.subr.bf16.mxu0 0
        %1279 = vmatpush1.bf16.msra.mxu0 0
        %1280 = vmatprep.subr.bf16.mxu0 0
        %1281 = vmatpush1.bf16.msra.mxu0 0
        %1282 = vmatprep.subr.bf16.mxu0 0
        %1283 = vmatpush1.bf16.msra.mxu0 0
        %1284 = vmatprep.subr.bf16.mxu0 0
        %1285 = vmatpush1.bf16.msra.mxu0 0
        %1286 = vmatprep.subr.bf16.mxu0 0
        %1287 = vmatpush1.bf16.msra.mxu0 0
        %1288 = vmatprep.subr.bf16.mxu0 0
        %1289 = vmatpush1.bf16.msra.mxu0 0
        %1290 = vmatprep.subr.bf16.mxu0 0
        %1291 = vmatpush1.bf16.msra.mxu0 0
        %1292 = vmatprep.subr.bf16.mxu0 0
        %1293 = vmatpush1.bf16.msra.mxu0 0
        %1294 = vmatprep.mubr.bf16.mxu0 0
        %1295 = vmatmul.mubr.bf16.gmra.mrb[0].mxu0 %v1232
        %v1296 = vpop.f32.mrb[0].mxu0
        %v1297 = vadd.f32 0.0, %v1296
        %v1298 = vpop.f32.mrb[0].mxu0
        %v1299 = vadd.f32 0.0, %v1298
        %v1300 = vpop.f32.mrb[0].mxu0
        %v1301 = vpop.f32.mrb[0].mxu0
        %1302 = vdwg.mxu0
        %1303 = vmatprep.subr.bf16.mxu0 0
        %1304 = vmatpush1.bf16.msra.mxu0 %v1240
        %1305 = vmatprep.subr.bf16.mxu0 0
        %1306 = vmatpush1.bf16.msra.mxu0 %v1243
        %1307 = vmatprep.subr.bf16.mxu0 0
        %1308 = vmatpush1.bf16.msra.mxu0 %v1246
        %1309 = vmatprep.subr.bf16.mxu0 0
        %1310 = vmatpush1.bf16.msra.mxu0 %v1249
        %1311 = vmatprep.subr.bf16.mxu0 0
        %1312 = vmatpush1.bf16.msra.mxu0 %v1252
        %1313 = vmatprep.subr.bf16.mxu0 0
        %1314 = vmatpush1.bf16.msra.mxu0 %v1255
        %1315 = vmatprep.subr.bf16.mxu0 0
        %1316 = vmatpush1.bf16.msra.mxu0 %v1258
        %1317 = vmatprep.subr.bf16.mxu0 0
        %1318 = vmatpush1.bf16.msra.mxu0 %v1261
        %1319 = vmatprep.subr.bf16.mxu0 0
        %1320 = vmatpush1.bf16.msra.mxu0 0
        %1321 = vmatprep.subr.bf16.mxu0 0
        %1322 = vmatpush1.bf16.msra.mxu0 0
        %1323 = vmatprep.subr.bf16.mxu0 0
        %1324 = vmatpush1.bf16.msra.mxu0 0
        %1325 = vmatprep.subr.bf16.mxu0 0
        %1326 = vmatpush1.bf16.msra.mxu0 0
        %1327 = vmatprep.subr.bf16.mxu0 0
        %1328 = vmatpush1.bf16.msra.mxu0 0
        %1329 = vmatprep.subr.bf16.mxu0 0
        %1330 = vmatpush1.bf16.msra.mxu0 0
        %1331 = vmatprep.subr.bf16.mxu0 0
        %1332 = vmatpush1.bf16.msra.mxu0 0
        %1333 = vmatprep.subr.bf16.mxu0 0
        %1334 = vmatpush1.bf16.msra.mxu0 0
        %1335 = vmatprep.mubr.bf16.mxu0 0
        %1336 = vmatmul.mubr.bf16.gmra.mrb[0].mxu0 %v1232
        %v1337 = vpop.f32.mrb[0].mxu0
        %v1338 = vadd.f32 0.0, %v1337
        %v1339 = vpop.f32.mrb[0].mxu0
        %v1340 = vpop.f32.mrb[0].mxu0
        %v1341 = vpop.f32.mrb[0].mxu0
        %1342 = vdwg.mxu0
        %v1343 = vadd.f32 %v1233, %v1297
        %v1344 = vadd.f32 %v1234, %v1299
        %v1345 = vadd.f32 %v1235, %v1338
        %v1346 = vld [vmem:[%s1237 + $0x18] sm:$0xff]
        %v1347 = vld [vmem:[%s1237 + $0x38] sm:$0xff]
        %v1348 = vld [vmem:[%s1237 + $0x58] sm:$0xff]
        %v1349 = vld [vmem:[%s1237 + $0x78] sm:$0xff]
        %v1350 = vld [vmem:[%s1237 + $0x98] sm:$0xff]
        %v1351 = vld [vmem:[%s1237 + $0xb8] sm:$0xff]
        %v1352 = vld [vmem:[%s1237 + $0xd8] sm:$0xff]
        %v1353 = vld [vmem:[%s1237 + $0xf8] sm:$0xff]
        %1354 = vmatprep.subr.bf16.mxu0 0
        %1355 = vmatpush1.bf16.msra.mxu0 %v1346
        %1356 = vmatprep.subr.bf16.mxu0 0
        %1357 = vmatpush1.bf16.msra.mxu0 %v1347
        %1358 = vmatprep.subr.bf16.mxu0 0
        %1359 = vmatpush1.bf16.msra.mxu0 %v1348
        %1360 = vmatprep.subr.bf16.mxu0 0
        %1361 = vmatpush1.bf16.msra.mxu0 %v1349
        %1362 = vmatprep.subr.bf16.mxu0 0
        %1363 = vmatpush1.bf16.msra.mxu0 %v1350
        %1364 = vmatprep.subr.bf16.mxu0 0
        %1365 = vmatpush1.bf16.msra.mxu0 %v1351
        %1366 = vmatprep.subr.bf16.mxu0 0
        %1367 = vmatpush1.bf16.msra.mxu0 %v1352
        %1368 = vmatprep.subr.bf16.mxu0 0
        %1369 = vmatpush1.bf16.msra.mxu0 %v1353
        %1370 = vmatprep.subr.bf16.mxu0 0
        %1371 = vmatpush1.bf16.msra.mxu0 0
        %1372 = vmatprep.subr.bf16.mxu0 0
        %1373 = vmatpush1.bf16.msra.mxu0 0
        %1374 = vmatprep.subr.bf16.mxu0 0
        %1375 = vmatpush1.bf16.msra.mxu0 0
        %1376 = vmatprep.subr.bf16.mxu0 0
        %1377 = vmatpush1.bf16.msra.mxu0 0
        %1378 = vmatprep.subr.bf16.mxu0 0
        %1379 = vmatpush1.bf16.msra.mxu0 0
        %1380 = vmatprep.subr.bf16.mxu0 0
        %1381 = vmatpush1.bf16.msra.mxu0 0
        %1382 = vmatprep.subr.bf16.mxu0 0
        %1383 = vmatpush1.bf16.msra.mxu0 0
        %1384 = vmatprep.subr.bf16.mxu0 0
        %1385 = vmatpush1.bf16.msra.mxu0 0
        %1386 = vmatprep.mubr.bf16.mxu0 0
        %1387 = vmatmul.mubr.bf16.gmra.mrb[0].mxu0 %v1232
        %v1388 = vpop.f32.mrb[0].mxu0
        %v1389 = vadd.f32 0.0, %v1388
        %v1390 = vpop.f32.mrb[0].mxu0
        %v1391 = vpop.f32.mrb[0].mxu0
        %v1392 = vpop.f32.mrb[0].mxu0
        %1393 = vdwg.mxu0
        %v1394 = vadd.f32 %v1236, %v1389
        %v1395 = vxor.u32 %v1343, 2147483648
        %v1396 = vxor.u32 %v1344, 2147483648
        %v1397 = vxor.u32 %v1345, 2147483648
        %v1398 = vmul.f32 %v1395, 1.442695
        %v1399 = vpow.pop %v1398
        %v1400 = vmul.f32 %v1396, 1.442695
        %v1401 = vpow.pop %v1400
        %v1402 = vmul.f32 %v1397, 1.442695
        %v1403 = vpow.pop %v1402
        %v1404 = vadd.f32 %v1399, 1.0
        %v1405 = vadd.f32 %v1401, 1.0
        %v1406 = vadd.f32 %v1403, 1.0
        %v1407 = vrcp.pop %v1404
        %v1408 = vmul.f32 1.0, %v1407
        %v1409 = vrcp.pop %v1405
        %v1410 = vmul.f32 1.0, %v1409
        %v1411 = vrcp.pop %v1406
        %v1412 = vmul.f32 1.0, %v1411
        %v1413 = vtanh.pop %v1394
        %v1414 = vmul.f32 %v1410, %v1231
        %v1415 = vmul.f32 %v1408, %v1413
        %v1416 = vadd.f32 %v1414, %v1415
        %v1417 = vtanh.pop %v1416
        %v1418 = vmul.f32 %v1412, %v1417
        %1419 = vst [vmem:[%s192] sm:$0xff] %v1418
        %s1420 = scalar_lea.vmem %s192, 64 [#allocation12]
        %1421 = vst [vmem:[%s1420] sm:$0xff] %v1416
        %s1422 = scalar_lea.vmem %s192, 128 [#allocation12]
        %1423 = vst [vmem:[%s1422] sm:$0xff] %v1412
        %v1424 = vpack.c.bf16 %v1418, %v1418
        %v1425 = vld [vmem:[%s499] sm:$0xff]
        %v1426 = vld [vmem:[%s499 + $0x8] sm:$0xff]
        %v1427 = vld [vmem:[%s499 + $0x10] sm:$0xff]
        %v1428 = vld [vmem:[%s499 + $0x18] sm:$0xff]
        %v1429 = vld [vmem:[%s1237] sm:$0xff]
        %v1430 = vld [vmem:[%s1237 + $0x8] sm:$0xff]
        %v1431 = vld [vmem:[%s1237 + $0x10] sm:$0xff]
        %v1432 = vld [vmem:[%s1237 + $0x20] sm:$0xff]
        %v1433 = vld [vmem:[%s1237 + $0x28] sm:$0xff]
        %v1434 = vld [vmem:[%s1237 + $0x30] sm:$0xff]
        %v1435 = vld [vmem:[%s1237 + $0x40] sm:$0xff]
        %v1436 = vld [vmem:[%s1237 + $0x48] sm:$0xff]
        %v1437 = vld [vmem:[%s1237 + $0x50] sm:$0xff]
        %v1438 = vld [vmem:[%s1237 + $0x60] sm:$0xff]
        %v1439 = vld [vmem:[%s1237 + $0x68] sm:$0xff]
        %v1440 = vld [vmem:[%s1237 + $0x70] sm:$0xff]
        %v1441 = vld [vmem:[%s1237 + $0x80] sm:$0xff]
        %v1442 = vld [vmem:[%s1237 + $0x88] sm:$0xff]
        %v1443 = vld [vmem:[%s1237 + $0x90] sm:$0xff]
        %v1444 = vld [vmem:[%s1237 + $0xa0] sm:$0xff]
        %v1445 = vld [vmem:[%s1237 + $0xa8] sm:$0xff]
        %v1446 = vld [vmem:[%s1237 + $0xb0] sm:$0xff]
        %v1447 = vld [vmem:[%s1237 + $0xc0] sm:$0xff]
        %v1448 = vld [vmem:[%s1237 + $0xc8] sm:$0xff]
        %v1449 = vld [vmem:[%s1237 + $0xd0] sm:$0xff]
        %v1450 = vld [vmem:[%s1237 + $0xe0] sm:$0xff]
        %v1451 = vld [vmem:[%s1237 + $0xe8] sm:$0xff]
        %v1452 = vld [vmem:[%s1237 + $0xf0] sm:$0xff]
        %1453 = vmatprep.subr.bf16.mxu0 %v1430
        %1454 = vmatpush1.bf16.msra.mxu0 %v1429
        %1455 = vmatprep.subr.bf16.mxu0 %v1433
        %1456 = vmatpush1.bf16.msra.mxu0 %v1432
        %1457 = vmatprep.subr.bf16.mxu0 %v1436
        %1458 = vmatpush1.bf16.msra.mxu0 %v1435
        %1459 = vmatprep.subr.bf16.mxu0 %v1439
        %1460 = vmatpush1.bf16.msra.mxu0 %v1438
        %1461 = vmatprep.subr.bf16.mxu0 %v1442
        %1462 = vmatpush1.bf16.msra.mxu0 %v1441
        %1463 = vmatprep.subr.bf16.mxu0 %v1445
        %1464 = vmatpush1.bf16.msra.mxu0 %v1444
        %1465 = vmatprep.subr.bf16.mxu0 %v1448
        %1466 = vmatpush1.bf16.msra.mxu0 %v1447
        %1467 = vmatprep.subr.bf16.mxu0 %v1451
        %1468 = vmatpush1.bf16.msra.mxu0 %v1450
        %1469 = vmatprep.subr.bf16.mxu0 0
        %1470 = vmatpush1.bf16.msra.mxu0 0
        %1471 = vmatprep.subr.bf16.mxu0 0
        %1472 = vmatpush1.bf16.msra.mxu0 0
        %1473 = vmatprep.subr.bf16.mxu0 0
        %1474 = vmatpush1.bf16.msra.mxu0 0
        %1475 = vmatprep.subr.bf16.mxu0 0
        %1476 = vmatpush1.bf16.msra.mxu0 0
        %1477 = vmatprep.subr.bf16.mxu0 0
        %1478 = vmatpush1.bf16.msra.mxu0 0
        %1479 = vmatprep.subr.bf16.mxu0 0
        %1480 = vmatpush1.bf16.msra.mxu0 0
        %1481 = vmatprep.subr.bf16.mxu0 0
        %1482 = vmatpush1.bf16.msra.mxu0 0
        %1483 = vmatprep.subr.bf16.mxu0 0
        %1484 = vmatpush1.bf16.msra.mxu0 0
        %1485 = vmatprep.mubr.bf16.mxu0 0
        %1486 = vmatmul.mubr.bf16.gmra.mrb[0].mxu0 %v1424
        %v1487 = vpop.f32.mrb[0].mxu0
        %v1488 = vadd.f32 0.0, %v1487
        %v1489 = vpop.f32.mrb[0].mxu0
        %v1490 = vadd.f32 0.0, %v1489
        %v1491 = vpop.f32.mrb[0].mxu0
        %v1492 = vpop.f32.mrb[0].mxu0
        %1493 = vdwg.mxu0
        %1494 = vmatprep.subr.bf16.mxu0 0
        %1495 = vmatpush1.bf16.msra.mxu0 %v1431
        %1496 = vmatprep.subr.bf16.mxu0 0
        %1497 = vmatpush1.bf16.msra.mxu0 %v1434
        %1498 = vmatprep.subr.bf16.mxu0 0
        %1499 = vmatpush1.bf16.msra.mxu0 %v1437
        %1500 = vmatprep.subr.bf16.mxu0 0
        %1501 = vmatpush1.bf16.msra.mxu0 %v1440
        %1502 = vmatprep.subr.bf16.mxu0 0
        %1503 = vmatpush1.bf16.msra.mxu0 %v1443
        %1504 = vmatprep.subr.bf16.mxu0 0
        %1505 = vmatpush1.bf16.msra.mxu0 %v1446
        %1506 = vmatprep.subr.bf16.mxu0 0
        %1507 = vmatpush1.bf16.msra.mxu0 %v1449
        %1508 = vmatprep.subr.bf16.mxu0 0
        %1509 = vmatpush1.bf16.msra.mxu0 %v1452
        %1510 = vmatprep.subr.bf16.mxu0 0
        %1511 = vmatpush1.bf16.msra.mxu0 0
        %1512 = vmatprep.subr.bf16.mxu0 0
        %1513 = vmatpush1.bf16.msra.mxu0 0
        %1514 = vmatprep.subr.bf16.mxu0 0
        %1515 = vmatpush1.bf16.msra.mxu0 0
        %1516 = vmatprep.subr.bf16.mxu0 0
        %1517 = vmatpush1.bf16.msra.mxu0 0
        %1518 = vmatprep.subr.bf16.mxu0 0
        %1519 = vmatpush1.bf16.msra.mxu0 0
        %1520 = vmatprep.subr.bf16.mxu0 0
        %1521 = vmatpush1.bf16.msra.mxu0 0
        %1522 = vmatprep.subr.bf16.mxu0 0
        %1523 = vmatpush1.bf16.msra.mxu0 0
        %1524 = vmatprep.subr.bf16.mxu0 0
        %1525 = vmatpush1.bf16.msra.mxu0 0
        %1526 = vmatprep.mubr.bf16.mxu0 0
        %1527 = vmatmul.mubr.bf16.gmra.mrb[0].mxu0 %v1424
        %v1528 = vpop.f32.mrb[0].mxu0
        %v1529 = vadd.f32 0.0, %v1528
        %v1530 = vpop.f32.mrb[0].mxu0
        %v1531 = vpop.f32.mrb[0].mxu0
        %v1532 = vpop.f32.mrb[0].mxu0
        %1533 = vdwg.mxu0
        %v1534 = vadd.f32 %v1425, %v1488
        %v1535 = vadd.f32 %v1426, %v1490
        %v1536 = vadd.f32 %v1427, %v1529
        %v1537 = vld [vmem:[%s1237 + $0x18] sm:$0xff]
        %v1538 = vld [vmem:[%s1237 + $0x38] sm:$0xff]
        %v1539 = vld [vmem:[%s1237 + $0x58] sm:$0xff]
        %v1540 = vld [vmem:[%s1237 + $0x78] sm:$0xff]
        %v1541 = vld [vmem:[%s1237 + $0x98] sm:$0xff]
        %v1542 = vld [vmem:[%s1237 + $0xb8] sm:$0xff]
        %v1543 = vld [vmem:[%s1237 + $0xd8] sm:$0xff]
        %v1544 = vld [vmem:[%s1237 + $0xf8] sm:$0xff]
        %1545 = vmatprep.subr.bf16.mxu0 0
        %1546 = vmatpush1.bf16.msra.mxu0 %v1537
        %1547 = vmatprep.subr.bf16.mxu0 0
        %1548 = vmatpush1.bf16.msra.mxu0 %v1538
        %1549 = vmatprep.subr.bf16.mxu0 0
        %1550 = vmatpush1.bf16.msra.mxu0 %v1539
        %1551 = vmatprep.subr.bf16.mxu0 0
        %1552 = vmatpush1.bf16.msra.mxu0 %v1540
        %1553 = vmatprep.subr.bf16.mxu0 0
        %1554 = vmatpush1.bf16.msra.mxu0 %v1541
        %1555 = vmatprep.subr.bf16.mxu0 0
        %1556 = vmatpush1.bf16.msra.mxu0 %v1542
        %1557 = vmatprep.subr.bf16.mxu0 0
        %1558 = vmatpush1.bf16.msra.mxu0 %v1543
        %1559 = vmatprep.subr.bf16.mxu0 0
        %1560 = vmatpush1.bf16.msra.mxu0 %v1544
        %1561 = vmatprep.subr.bf16.mxu0 0
        %1562 = vmatpush1.bf16.msra.mxu0 0
        %1563 = vmatprep.subr.bf16.mxu0 0
        %1564 = vmatpush1.bf16.msra.mxu0 0
        %1565 = vmatprep.subr.bf16.mxu0 0
        %1566 = vmatpush1.bf16.msra.mxu0 0
        %1567 = vmatprep.subr.bf16.mxu0 0
        %1568 = vmatpush1.bf16.msra.mxu0 0
        %1569 = vmatprep.subr.bf16.mxu0 0
        %1570 = vmatpush1.bf16.msra.mxu0 0
        %1571 = vmatprep.subr.bf16.mxu0 0
        %1572 = vmatpush1.bf16.msra.mxu0 0
        %1573 = vmatprep.subr.bf16.mxu0 0
        %1574 = vmatpush1.bf16.msra.mxu0 0
        %1575 = vmatprep.subr.bf16.mxu0 0
        %1576 = vmatpush1.bf16.msra.mxu0 0
        %1577 = vmatprep.mubr.bf16.mxu0 0
        %1578 = vmatmul.mubr.bf16.gmra.mrb[0].mxu0 %v1424
        %v1579 = vpop.f32.mrb[0].mxu0
        %v1580 = vadd.f32 0.0, %v1579
        %v1581 = vpop.f32.mrb[0].mxu0
        %v1582 = vpop.f32.mrb[0].mxu0
        %v1583 = vpop.f32.mrb[0].mxu0
        %1584 = vdwg.mxu0
        %v1585 = vadd.f32 %v1428, %v1580
        %v1586 = vxor.u32 %v1534, 2147483648
        %v1587 = vxor.u32 %v1535, 2147483648
        %v1588 = vxor.u32 %v1536, 2147483648
        %v1589 = vmul.f32 %v1586, 1.442695
        %v1590 = vpow.pop %v1589
        %v1591 = vmul.f32 %v1587, 1.442695
        %v1592 = vpow.pop %v1591
        %v1593 = vmul.f32 %v1588, 1.442695
        %v1594 = vpow.pop %v1593
        %v1595 = vadd.f32 %v1590, 1.0
        %v1596 = vadd.f32 %v1592, 1.0
        %v1597 = vadd.f32 %v1594, 1.0
        %v1598 = vrcp.pop %v1595
        %v1599 = vmul.f32 1.0, %v1598
        %v1600 = vrcp.pop %v1596
        %v1601 = vmul.f32 1.0, %v1600
        %v1602 = vrcp.pop %v1597
        %v1603 = vmul.f32 1.0, %v1602
        %v1604 = vtanh.pop %v1585
        %v1605 = vmul.f32 %v1601, %v1416
        %v1606 = vmul.f32 %v1599, %v1604
        %v1607 = vadd.f32 %v1605, %v1606
        %v1608 = vtanh.pop %v1607
        %v1609 = vmul.f32 %v1603, %v1608
        %s1610 = scalar_lea.vmem %s192, 8 [#allocation12]
        %1611 = vst [vmem:[%s1610] sm:$0xff] %v1609
        %s1612 = scalar_lea.vmem %s192, 72 [#allocation12]
        %1613 = vst [vmem:[%s1612] sm:$0xff] %v1607
        %s1614 = scalar_lea.vmem %s192, 136 [#allocation12]
        %1615 = vst [vmem:[%s1614] sm:$0xff] %v1603
        %v1616 = vpack.c.bf16 %v1609, %v1609
        %v1617 = vld [vmem:[%s620] sm:$0xff]
        %v1618 = vld [vmem:[%s620 + $0x8] sm:$0xff]
        %v1619 = vld [vmem:[%s620 + $0x10] sm:$0xff]
        %v1620 = vld [vmem:[%s620 + $0x18] sm:$0xff]
        %v1621 = vld [vmem:[%s1237] sm:$0xff]
        %v1622 = vld [vmem:[%s1237 + $0x8] sm:$0xff]
        %v1623 = vld [vmem:[%s1237 + $0x10] sm:$0xff]
        %v1624 = vld [vmem:[%s1237 + $0x20] sm:$0xff]
        %v1625 = vld [vmem:[%s1237 + $0x28] sm:$0xff]
        %v1626 = vld [vmem:[%s1237 + $0x30] sm:$0xff]
        %v1627 = vld [vmem:[%s1237 + $0x40] sm:$0xff]
        %v1628 = vld [vmem:[%s1237 + $0x48] sm:$0xff]
        %v1629 = vld [vmem:[%s1237 + $0x50] sm:$0xff]
        %v1630 = vld [vmem:[%s1237 + $0x60] sm:$0xff]
        %v1631 = vld [vmem:[%s1237 + $0x68] sm:$0xff]
        %v1632 = vld [vmem:[%s1237 + $0x70] sm:$0xff]
        %v1633 = vld [vmem:[%s1237 + $0x80] sm:$0xff]
        %v1634 = vld [vmem:[%s1237 + $0x88] sm:$0xff]
        %v1635 = vld [vmem:[%s1237 + $0x90] sm:$0xff]
        %v1636 = vld [vmem:[%s1237 + $0xa0] sm:$0xff]
        %v1637 = vld [vmem:[%s1237 + $0xa8] sm:$0xff]
        %v1638 = vld [vmem:[%s1237 + $0xb0] sm:$0xff]
        %v1639 = vld [vmem:[%s1237 + $0xc0] sm:$0xff]
        %v1640 = vld [vmem:[%s1237 + $0xc8] sm:$0xff]
        %v1641 = vld [vmem:[%s1237 + $0xd0] sm:$0xff]
        %v1642 = vld [vmem:[%s1237 + $0xe0] sm:$0xff]
        %v1643 = vld [vmem:[%s1237 + $0xe8] sm:$0xff]
        %v1644 = vld [vmem:[%s1237 + $0xf0] sm:$0xff]
        %1645 = vmatprep.subr.bf16.mxu0 %v1622
        %1646 = vmatpush1.bf16.msra.mxu0 %v1621
        %1647 = vmatprep.subr.bf16.mxu0 %v1625
        %1648 = vmatpush1.bf16.msra.mxu0 %v1624
        %1649 = vmatprep.subr.bf16.mxu0 %v1628
        %1650 = vmatpush1.bf16.msra.mxu0 %v1627
        %1651 = vmatprep.subr.bf16.mxu0 %v1631
        %1652 = vmatpush1.bf16.msra.mxu0 %v1630
        %1653 = vmatprep.subr.bf16.mxu0 %v1634
        %1654 = vmatpush1.bf16.msra.mxu0 %v1633
        %1655 = vmatprep.subr.bf16.mxu0 %v1637
        %1656 = vmatpush1.bf16.msra.mxu0 %v1636
        %1657 = vmatprep.subr.bf16.mxu0 %v1640
        %1658 = vmatpush1.bf16.msra.mxu0 %v1639
        %1659 = vmatprep.subr.bf16.mxu0 %v1643
        %1660 = vmatpush1.bf16.msra.mxu0 %v1642
        %1661 = vmatprep.subr.bf16.mxu0 0
        %1662 = vmatpush1.bf16.msra.mxu0 0
        %1663 = vmatprep.subr.bf16.mxu0 0
        %1664 = vmatpush1.bf16.msra.mxu0 0
        %1665 = vmatprep.subr.bf16.mxu0 0
        %1666 = vmatpush1.bf16.msra.mxu0 0
        %1667 = vmatprep.subr.bf16.mxu0 0
        %1668 = vmatpush1.bf16.msra.mxu0 0
        %1669 = vmatprep.subr.bf16.mxu0 0
        %1670 = vmatpush1.bf16.msra.mxu0 0
        %1671 = vmatprep.subr.bf16.mxu0 0
        %1672 = vmatpush1.bf16.msra.mxu0 0
        %1673 = vmatprep.subr.bf16.mxu0 0
        %1674 = vmatpush1.bf16.msra.mxu0 0
        %1675 = vmatprep.subr.bf16.mxu0 0
        %1676 = vmatpush1.bf16.msra.mxu0 0
        %1677 = vmatprep.mubr.bf16.mxu0 0
        %1678 = vmatmul.mubr.bf16.gmra.mrb[0].mxu0 %v1616
        %v1679 = vpop.f32.mrb[0].mxu0
        %v1680 = vadd.f32 0.0, %v1679
        %v1681 = vpop.f32.mrb[0].mxu0
        %v1682 = vadd.f32 0.0, %v1681
        %v1683 = vpop.f32.mrb[0].mxu0
        %v1684 = vpop.f32.mrb[0].mxu0
        %1685 = vdwg.mxu0
        %1686 = vmatprep.subr.bf16.mxu0 0
        %1687 = vmatpush1.bf16.msra.mxu0 %v1623
        %1688 = vmatprep.subr.bf16.mxu0 0
        %1689 = vmatpush1.bf16.msra.mxu0 %v1626
        %1690 = vmatprep.subr.bf16.mxu0 0
        %1691 = vmatpush1.bf16.msra.mxu0 %v1629
        %1692 = vmatprep.subr.bf16.mxu0 0
        %1693 = vmatpush1.bf16.msra.mxu0 %v1632
        %1694 = vmatprep.subr.bf16.mxu0 0
        %1695 = vmatpush1.bf16.msra.mxu0 %v1635
        %1696 = vmatprep.subr.bf16.mxu0 0
        %1697 = vmatpush1.bf16.msra.mxu0 %v1638
        %1698 = vmatprep.subr.bf16.mxu0 0
        %1699 = vmatpush1.bf16.msra.mxu0 %v1641
        %1700 = vmatprep.subr.bf16.mxu0 0
        %1701 = vmatpush1.bf16.msra.mxu0 %v1644
        %1702 = vmatprep.subr.bf16.mxu0 0
        %1703 = vmatpush1.bf16.msra.mxu0 0
        %1704 = vmatprep.subr.bf16.mxu0 0
        %1705 = vmatpush1.bf16.msra.mxu0 0
        %1706 = vmatprep.subr.bf16.mxu0 0
        %1707 = vmatpush1.bf16.msra.mxu0 0
        %1708 = vmatprep.subr.bf16.mxu0 0
        %1709 = vmatpush1.bf16.msra.mxu0 0
        %1710 = vmatprep.subr.bf16.mxu0 0
        %1711 = vmatpush1.bf16.msra.mxu0 0
        %1712 = vmatprep.subr.bf16.mxu0 0
        %1713 = vmatpush1.bf16.msra.mxu0 0
        %1714 = vmatprep.subr.bf16.mxu0 0
        %1715 = vmatpush1.bf16.msra.mxu0 0
        %1716 = vmatprep.subr.bf16.mxu0 0
        %1717 = vmatpush1.bf16.msra.mxu0 0
        %1718 = vmatprep.mubr.bf16.mxu0 0
        %1719 = vmatmul.mubr.bf16.gmra.mrb[0].mxu0 %v1616
        %v1720 = vpop.f32.mrb[0].mxu0
        %v1721 = vadd.f32 0.0, %v1720
        %v1722 = vpop.f32.mrb[0].mxu0
        %v1723 = vpop.f32.mrb[0].mxu0
        %v1724 = vpop.f32.mrb[0].mxu0
        %1725 = vdwg.mxu0
        %v1726 = vadd.f32 %v1617, %v1680
        %v1727 = vadd.f32 %v1618, %v1682
        %v1728 = vadd.f32 %v1619, %v1721
        %v1729 = vld [vmem:[%s1237 + $0x18] sm:$0xff]
        %v1730 = vld [vmem:[%s1237 + $0x38] sm:$0xff]
        %v1731 = vld [vmem:[%s1237 + $0x58] sm:$0xff]
        %v1732 = vld [vmem:[%s1237 + $0x78] sm:$0xff]
        %v1733 = vld [vmem:[%s1237 + $0x98] sm:$0xff]
        %v1734 = vld [vmem:[%s1237 + $0xb8] sm:$0xff]
        %v1735 = vld [vmem:[%s1237 + $0xd8] sm:$0xff]
        %v1736 = vld [vmem:[%s1237 + $0xf8] sm:$0xff]
        %1737 = vmatprep.subr.bf16.mxu0 0
        %1738 = vmatpush1.bf16.msra.mxu0 %v1729
        %1739 = vmatprep.subr.bf16.mxu0 0
        %1740 = vmatpush1.bf16.msra.mxu0 %v1730
        %1741 = vmatprep.subr.bf16.mxu0 0
        %1742 = vmatpush1.bf16.msra.mxu0 %v1731
        %1743 = vmatprep.subr.bf16.mxu0 0
        %1744 = vmatpush1.bf16.msra.mxu0 %v1732
        %1745 = vmatprep.subr.bf16.mxu0 0
        %1746 = vmatpush1.bf16.msra.mxu0 %v1733
        %1747 = vmatprep.subr.bf16.mxu0 0
        %1748 = vmatpush1.bf16.msra.mxu0 %v1734
        %1749 = vmatprep.subr.bf16.mxu0 0
        %1750 = vmatpush1.bf16.msra.mxu0 %v1735
        %1751 = vmatprep.subr.bf16.mxu0 0
        %1752 = vmatpush1.bf16.msra.mxu0 %v1736
        %1753 = vmatprep.subr.bf16.mxu0 0
        %1754 = vmatpush1.bf16.msra.mxu0 0
        %1755 = vmatprep.subr.bf16.mxu0 0
        %1756 = vmatpush1.bf16.msra.mxu0 0
        %1757 = vmatprep.subr.bf16.mxu0 0
        %1758 = vmatpush1.bf16.msra.mxu0 0
        %1759 = vmatprep.subr.bf16.mxu0 0
        %1760 = vmatpush1.bf16.msra.mxu0 0
        %1761 = vmatprep.subr.bf16.mxu0 0
        %1762 = vmatpush1.bf16.msra.mxu0 0
        %1763 = vmatprep.subr.bf16.mxu0 0
        %1764 = vmatpush1.bf16.msra.mxu0 0
        %1765 = vmatprep.subr.bf16.mxu0 0
        %1766 = vmatpush1.bf16.msra.mxu0 0
        %1767 = vmatprep.subr.bf16.mxu0 0
        %1768 = vmatpush1.bf16.msra.mxu0 0
        %1769 = vmatprep.mubr.bf16.mxu0 0
        %1770 = vmatmul.mubr.bf16.gmra.mrb[0].mxu0 %v1616
        %v1771 = vpop.f32.mrb[0].mxu0
        %v1772 = vadd.f32 0.0, %v1771
        %v1773 = vpop.f32.mrb[0].mxu0
        %v1774 = vpop.f32.mrb[0].mxu0
        %v1775 = vpop.f32.mrb[0].mxu0
        %1776 = vdwg.mxu0
        %v1777 = vadd.f32 %v1620, %v1772
        %v1778 = vxor.u32 %v1726, 2147483648
        %v1779 = vxor.u32 %v1727, 2147483648
        %v1780 = vxor.u32 %v1728, 2147483648
        %v1781 = vmul.f32 %v1778, 1.442695
        %v1782 = vpow.pop %v1781
        %v1783 = vmul.f32 %v1779, 1.442695
        %v1784 = vpow.pop %v1783
        %v1785 = vmul.f32 %v1780, 1.442695
        %v1786 = vpow.pop %v1785
        %v1787 = vadd.f32 %v1782, 1.0
        %v1788 = vadd.f32 %v1784, 1.0
        %v1789 = vadd.f32 %v1786, 1.0
        %v1790 = vrcp.pop %v1787
        %v1791 = vmul.f32 1.0, %v1790
        %v1792 = vrcp.pop %v1788
        %v1793 = vmul.f32 1.0, %v1792
        %v1794 = vrcp.pop %v1789
        %v1795 = vmul.f32 1.0, %v1794
        %v1796 = vtanh.pop %v1777
        %v1797 = vmul.f32 %v1793, %v1607
        %v1798 = vmul.f32 %v1791, %v1796
        %v1799 = vadd.f32 %v1797, %v1798
        %v1800 = vtanh.pop %v1799
        %v1801 = vmul.f32 %v1795, %v1800
        %s1802 = scalar_lea.vmem %s192, 16 [#allocation12]
        %1803 = vst [vmem:[%s1802] sm:$0xff] %v1801
        %s1804 = scalar_lea.vmem %s192, 80 [#allocation12]
        %1805 = vst [vmem:[%s1804] sm:$0xff] %v1799
        %s1806 = scalar_lea.vmem %s192, 144 [#allocation12]
        %1807 = vst [vmem:[%s1806] sm:$0xff] %v1795
        %v1808 = vpack.c.bf16 %v1801, %v1801
        %v1809 = vld [vmem:[%s741] sm:$0xff]
        %v1810 = vld [vmem:[%s741 + $0x8] sm:$0xff]
        %v1811 = vld [vmem:[%s741 + $0x10] sm:$0xff]
        %v1812 = vld [vmem:[%s741 + $0x18] sm:$0xff]
        %v1813 = vld [vmem:[%s1237] sm:$0xff]
        %v1814 = vld [vmem:[%s1237 + $0x8] sm:$0xff]
        %v1815 = vld [vmem:[%s1237 + $0x10] sm:$0xff]
        %v1816 = vld [vmem:[%s1237 + $0x20] sm:$0xff]
        %v1817 = vld [vmem:[%s1237 + $0x28] sm:$0xff]
        %v1818 = vld [vmem:[%s1237 + $0x30] sm:$0xff]
        %v1819 = vld [vmem:[%s1237 + $0x40] sm:$0xff]
        %v1820 = vld [vmem:[%s1237 + $0x48] sm:$0xff]
        %v1821 = vld [vmem:[%s1237 + $0x50] sm:$0xff]
        %v1822 = vld [vmem:[%s1237 + $0x60] sm:$0xff]
        %v1823 = vld [vmem:[%s1237 + $0x68] sm:$0xff]
        %v1824 = vld [vmem:[%s1237 + $0x70] sm:$0xff]
        %v1825 = vld [vmem:[%s1237 + $0x80] sm:$0xff]
        %v1826 = vld [vmem:[%s1237 + $0x88] sm:$0xff]
        %v1827 = vld [vmem:[%s1237 + $0x90] sm:$0xff]
        %v1828 = vld [vmem:[%s1237 + $0xa0] sm:$0xff]
        %v1829 = vld [vmem:[%s1237 + $0xa8] sm:$0xff]
        %v1830 = vld [vmem:[%s1237 + $0xb0] sm:$0xff]
        %v1831 = vld [vmem:[%s1237 + $0xc0] sm:$0xff]
        %v1832 = vld [vmem:[%s1237 + $0xc8] sm:$0xff]
        %v1833 = vld [vmem:[%s1237 + $0xd0] sm:$0xff]
        %v1834 = vld [vmem:[%s1237 + $0xe0] sm:$0xff]
        %v1835 = vld [vmem:[%s1237 + $0xe8] sm:$0xff]
        %v1836 = vld [vmem:[%s1237 + $0xf0] sm:$0xff]
        %1837 = vmatprep.subr.bf16.mxu0 %v1814
        %1838 = vmatpush1.bf16.msra.mxu0 %v1813
        %1839 = vmatprep.subr.bf16.mxu0 %v1817
        %1840 = vmatpush1.bf16.msra.mxu0 %v1816
        %1841 = vmatprep.subr.bf16.mxu0 %v1820
        %1842 = vmatpush1.bf16.msra.mxu0 %v1819
        %1843 = vmatprep.subr.bf16.mxu0 %v1823
        %1844 = vmatpush1.bf16.msra.mxu0 %v1822
        %1845 = vmatprep.subr.bf16.mxu0 %v1826
        %1846 = vmatpush1.bf16.msra.mxu0 %v1825
        %1847 = vmatprep.subr.bf16.mxu0 %v1829
        %1848 = vmatpush1.bf16.msra.mxu0 %v1828
        %1849 = vmatprep.subr.bf16.mxu0 %v1832
        %1850 = vmatpush1.bf16.msra.mxu0 %v1831
        %1851 = vmatprep.subr.bf16.mxu0 %v1835
        %1852 = vmatpush1.bf16.msra.mxu0 %v1834
        %1853 = vmatprep.subr.bf16.mxu0 0
        %1854 = vmatpush1.bf16.msra.mxu0 0
        %1855 = vmatprep.subr.bf16.mxu0 0
        %1856 = vmatpush1.bf16.msra.mxu0 0
        %1857 = vmatprep.subr.bf16.mxu0 0
        %1858 = vmatpush1.bf16.msra.mxu0 0
        %1859 = vmatprep.subr.bf16.mxu0 0
        %1860 = vmatpush1.bf16.msra.mxu0 0
        %1861 = vmatprep.subr.bf16.mxu0 0
        %1862 = vmatpush1.bf16.msra.mxu0 0
        %1863 = vmatprep.subr.bf16.mxu0 0
        %1864 = vmatpush1.bf16.msra.mxu0 0
        %1865 = vmatprep.subr.bf16.mxu0 0
        %1866 = vmatpush1.bf16.msra.mxu0 0
        %1867 = vmatprep.subr.bf16.mxu0 0
        %1868 = vmatpush1.bf16.msra.mxu0 0
        %1869 = vmatprep.mubr.bf16.mxu0 0
        %1870 = vmatmul.mubr.bf16.gmra.mrb[0].mxu0 %v1808
        %v1871 = vpop.f32.mrb[0].mxu0
        %v1872 = vadd.f32 0.0, %v1871
        %v1873 = vpop.f32.mrb[0].mxu0
        %v1874 = vadd.f32 0.0, %v1873
        %v1875 = vpop.f32.mrb[0].mxu0
        %v1876 = vpop.f32.mrb[0].mxu0
        %1877 = vdwg.mxu0
        %1878 = vmatprep.subr.bf16.mxu0 0
        %1879 = vmatpush1.bf16.msra.mxu0 %v1815
        %1880 = vmatprep.subr.bf16.mxu0 0
        %1881 = vmatpush1.bf16.msra.mxu0 %v1818
        %1882 = vmatprep.subr.bf16.mxu0 0
        %1883 = vmatpush1.bf16.msra.mxu0 %v1821
        %1884 = vmatprep.subr.bf16.mxu0 0
        %1885 = vmatpush1.bf16.msra.mxu0 %v1824
        %1886 = vmatprep.subr.bf16.mxu0 0
        %1887 = vmatpush1.bf16.msra.mxu0 %v1827
        %1888 = vmatprep.subr.bf16.mxu0 0
        %1889 = vmatpush1.bf16.msra.mxu0 %v1830
        %1890 = vmatprep.subr.bf16.mxu0 0
        %1891 = vmatpush1.bf16.msra.mxu0 %v1833
        %1892 = vmatprep.subr.bf16.mxu0 0
        %1893 = vmatpush1.bf16.msra.mxu0 %v1836
        %1894 = vmatprep.subr.bf16.mxu0 0
        %1895 = vmatpush1.bf16.msra.mxu0 0
        %1896 = vmatprep.subr.bf16.mxu0 0
        %1897 = vmatpush1.bf16.msra.mxu0 0
        %1898 = vmatprep.subr.bf16.mxu0 0
        %1899 = vmatpush1.bf16.msra.mxu0 0
        %1900 = vmatprep.subr.bf16.mxu0 0
        %1901 = vmatpush1.bf16.msra.mxu0 0
        %1902 = vmatprep.subr.bf16.mxu0 0
        %1903 = vmatpush1.bf16.msra.mxu0 0
        %1904 = vmatprep.subr.bf16.mxu0 0
        %1905 = vmatpush1.bf16.msra.mxu0 0
        %1906 = vmatprep.subr.bf16.mxu0 0
        %1907 = vmatpush1.bf16.msra.mxu0 0
        %1908 = vmatprep.subr.bf16.mxu0 0
        %1909 = vmatpush1.bf16.msra.mxu0 0
        %1910 = vmatprep.mubr.bf16.mxu0 0
        %1911 = vmatmul.mubr.bf16.gmra.mrb[0].mxu0 %v1808
        %v1912 = vpop.f32.mrb[0].mxu0
        %v1913 = vadd.f32 0.0, %v1912
        %v1914 = vpop.f32.mrb[0].mxu0
        %v1915 = vpop.f32.mrb[0].mxu0
        %v1916 = vpop.f32.mrb[0].mxu0
        %1917 = vdwg.mxu0
        %v1918 = vadd.f32 %v1809, %v1872
        %v1919 = vadd.f32 %v1810, %v1874
        %v1920 = vadd.f32 %v1811, %v1913
        %v1921 = vld [vmem:[%s1237 + $0x18] sm:$0xff]
        %v1922 = vld [vmem:[%s1237 + $0x38] sm:$0xff]
        %v1923 = vld [vmem:[%s1237 + $0x58] sm:$0xff]
        %v1924 = vld [vmem:[%s1237 + $0x78] sm:$0xff]
        %v1925 = vld [vmem:[%s1237 + $0x98] sm:$0xff]
        %v1926 = vld [vmem:[%s1237 + $0xb8] sm:$0xff]
        %v1927 = vld [vmem:[%s1237 + $0xd8] sm:$0xff]
        %v1928 = vld [vmem:[%s1237 + $0xf8] sm:$0xff]
        %1929 = vmatprep.subr.bf16.mxu0 0
        %1930 = vmatpush1.bf16.msra.mxu0 %v1921
        %1931 = vmatprep.subr.bf16.mxu0 0
        %1932 = vmatpush1.bf16.msra.mxu0 %v1922
        %1933 = vmatprep.subr.bf16.mxu0 0
        %1934 = vmatpush1.bf16.msra.mxu0 %v1923
        %1935 = vmatprep.subr.bf16.mxu0 0
        %1936 = vmatpush1.bf16.msra.mxu0 %v1924
        %1937 = vmatprep.subr.bf16.mxu0 0
        %1938 = vmatpush1.bf16.msra.mxu0 %v1925
        %1939 = vmatprep.subr.bf16.mxu0 0
        %1940 = vmatpush1.bf16.msra.mxu0 %v1926
        %1941 = vmatprep.subr.bf16.mxu0 0
        %1942 = vmatpush1.bf16.msra.mxu0 %v1927
        %1943 = vmatprep.subr.bf16.mxu0 0
        %1944 = vmatpush1.bf16.msra.mxu0 %v1928
        %1945 = vmatprep.subr.bf16.mxu0 0
        %1946 = vmatpush1.bf16.msra.mxu0 0
        %1947 = vmatprep.subr.bf16.mxu0 0
        %1948 = vmatpush1.bf16.msra.mxu0 0
        %1949 = vmatprep.subr.bf16.mxu0 0
        %1950 = vmatpush1.bf16.msra.mxu0 0
        %1951 = vmatprep.subr.bf16.mxu0 0
        %1952 = vmatpush1.bf16.msra.mxu0 0
        %1953 = vmatprep.subr.bf16.mxu0 0
        %1954 = vmatpush1.bf16.msra.mxu0 0
        %1955 = vmatprep.subr.bf16.mxu0 0
        %1956 = vmatpush1.bf16.msra.mxu0 0
        %1957 = vmatprep.subr.bf16.mxu0 0
        %1958 = vmatpush1.bf16.msra.mxu0 0
        %1959 = vmatprep.subr.bf16.mxu0 0
        %1960 = vmatpush1.bf16.msra.mxu0 0
        %1961 = vmatprep.mubr.bf16.mxu0 0
        %1962 = vmatmul.mubr.bf16.gmra.mrb[0].mxu0 %v1808
        %v1963 = vpop.f32.mrb[0].mxu0
        %v1964 = vadd.f32 0.0, %v1963
        %v1965 = vpop.f32.mrb[0].mxu0
        %v1966 = vpop.f32.mrb[0].mxu0
        %v1967 = vpop.f32.mrb[0].mxu0
        %1968 = vdwg.mxu0
        %v1969 = vadd.f32 %v1812, %v1964
        %v1970 = vxor.u32 %v1918, 2147483648
        %v1971 = vxor.u32 %v1919, 2147483648
        %v1972 = vxor.u32 %v1920, 2147483648
        %v1973 = vmul.f32 %v1970, 1.442695
        %v1974 = vpow.pop %v1973
        %v1975 = vmul.f32 %v1971, 1.442695
        %v1976 = vpow.pop %v1975
        %v1977 = vmul.f32 %v1972, 1.442695
        %v1978 = vpow.pop %v1977
        %v1979 = vadd.f32 %v1974, 1.0
        %v1980 = vadd.f32 %v1976, 1.0
        %v1981 = vadd.f32 %v1978, 1.0
        %v1982 = vrcp.pop %v1979
        %v1983 = vmul.f32 1.0, %v1982
        %v1984 = vrcp.pop %v1980
        %v1985 = vmul.f32 1.0, %v1984
        %v1986 = vrcp.pop %v1981
        %v1987 = vmul.f32 1.0, %v1986
        %v1988 = vtanh.pop %v1969
        %v1989 = vmul.f32 %v1985, %v1799
        %v1990 = vmul.f32 %v1983, %v1988
        %v1991 = vadd.f32 %v1989, %v1990
        %v1992 = vtanh.pop %v1991
        %v1993 = vmul.f32 %v1987, %v1992
        %s1994 = scalar_lea.vmem %s192, 24 [#allocation12]
        %1995 = vst [vmem:[%s1994] sm:$0xff] %v1993
        %s1996 = scalar_lea.vmem %s192, 88 [#allocation12]
        %1997 = vst [vmem:[%s1996] sm:$0xff] %v1991
        %s1998 = scalar_lea.vmem %s192, 152 [#allocation12]
        %1999 = vst [vmem:[%s1998] sm:$0xff] %v1987
        %v2000 = vpack.c.bf16 %v1993, %v1993
        %v2001 = vld [vmem:[%s862] sm:$0xff]
        %v2002 = vld [vmem:[%s862 + $0x8] sm:$0xff]
        %v2003 = vld [vmem:[%s862 + $0x10] sm:$0xff]
        %v2004 = vld [vmem:[%s862 + $0x18] sm:$0xff]
        %v2005 = vld [vmem:[%s1237] sm:$0xff]
        %v2006 = vld [vmem:[%s1237 + $0x8] sm:$0xff]
        %v2007 = vld [vmem:[%s1237 + $0x10] sm:$0xff]
        %v2008 = vld [vmem:[%s1237 + $0x20] sm:$0xff]
        %v2009 = vld [vmem:[%s1237 + $0x28] sm:$0xff]
        %v2010 = vld [vmem:[%s1237 + $0x30] sm:$0xff]
        %v2011 = vld [vmem:[%s1237 + $0x40] sm:$0xff]
        %v2012 = vld [vmem:[%s1237 + $0x48] sm:$0xff]
        %v2013 = vld [vmem:[%s1237 + $0x50] sm:$0xff]
        %v2014 = vld [vmem:[%s1237 + $0x60] sm:$0xff]
        %v2015 = vld [vmem:[%s1237 + $0x68] sm:$0xff]
        %v2016 = vld [vmem:[%s1237 + $0x70] sm:$0xff]
        %v2017 = vld [vmem:[%s1237 + $0x80] sm:$0xff]
        %v2018 = vld [vmem:[%s1237 + $0x88] sm:$0xff]
        %v2019 = vld [vmem:[%s1237 + $0x90] sm:$0xff]
        %v2020 = vld [vmem:[%s1237 + $0xa0] sm:$0xff]
        %v2021 = vld [vmem:[%s1237 + $0xa8] sm:$0xff]
        %v2022 = vld [vmem:[%s1237 + $0xb0] sm:$0xff]
        %v2023 = vld [vmem:[%s1237 + $0xc0] sm:$0xff]
        %v2024 = vld [vmem:[%s1237 + $0xc8] sm:$0xff]
        %v2025 = vld [vmem:[%s1237 + $0xd0] sm:$0xff]
        %v2026 = vld [vmem:[%s1237 + $0xe0] sm:$0xff]
        %v2027 = vld [vmem:[%s1237 + $0xe8] sm:$0xff]
        %v2028 = vld [vmem:[%s1237 + $0xf0] sm:$0xff]
        %2029 = vmatprep.subr.bf16.mxu0 %v2006
        %2030 = vmatpush1.bf16.msra.mxu0 %v2005
        %2031 = vmatprep.subr.bf16.mxu0 %v2009
        %2032 = vmatpush1.bf16.msra.mxu0 %v2008
        %2033 = vmatprep.subr.bf16.mxu0 %v2012
        %2034 = vmatpush1.bf16.msra.mxu0 %v2011
        %2035 = vmatprep.subr.bf16.mxu0 %v2015
        %2036 = vmatpush1.bf16.msra.mxu0 %v2014
        %2037 = vmatprep.subr.bf16.mxu0 %v2018
        %2038 = vmatpush1.bf16.msra.mxu0 %v2017
        %2039 = vmatprep.subr.bf16.mxu0 %v2021
        %2040 = vmatpush1.bf16.msra.mxu0 %v2020
        %2041 = vmatprep.subr.bf16.mxu0 %v2024
        %2042 = vmatpush1.bf16.msra.mxu0 %v2023
        %2043 = vmatprep.subr.bf16.mxu0 %v2027
        %2044 = vmatpush1.bf16.msra.mxu0 %v2026
        %2045 = vmatprep.subr.bf16.mxu0 0
        %2046 = vmatpush1.bf16.msra.mxu0 0
        %2047 = vmatprep.subr.bf16.mxu0 0
        %2048 = vmatpush1.bf16.msra.mxu0 0
        %2049 = vmatprep.subr.bf16.mxu0 0
        %2050 = vmatpush1.bf16.msra.mxu0 0
        %2051 = vmatprep.subr.bf16.mxu0 0
        %2052 = vmatpush1.bf16.msra.mxu0 0
        %2053 = vmatprep.subr.bf16.mxu0 0
        %2054 = vmatpush1.bf16.msra.mxu0 0
        %2055 = vmatprep.subr.bf16.mxu0 0
        %2056 = vmatpush1.bf16.msra.mxu0 0
        %2057 = vmatprep.subr.bf16.mxu0 0
        %2058 = vmatpush1.bf16.msra.mxu0 0
        %2059 = vmatprep.subr.bf16.mxu0 0
        %2060 = vmatpush1.bf16.msra.mxu0 0
        %2061 = vmatprep.mubr.bf16.mxu0 0
        %2062 = vmatmul.mubr.bf16.gmra.mrb[0].mxu0 %v2000
        %v2063 = vpop.f32.mrb[0].mxu0
        %v2064 = vadd.f32 0.0, %v2063
        %v2065 = vpop.f32.mrb[0].mxu0
        %v2066 = vadd.f32 0.0, %v2065
        %v2067 = vpop.f32.mrb[0].mxu0
        %v2068 = vpop.f32.mrb[0].mxu0
        %2069 = vdwg.mxu0
        %2070 = vmatprep.subr.bf16.mxu0 0
        %2071 = vmatpush1.bf16.msra.mxu0 %v2007
        %2072 = vmatprep.subr.bf16.mxu0 0
        %2073 = vmatpush1.bf16.msra.mxu0 %v2010
        %2074 = vmatprep.subr.bf16.mxu0 0
        %2075 = vmatpush1.bf16.msra.mxu0 %v2013
        %2076 = vmatprep.subr.bf16.mxu0 0
        %2077 = vmatpush1.bf16.msra.mxu0 %v2016
        %2078 = vmatprep.subr.bf16.mxu0 0
        %2079 = vmatpush1.bf16.msra.mxu0 %v2019
        %2080 = vmatprep.subr.bf16.mxu0 0
        %2081 = vmatpush1.bf16.msra.mxu0 %v2022
        %2082 = vmatprep.subr.bf16.mxu0 0
        %2083 = vmatpush1.bf16.msra.mxu0 %v2025
        %2084 = vmatprep.subr.bf16.mxu0 0
        %2085 = vmatpush1.bf16.msra.mxu0 %v2028
        %2086 = vmatprep.subr.bf16.mxu0 0
        %2087 = vmatpush1.bf16.msra.mxu0 0
        %2088 = vmatprep.subr.bf16.mxu0 0
        %2089 = vmatpush1.bf16.msra.mxu0 0
        %2090 = vmatprep.subr.bf16.mxu0 0
        %2091 = vmatpush1.bf16.msra.mxu0 0
        %2092 = vmatprep.subr.bf16.mxu0 0
        %2093 = vmatpush1.bf16.msra.mxu0 0
        %2094 = vmatprep.subr.bf16.mxu0 0
        %2095 = vmatpush1.bf16.msra.mxu0 0
        %2096 = vmatprep.subr.bf16.mxu0 0
        %2097 = vmatpush1.bf16.msra.mxu0 0
        %2098 = vmatprep.subr.bf16.mxu0 0
        %2099 = vmatpush1.bf16.msra.mxu0 0
        %2100 = vmatprep.subr.bf16.mxu0 0
        %2101 = vmatpush1.bf16.msra.mxu0 0
        %2102 = vmatprep.mubr.bf16.mxu0 0
        %2103 = vmatmul.mubr.bf16.gmra.mrb[0].mxu0 %v2000
        %v2104 = vpop.f32.mrb[0].mxu0
        %v2105 = vadd.f32 0.0, %v2104
        %v2106 = vpop.f32.mrb[0].mxu0
        %v2107 = vpop.f32.mrb[0].mxu0
        %v2108 = vpop.f32.mrb[0].mxu0
        %2109 = vdwg.mxu0
        %v2110 = vadd.f32 %v2001, %v2064
        %v2111 = vadd.f32 %v2002, %v2066
        %v2112 = vadd.f32 %v2003, %v2105
        %v2113 = vld [vmem:[%s1237 + $0x18] sm:$0xff]
        %v2114 = vld [vmem:[%s1237 + $0x38] sm:$0xff]
        %v2115 = vld [vmem:[%s1237 + $0x58] sm:$0xff]
        %v2116 = vld [vmem:[%s1237 + $0x78] sm:$0xff]
        %v2117 = vld [vmem:[%s1237 + $0x98] sm:$0xff]
        %v2118 = vld [vmem:[%s1237 + $0xb8] sm:$0xff]
        %v2119 = vld [vmem:[%s1237 + $0xd8] sm:$0xff]
        %v2120 = vld [vmem:[%s1237 + $0xf8] sm:$0xff]
        %2121 = vmatprep.subr.bf16.mxu0 0
        %2122 = vmatpush1.bf16.msra.mxu0 %v2113
        %2123 = vmatprep.subr.bf16.mxu0 0
        %2124 = vmatpush1.bf16.msra.mxu0 %v2114
        %2125 = vmatprep.subr.bf16.mxu0 0
        %2126 = vmatpush1.bf16.msra.mxu0 %v2115
        %2127 = vmatprep.subr.bf16.mxu0 0
        %2128 = vmatpush1.bf16.msra.mxu0 %v2116
        %2129 = vmatprep.subr.bf16.mxu0 0
        %2130 = vmatpush1.bf16.msra.mxu0 %v2117
        %2131 = vmatprep.subr.bf16.mxu0 0
        %2132 = vmatpush1.bf16.msra.mxu0 %v2118
        %2133 = vmatprep.subr.bf16.mxu0 0
        %2134 = vmatpush1.bf16.msra.mxu0 %v2119
        %2135 = vmatprep.subr.bf16.mxu0 0
        %2136 = vmatpush1.bf16.msra.mxu0 %v2120
        %2137 = vmatprep.subr.bf16.mxu0 0
        %2138 = vmatpush1.bf16.msra.mxu0 0
        %2139 = vmatprep.subr.bf16.mxu0 0
        %2140 = vmatpush1.bf16.msra.mxu0 0
        %2141 = vmatprep.subr.bf16.mxu0 0
        %2142 = vmatpush1.bf16.msra.mxu0 0
        %2143 = vmatprep.subr.bf16.mxu0 0
        %2144 = vmatpush1.bf16.msra.mxu0 0
        %2145 = vmatprep.subr.bf16.mxu0 0
        %2146 = vmatpush1.bf16.msra.mxu0 0
        %2147 = vmatprep.subr.bf16.mxu0 0
        %2148 = vmatpush1.bf16.msra.mxu0 0
        %2149 = vmatprep.subr.bf16.mxu0 0
        %2150 = vmatpush1.bf16.msra.mxu0 0
        %2151 = vmatprep.subr.bf16.mxu0 0
        %2152 = vmatpush1.bf16.msra.mxu0 0
        %2153 = vmatprep.mubr.bf16.mxu0 0
        %2154 = vmatmul.mubr.bf16.gmra.mrb[0].mxu0 %v2000
        %v2155 = vpop.f32.mrb[0].mxu0
        %v2156 = vadd.f32 0.0, %v2155
        %v2157 = vpop.f32.mrb[0].mxu0
        %v2158 = vpop.f32.mrb[0].mxu0
        %v2159 = vpop.f32.mrb[0].mxu0
        %2160 = vdwg.mxu0
        %v2161 = vadd.f32 %v2004, %v2156
        %v2162 = vxor.u32 %v2110, 2147483648
        %v2163 = vxor.u32 %v2111, 2147483648
        %v2164 = vxor.u32 %v2112, 2147483648
        %v2165 = vmul.f32 %v2162, 1.442695
        %v2166 = vpow.pop %v2165
        %v2167 = vmul.f32 %v2163, 1.442695
        %v2168 = vpow.pop %v2167
        %v2169 = vmul.f32 %v2164, 1.442695
        %v2170 = vpow.pop %v2169
        %v2171 = vadd.f32 %v2166, 1.0
        %v2172 = vadd.f32 %v2168, 1.0
        %v2173 = vadd.f32 %v2170, 1.0
        %v2174 = vrcp.pop %v2171
        %v2175 = vmul.f32 1.0, %v2174
        %v2176 = vrcp.pop %v2172
        %v2177 = vmul.f32 1.0, %v2176
        %v2178 = vrcp.pop %v2173
        %v2179 = vmul.f32 1.0, %v2178
        %v2180 = vtanh.pop %v2161
        %v2181 = vmul.f32 %v2177, %v1991
        %v2182 = vmul.f32 %v2175, %v2180
        %v2183 = vadd.f32 %v2181, %v2182
        %v2184 = vtanh.pop %v2183
        %v2185 = vmul.f32 %v2179, %v2184
        %s2186 = scalar_lea.vmem %s192, 32 [#allocation12]
        %2187 = vst [vmem:[%s2186] sm:$0xff] %v2185
        %s2188 = scalar_lea.vmem %s192, 96 [#allocation12]
        %2189 = vst [vmem:[%s2188] sm:$0xff] %v2183
        %s2190 = scalar_lea.vmem %s192, 160 [#allocation12]
        %2191 = vst [vmem:[%s2190] sm:$0xff] %v2179
        %v2192 = vpack.c.bf16 %v2185, %v2185
        %v2193 = vld [vmem:[%s983] sm:$0xff]
        %v2194 = vld [vmem:[%s983 + $0x8] sm:$0xff]
        %v2195 = vld [vmem:[%s983 + $0x10] sm:$0xff]
        %v2196 = vld [vmem:[%s983 + $0x18] sm:$0xff]
        %v2197 = vld [vmem:[%s1237] sm:$0xff]
        %v2198 = vld [vmem:[%s1237 + $0x8] sm:$0xff]
        %v2199 = vld [vmem:[%s1237 + $0x10] sm:$0xff]
        %v2200 = vld [vmem:[%s1237 + $0x20] sm:$0xff]
        %v2201 = vld [vmem:[%s1237 + $0x28] sm:$0xff]
        %v2202 = vld [vmem:[%s1237 + $0x30] sm:$0xff]
        %v2203 = vld [vmem:[%s1237 + $0x40] sm:$0xff]
        %v2204 = vld [vmem:[%s1237 + $0x48] sm:$0xff]
        %v2205 = vld [vmem:[%s1237 + $0x50] sm:$0xff]
        %v2206 = vld [vmem:[%s1237 + $0x60] sm:$0xff]
        %v2207 = vld [vmem:[%s1237 + $0x68] sm:$0xff]
        %v2208 = vld [vmem:[%s1237 + $0x70] sm:$0xff]
        %v2209 = vld [vmem:[%s1237 + $0x80] sm:$0xff]
        %v2210 = vld [vmem:[%s1237 + $0x88] sm:$0xff]
        %v2211 = vld [vmem:[%s1237 + $0x90] sm:$0xff]
        %v2212 = vld [vmem:[%s1237 + $0xa0] sm:$0xff]
        %v2213 = vld [vmem:[%s1237 + $0xa8] sm:$0xff]
        %v2214 = vld [vmem:[%s1237 + $0xb0] sm:$0xff]
        %v2215 = vld [vmem:[%s1237 + $0xc0] sm:$0xff]
        %v2216 = vld [vmem:[%s1237 + $0xc8] sm:$0xff]
        %v2217 = vld [vmem:[%s1237 + $0xd0] sm:$0xff]
        %v2218 = vld [vmem:[%s1237 + $0xe0] sm:$0xff]
        %v2219 = vld [vmem:[%s1237 + $0xe8] sm:$0xff]
        %v2220 = vld [vmem:[%s1237 + $0xf0] sm:$0xff]
        %2221 = vmatprep.subr.bf16.mxu0 %v2198
        %2222 = vmatpush1.bf16.msra.mxu0 %v2197
        %2223 = vmatprep.subr.bf16.mxu0 %v2201
        %2224 = vmatpush1.bf16.msra.mxu0 %v2200
        %2225 = vmatprep.subr.bf16.mxu0 %v2204
        %2226 = vmatpush1.bf16.msra.mxu0 %v2203
        %2227 = vmatprep.subr.bf16.mxu0 %v2207
        %2228 = vmatpush1.bf16.msra.mxu0 %v2206
        %2229 = vmatprep.subr.bf16.mxu0 %v2210
        %2230 = vmatpush1.bf16.msra.mxu0 %v2209
        %2231 = vmatprep.subr.bf16.mxu0 %v2213
        %2232 = vmatpush1.bf16.msra.mxu0 %v2212
        %2233 = vmatprep.subr.bf16.mxu0 %v2216
        %2234 = vmatpush1.bf16.msra.mxu0 %v2215
        %2235 = vmatprep.subr.bf16.mxu0 %v2219
        %2236 = vmatpush1.bf16.msra.mxu0 %v2218
        %2237 = vmatprep.subr.bf16.mxu0 0
        %2238 = vmatpush1.bf16.msra.mxu0 0
        %2239 = vmatprep.subr.bf16.mxu0 0
        %2240 = vmatpush1.bf16.msra.mxu0 0
        %2241 = vmatprep.subr.bf16.mxu0 0
        %2242 = vmatpush1.bf16.msra.mxu0 0
        %2243 = vmatprep.subr.bf16.mxu0 0
        %2244 = vmatpush1.bf16.msra.mxu0 0
        %2245 = vmatprep.subr.bf16.mxu0 0
        %2246 = vmatpush1.bf16.msra.mxu0 0
        %2247 = vmatprep.subr.bf16.mxu0 0
        %2248 = vmatpush1.bf16.msra.mxu0 0
        %2249 = vmatprep.subr.bf16.mxu0 0
        %2250 = vmatpush1.bf16.msra.mxu0 0
        %2251 = vmatprep.subr.bf16.mxu0 0
        %2252 = vmatpush1.bf16.msra.mxu0 0
        %2253 = vmatprep.mubr.bf16.mxu0 0
        %2254 = vmatmul.mubr.bf16.gmra.mrb[0].mxu0 %v2192
        %v2255 = vpop.f32.mrb[0].mxu0
        %v2256 = vadd.f32 0.0, %v2255
        %v2257 = vpop.f32.mrb[0].mxu0
        %v2258 = vadd.f32 0.0, %v2257
        %v2259 = vpop.f32.mrb[0].mxu0
        %v2260 = vpop.f32.mrb[0].mxu0
        %2261 = vdwg.mxu0
        %2262 = vmatprep.subr.bf16.mxu0 0
        %2263 = vmatpush1.bf16.msra.mxu0 %v2199
        %2264 = vmatprep.subr.bf16.mxu0 0
        %2265 = vmatpush1.bf16.msra.mxu0 %v2202
        %2266 = vmatprep.subr.bf16.mxu0 0
        %2267 = vmatpush1.bf16.msra.mxu0 %v2205
        %2268 = vmatprep.subr.bf16.mxu0 0
        %2269 = vmatpush1.bf16.msra.mxu0 %v2208
        %2270 = vmatprep.subr.bf16.mxu0 0
        %2271 = vmatpush1.bf16.msra.mxu0 %v2211
        %2272 = vmatprep.subr.bf16.mxu0 0
        %2273 = vmatpush1.bf16.msra.mxu0 %v2214
        %2274 = vmatprep.subr.bf16.mxu0 0
        %2275 = vmatpush1.bf16.msra.mxu0 %v2217
        %2276 = vmatprep.subr.bf16.mxu0 0
        %2277 = vmatpush1.bf16.msra.mxu0 %v2220
        %2278 = vmatprep.subr.bf16.mxu0 0
        %2279 = vmatpush1.bf16.msra.mxu0 0
        %2280 = vmatprep.subr.bf16.mxu0 0
        %2281 = vmatpush1.bf16.msra.mxu0 0
        %2282 = vmatprep.subr.bf16.mxu0 0
        %2283 = vmatpush1.bf16.msra.mxu0 0
        %2284 = vmatprep.subr.bf16.mxu0 0
        %2285 = vmatpush1.bf16.msra.mxu0 0
        %2286 = vmatprep.subr.bf16.mxu0 0
        %2287 = vmatpush1.bf16.msra.mxu0 0
        %2288 = vmatprep.subr.bf16.mxu0 0
        %2289 = vmatpush1.bf16.msra.mxu0 0
        %2290 = vmatprep.subr.bf16.mxu0 0
        %2291 = vmatpush1.bf16.msra.mxu0 0
        %2292 = vmatprep.subr.bf16.mxu0 0
        %2293 = vmatpush1.bf16.msra.mxu0 0
        %2294 = vmatprep.mubr.bf16.mxu0 0
        %2295 = vmatmul.mubr.bf16.gmra.mrb[0].mxu0 %v2192
        %v2296 = vpop.f32.mrb[0].mxu0
        %v2297 = vadd.f32 0.0, %v2296
        %v2298 = vpop.f32.mrb[0].mxu0
        %v2299 = vpop.f32.mrb[0].mxu0
        %v2300 = vpop.f32.mrb[0].mxu0
        %2301 = vdwg.mxu0
        %v2302 = vadd.f32 %v2193, %v2256
        %v2303 = vadd.f32 %v2194, %v2258
        %v2304 = vadd.f32 %v2195, %v2297
        %v2305 = vld [vmem:[%s1237 + $0x18] sm:$0xff]
        %v2306 = vld [vmem:[%s1237 + $0x38] sm:$0xff]
        %v2307 = vld [vmem:[%s1237 + $0x58] sm:$0xff]
        %v2308 = vld [vmem:[%s1237 + $0x78] sm:$0xff]
        %v2309 = vld [vmem:[%s1237 + $0x98] sm:$0xff]
        %v2310 = vld [vmem:[%s1237 + $0xb8] sm:$0xff]
        %v2311 = vld [vmem:[%s1237 + $0xd8] sm:$0xff]
        %v2312 = vld [vmem:[%s1237 + $0xf8] sm:$0xff]
        %2313 = vmatprep.subr.bf16.mxu0 0
        %2314 = vmatpush1.bf16.msra.mxu0 %v2305
        %2315 = vmatprep.subr.bf16.mxu0 0
        %2316 = vmatpush1.bf16.msra.mxu0 %v2306
        %2317 = vmatprep.subr.bf16.mxu0 0
        %2318 = vmatpush1.bf16.msra.mxu0 %v2307
        %2319 = vmatprep.subr.bf16.mxu0 0
        %2320 = vmatpush1.bf16.msra.mxu0 %v2308
        %2321 = vmatprep.subr.bf16.mxu0 0
        %2322 = vmatpush1.bf16.msra.mxu0 %v2309
        %2323 = vmatprep.subr.bf16.mxu0 0
        %2324 = vmatpush1.bf16.msra.mxu0 %v2310
        %2325 = vmatprep.subr.bf16.mxu0 0
        %2326 = vmatpush1.bf16.msra.mxu0 %v2311
        %2327 = vmatprep.subr.bf16.mxu0 0
        %2328 = vmatpush1.bf16.msra.mxu0 %v2312
        %2329 = vmatprep.subr.bf16.mxu0 0
        %2330 = vmatpush1.bf16.msra.mxu0 0
        %2331 = vmatprep.subr.bf16.mxu0 0
        %2332 = vmatpush1.bf16.msra.mxu0 0
        %2333 = vmatprep.subr.bf16.mxu0 0
        %2334 = vmatpush1.bf16.msra.mxu0 0
        %2335 = vmatprep.subr.bf16.mxu0 0
        %2336 = vmatpush1.bf16.msra.mxu0 0
        %2337 = vmatprep.subr.bf16.mxu0 0
        %2338 = vmatpush1.bf16.msra.mxu0 0
        %2339 = vmatprep.subr.bf16.mxu0 0
        %2340 = vmatpush1.bf16.msra.mxu0 0
        %2341 = vmatprep.subr.bf16.mxu0 0
        %2342 = vmatpush1.bf16.msra.mxu0 0
        %2343 = vmatprep.subr.bf16.mxu0 0
        %2344 = vmatpush1.bf16.msra.mxu0 0
        %2345 = vmatprep.mubr.bf16.mxu0 0
        %2346 = vmatmul.mubr.bf16.gmra.mrb[0].mxu0 %v2192
        %v2347 = vpop.f32.mrb[0].mxu0
        %v2348 = vadd.f32 0.0, %v2347
        %v2349 = vpop.f32.mrb[0].mxu0
        %v2350 = vpop.f32.mrb[0].mxu0
        %v2351 = vpop.f32.mrb[0].mxu0
        %2352 = vdwg.mxu0
        %v2353 = vadd.f32 %v2196, %v2348
        %v2354 = vxor.u32 %v2302, 2147483648
        %v2355 = vxor.u32 %v2303, 2147483648
        %v2356 = vxor.u32 %v2304, 2147483648
        %v2357 = vmul.f32 %v2354, 1.442695
        %v2358 = vpow.pop %v2357
        %v2359 = vmul.f32 %v2355, 1.442695
        %v2360 = vpow.pop %v2359
        %v2361 = vmul.f32 %v2356, 1.442695
        %v2362 = vpow.pop %v2361
        %v2363 = vadd.f32 %v2358, 1.0
        %v2364 = vadd.f32 %v2360, 1.0
        %v2365 = vadd.f32 %v2362, 1.0
        %v2366 = vrcp.pop %v2363
        %v2367 = vmul.f32 1.0, %v2366
        %v2368 = vrcp.pop %v2364
        %v2369 = vmul.f32 1.0, %v2368
        %v2370 = vrcp.pop %v2365
        %v2371 = vmul.f32 1.0, %v2370
        %v2372 = vtanh.pop %v2353
        %v2373 = vmul.f32 %v2369, %v2183
        %v2374 = vmul.f32 %v2367, %v2372
        %v2375 = vadd.f32 %v2373, %v2374
        %v2376 = vtanh.pop %v2375
        %v2377 = vmul.f32 %v2371, %v2376
        %s2378 = scalar_lea.vmem %s192, 40 [#allocation12]
        %2379 = vst [vmem:[%s2378] sm:$0xff] %v2377
        %s2380 = scalar_lea.vmem %s192, 104 [#allocation12]
        %2381 = vst [vmem:[%s2380] sm:$0xff] %v2375
        %s2382 = scalar_lea.vmem %s192, 168 [#allocation12]
        %2383 = vst [vmem:[%s2382] sm:$0xff] %v2371
        %v2384 = vpack.c.bf16 %v2377, %v2377
        %v2385 = vld [vmem:[%s1104] sm:$0xff]
        %v2386 = vld [vmem:[%s1104 + $0x8] sm:$0xff]
        %v2387 = vld [vmem:[%s1104 + $0x10] sm:$0xff]
        %v2388 = vld [vmem:[%s1104 + $0x18] sm:$0xff]
        %v2389 = vld [vmem:[%s1237] sm:$0xff]
        %v2390 = vld [vmem:[%s1237 + $0x8] sm:$0xff]
        %v2391 = vld [vmem:[%s1237 + $0x10] sm:$0xff]
        %v2392 = vld [vmem:[%s1237 + $0x20] sm:$0xff]
        %v2393 = vld [vmem:[%s1237 + $0x28] sm:$0xff]
        %v2394 = vld [vmem:[%s1237 + $0x30] sm:$0xff]
        %v2395 = vld [vmem:[%s1237 + $0x40] sm:$0xff]
        %v2396 = vld [vmem:[%s1237 + $0x48] sm:$0xff]
        %v2397 = vld [vmem:[%s1237 + $0x50] sm:$0xff]
        %v2398 = vld [vmem:[%s1237 + $0x60] sm:$0xff]
        %v2399 = vld [vmem:[%s1237 + $0x68] sm:$0xff]
        %v2400 = vld [vmem:[%s1237 + $0x70] sm:$0xff]
        %v2401 = vld [vmem:[%s1237 + $0x80] sm:$0xff]
        %v2402 = vld [vmem:[%s1237 + $0x88] sm:$0xff]
        %v2403 = vld [vmem:[%s1237 + $0x90] sm:$0xff]
        %v2404 = vld [vmem:[%s1237 + $0xa0] sm:$0xff]
        %v2405 = vld [vmem:[%s1237 + $0xa8] sm:$0xff]
        %v2406 = vld [vmem:[%s1237 + $0xb0] sm:$0xff]
        %v2407 = vld [vmem:[%s1237 + $0xc0] sm:$0xff]
        %v2408 = vld [vmem:[%s1237 + $0xc8] sm:$0xff]
        %v2409 = vld [vmem:[%s1237 + $0xd0] sm:$0xff]
        %v2410 = vld [vmem:[%s1237 + $0xe0] sm:$0xff]
        %v2411 = vld [vmem:[%s1237 + $0xe8] sm:$0xff]
        %v2412 = vld [vmem:[%s1237 + $0xf0] sm:$0xff]
        %2413 = vmatprep.subr.bf16.mxu0 %v2390
        %2414 = vmatpush1.bf16.msra.mxu0 %v2389
        %2415 = vmatprep.subr.bf16.mxu0 %v2393
        %2416 = vmatpush1.bf16.msra.mxu0 %v2392
        %2417 = vmatprep.subr.bf16.mxu0 %v2396
        %2418 = vmatpush1.bf16.msra.mxu0 %v2395
        %2419 = vmatprep.subr.bf16.mxu0 %v2399
        %2420 = vmatpush1.bf16.msra.mxu0 %v2398
        %2421 = vmatprep.subr.bf16.mxu0 %v2402
        %2422 = vmatpush1.bf16.msra.mxu0 %v2401
        %2423 = vmatprep.subr.bf16.mxu0 %v2405
        %2424 = vmatpush1.bf16.msra.mxu0 %v2404
        %2425 = vmatprep.subr.bf16.mxu0 %v2408
        %2426 = vmatpush1.bf16.msra.mxu0 %v2407
        %2427 = vmatprep.subr.bf16.mxu0 %v2411
        %2428 = vmatpush1.bf16.msra.mxu0 %v2410
        %2429 = vmatprep.subr.bf16.mxu0 0
        %2430 = vmatpush1.bf16.msra.mxu0 0
        %2431 = vmatprep.subr.bf16.mxu0 0
        %2432 = vmatpush1.bf16.msra.mxu0 0
        %2433 = vmatprep.subr.bf16.mxu0 0
        %2434 = vmatpush1.bf16.msra.mxu0 0
        %2435 = vmatprep.subr.bf16.mxu0 0
        %2436 = vmatpush1.bf16.msra.mxu0 0
        %2437 = vmatprep.subr.bf16.mxu0 0
        %2438 = vmatpush1.bf16.msra.mxu0 0
        %2439 = vmatprep.subr.bf16.mxu0 0
        %2440 = vmatpush1.bf16.msra.mxu0 0
        %2441 = vmatprep.subr.bf16.mxu0 0
        %2442 = vmatpush1.bf16.msra.mxu0 0
        %2443 = vmatprep.subr.bf16.mxu0 0
        %2444 = vmatpush1.bf16.msra.mxu0 0
        %2445 = vmatprep.mubr.bf16.mxu0 0
        %2446 = vmatmul.mubr.bf16.gmra.mrb[0].mxu0 %v2384
        %v2447 = vpop.f32.mrb[0].mxu0
        %v2448 = vadd.f32 0.0, %v2447
        %v2449 = vpop.f32.mrb[0].mxu0
        %v2450 = vadd.f32 0.0, %v2449
        %v2451 = vpop.f32.mrb[0].mxu0
        %v2452 = vpop.f32.mrb[0].mxu0
        %2453 = vdwg.mxu0
        %2454 = vmatprep.subr.bf16.mxu0 0
        %2455 = vmatpush1.bf16.msra.mxu0 %v2391
        %2456 = vmatprep.subr.bf16.mxu0 0
        %2457 = vmatpush1.bf16.msra.mxu0 %v2394
        %2458 = vmatprep.subr.bf16.mxu0 0
        %2459 = vmatpush1.bf16.msra.mxu0 %v2397
        %2460 = vmatprep.subr.bf16.mxu0 0
        %2461 = vmatpush1.bf16.msra.mxu0 %v2400
        %2462 = vmatprep.subr.bf16.mxu0 0
        %2463 = vmatpush1.bf16.msra.mxu0 %v2403
        %2464 = vmatprep.subr.bf16.mxu0 0
        %2465 = vmatpush1.bf16.msra.mxu0 %v2406
        %2466 = vmatprep.subr.bf16.mxu0 0
        %2467 = vmatpush1.bf16.msra.mxu0 %v2409
        %2468 = vmatprep.subr.bf16.mxu0 0
        %2469 = vmatpush1.bf16.msra.mxu0 %v2412
        %2470 = vmatprep.subr.bf16.mxu0 0
        %2471 = vmatpush1.bf16.msra.mxu0 0
        %2472 = vmatprep.subr.bf16.mxu0 0
        %2473 = vmatpush1.bf16.msra.mxu0 0
        %2474 = vmatprep.subr.bf16.mxu0 0
        %2475 = vmatpush1.bf16.msra.mxu0 0
        %2476 = vmatprep.subr.bf16.mxu0 0
        %2477 = vmatpush1.bf16.msra.mxu0 0
        %2478 = vmatprep.subr.bf16.mxu0 0
        %2479 = vmatpush1.bf16.msra.mxu0 0
        %2480 = vmatprep.subr.bf16.mxu0 0
        %2481 = vmatpush1.bf16.msra.mxu0 0
        %2482 = vmatprep.subr.bf16.mxu0 0
        %2483 = vmatpush1.bf16.msra.mxu0 0
        %2484 = vmatprep.subr.bf16.mxu0 0
        %2485 = vmatpush1.bf16.msra.mxu0 0
        %2486 = vmatprep.mubr.bf16.mxu0 0
        %2487 = vmatmul.mubr.bf16.gmra.mrb[0].mxu0 %v2384
        %v2488 = vpop.f32.mrb[0].mxu0
        %v2489 = vadd.f32 0.0, %v2488
        %v2490 = vpop.f32.mrb[0].mxu0
        %v2491 = vpop.f32.mrb[0].mxu0
        %v2492 = vpop.f32.mrb[0].mxu0
        %2493 = vdwg.mxu0
        %v2494 = vadd.f32 %v2385, %v2448
        %v2495 = vadd.f32 %v2386, %v2450
        %v2496 = vadd.f32 %v2387, %v2489
        %v2497 = vld [vmem:[%s1237 + $0x18] sm:$0xff]
        %v2498 = vld [vmem:[%s1237 + $0x38] sm:$0xff]
        %v2499 = vld [vmem:[%s1237 + $0x58] sm:$0xff]
        %v2500 = vld [vmem:[%s1237 + $0x78] sm:$0xff]
        %v2501 = vld [vmem:[%s1237 + $0x98] sm:$0xff]
        %v2502 = vld [vmem:[%s1237 + $0xb8] sm:$0xff]
        %v2503 = vld [vmem:[%s1237 + $0xd8] sm:$0xff]
        %v2504 = vld [vmem:[%s1237 + $0xf8] sm:$0xff]
        %2505 = vmatprep.subr.bf16.mxu0 0
        %2506 = vmatpush1.bf16.msra.mxu0 %v2497
        %2507 = vmatprep.subr.bf16.mxu0 0
        %2508 = vmatpush1.bf16.msra.mxu0 %v2498
        %2509 = vmatprep.subr.bf16.mxu0 0
        %2510 = vmatpush1.bf16.msra.mxu0 %v2499
        %2511 = vmatprep.subr.bf16.mxu0 0
        %2512 = vmatpush1.bf16.msra.mxu0 %v2500
        %2513 = vmatprep.subr.bf16.mxu0 0
        %2514 = vmatpush1.bf16.msra.mxu0 %v2501
        %2515 = vmatprep.subr.bf16.mxu0 0
        %2516 = vmatpush1.bf16.msra.mxu0 %v2502
        %2517 = vmatprep.subr.bf16.mxu0 0
        %2518 = vmatpush1.bf16.msra.mxu0 %v2503
        %2519 = vmatprep.subr.bf16.mxu0 0
        %2520 = vmatpush1.bf16.msra.mxu0 %v2504
        %2521 = vmatprep.subr.bf16.mxu0 0
        %2522 = vmatpush1.bf16.msra.mxu0 0
        %2523 = vmatprep.subr.bf16.mxu0 0
        %2524 = vmatpush1.bf16.msra.mxu0 0
        %2525 = vmatprep.subr.bf16.mxu0 0
        %2526 = vmatpush1.bf16.msra.mxu0 0
        %2527 = vmatprep.subr.bf16.mxu0 0
        %2528 = vmatpush1.bf16.msra.mxu0 0
        %2529 = vmatprep.subr.bf16.mxu0 0
        %2530 = vmatpush1.bf16.msra.mxu0 0
        %2531 = vmatprep.subr.bf16.mxu0 0
        %2532 = vmatpush1.bf16.msra.mxu0 0
        %2533 = vmatprep.subr.bf16.mxu0 0
        %2534 = vmatpush1.bf16.msra.mxu0 0
        %2535 = vmatprep.subr.bf16.mxu0 0
        %2536 = vmatpush1.bf16.msra.mxu0 0
        %2537 = vmatprep.mubr.bf16.mxu0 0
        %2538 = vmatmul.mubr.bf16.gmra.mrb[0].mxu0 %v2384
        %v2539 = vpop.f32.mrb[0].mxu0
        %v2540 = vadd.f32 0.0, %v2539
        %v2541 = vpop.f32.mrb[0].mxu0
        %v2542 = vpop.f32.mrb[0].mxu0
        %v2543 = vpop.f32.mrb[0].mxu0
        %2544 = vdwg.mxu0
        %v2545 = vadd.f32 %v2388, %v2540
        %v2546 = vxor.u32 %v2494, 2147483648
        %v2547 = vxor.u32 %v2495, 2147483648
        %v2548 = vxor.u32 %v2496, 2147483648
        %v2549 = vmul.f32 %v2546, 1.442695
        %v2550 = vpow.pop %v2549
        %v2551 = vmul.f32 %v2547, 1.442695
        %v2552 = vpow.pop %v2551
        %v2553 = vmul.f32 %v2548, 1.442695
        %v2554 = vpow.pop %v2553
        %v2555 = vadd.f32 %v2550, 1.0
        %v2556 = vadd.f32 %v2552, 1.0
        %v2557 = vadd.f32 %v2554, 1.0
        %v2558 = vrcp.pop %v2555
        %v2559 = vmul.f32 1.0, %v2558
        %v2560 = vrcp.pop %v2556
        %v2561 = vmul.f32 1.0, %v2560
        %v2562 = vrcp.pop %v2557
        %v2563 = vmul.f32 1.0, %v2562
        %v2564 = vtanh.pop %v2545
        %v2565 = vmul.f32 %v2561, %v2375
        %v2566 = vmul.f32 %v2559, %v2564
        %v2567 = vadd.f32 %v2565, %v2566
        %v2568 = vtanh.pop %v2567
        %v2569 = vmul.f32 %v2563, %v2568
        %s2570 = scalar_lea.vmem %s192, 48 [#allocation12]
        %2571 = vst [vmem:[%s2570] sm:$0xff] %v2569
        %s2572 = scalar_lea.vmem %s192, 112 [#allocation12]
        %2573 = vst [vmem:[%s2572] sm:$0xff] %v2567
        %s2574 = scalar_lea.vmem %s192, 176 [#allocation12]
        %2575 = vst [vmem:[%s2574] sm:$0xff] %v2563
        %v2576 = vpack.c.bf16 %v2569, %v2569
        %v2577 = vld [vmem:[%s1225] sm:$0xff]
        %v2578 = vld [vmem:[%s1225 + $0x8] sm:$0xff]
        %v2579 = vld [vmem:[%s1225 + $0x10] sm:$0xff]
        %v2580 = vld [vmem:[%s1225 + $0x18] sm:$0xff]
        %v2581 = vld [vmem:[%s1237] sm:$0xff]
        %v2582 = vld [vmem:[%s1237 + $0x8] sm:$0xff]
        %v2583 = vld [vmem:[%s1237 + $0x10] sm:$0xff]
        %v2584 = vld [vmem:[%s1237 + $0x20] sm:$0xff]
        %v2585 = vld [vmem:[%s1237 + $0x28] sm:$0xff]
        %v2586 = vld [vmem:[%s1237 + $0x30] sm:$0xff]
        %v2587 = vld [vmem:[%s1237 + $0x40] sm:$0xff]
        %v2588 = vld [vmem:[%s1237 + $0x48] sm:$0xff]
        %v2589 = vld [vmem:[%s1237 + $0x50] sm:$0xff]
        %v2590 = vld [vmem:[%s1237 + $0x60] sm:$0xff]
        %v2591 = vld [vmem:[%s1237 + $0x68] sm:$0xff]
        %v2592 = vld [vmem:[%s1237 + $0x70] sm:$0xff]
        %v2593 = vld [vmem:[%s1237 + $0x80] sm:$0xff]
        %v2594 = vld [vmem:[%s1237 + $0x88] sm:$0xff]
        %v2595 = vld [vmem:[%s1237 + $0x90] sm:$0xff]
        %v2596 = vld [vmem:[%s1237 + $0xa0] sm:$0xff]
        %v2597 = vld [vmem:[%s1237 + $0xa8] sm:$0xff]
        %v2598 = vld [vmem:[%s1237 + $0xb0] sm:$0xff]
        %v2599 = vld [vmem:[%s1237 + $0xc0] sm:$0xff]
        %v2600 = vld [vmem:[%s1237 + $0xc8] sm:$0xff]
        %v2601 = vld [vmem:[%s1237 + $0xd0] sm:$0xff]
        %v2602 = vld [vmem:[%s1237 + $0xe0] sm:$0xff]
        %v2603 = vld [vmem:[%s1237 + $0xe8] sm:$0xff]
        %v2604 = vld [vmem:[%s1237 + $0xf0] sm:$0xff]
        %2605 = vmatprep.subr.bf16.mxu0 %v2582
        %2606 = vmatpush1.bf16.msra.mxu0 %v2581
        %2607 = vmatprep.subr.bf16.mxu0 %v2585
        %2608 = vmatpush1.bf16.msra.mxu0 %v2584
        %2609 = vmatprep.subr.bf16.mxu0 %v2588
        %2610 = vmatpush1.bf16.msra.mxu0 %v2587
        %2611 = vmatprep.subr.bf16.mxu0 %v2591
        %2612 = vmatpush1.bf16.msra.mxu0 %v2590
        %2613 = vmatprep.subr.bf16.mxu0 %v2594
        %2614 = vmatpush1.bf16.msra.mxu0 %v2593
        %2615 = vmatprep.subr.bf16.mxu0 %v2597
        %2616 = vmatpush1.bf16.msra.mxu0 %v2596
        %2617 = vmatprep.subr.bf16.mxu0 %v2600
        %2618 = vmatpush1.bf16.msra.mxu0 %v2599
        %2619 = vmatprep.subr.bf16.mxu0 %v2603
        %2620 = vmatpush1.bf16.msra.mxu0 %v2602
        %2621 = vmatprep.subr.bf16.mxu0 0
        %2622 = vmatpush1.bf16.msra.mxu0 0
        %2623 = vmatprep.subr.bf16.mxu0 0
        %2624 = vmatpush1.bf16.msra.mxu0 0
        %2625 = vmatprep.subr.bf16.mxu0 0
        %2626 = vmatpush1.bf16.msra.mxu0 0
        %2627 = vmatprep.subr.bf16.mxu0 0
        %2628 = vmatpush1.bf16.msra.mxu0 0
        %2629 = vmatprep.subr.bf16.mxu0 0
        %2630 = vmatpush1.bf16.msra.mxu0 0
        %2631 = vmatprep.subr.bf16.mxu0 0
        %2632 = vmatpush1.bf16.msra.mxu0 0
        %2633 = vmatprep.subr.bf16.mxu0 0
        %2634 = vmatpush1.bf16.msra.mxu0 0
        %2635 = vmatprep.subr.bf16.mxu0 0
        %2636 = vmatpush1.bf16.msra.mxu0 0
        %2637 = vmatprep.mubr.bf16.mxu0 0
        %2638 = vmatmul.mubr.bf16.gmra.mrb[0].mxu0 %v2576
        %v2639 = vpop.f32.mrb[0].mxu0
        %v2640 = vadd.f32 0.0, %v2639
        %v2641 = vpop.f32.mrb[0].mxu0
        %v2642 = vadd.f32 0.0, %v2641
        %v2643 = vpop.f32.mrb[0].mxu0
        %v2644 = vpop.f32.mrb[0].mxu0
        %2645 = vdwg.mxu0
        %2646 = vmatprep.subr.bf16.mxu0 0
        %2647 = vmatpush1.bf16.msra.mxu0 %v2583
        %2648 = vmatprep.subr.bf16.mxu0 0
        %2649 = vmatpush1.bf16.msra.mxu0 %v2586
        %2650 = vmatprep.subr.bf16.mxu0 0
        %2651 = vmatpush1.bf16.msra.mxu0 %v2589
        %2652 = vmatprep.subr.bf16.mxu0 0
        %2653 = vmatpush1.bf16.msra.mxu0 %v2592
        %2654 = vmatprep.subr.bf16.mxu0 0
        %2655 = vmatpush1.bf16.msra.mxu0 %v2595
        %2656 = vmatprep.subr.bf16.mxu0 0
        %2657 = vmatpush1.bf16.msra.mxu0 %v2598
        %2658 = vmatprep.subr.bf16.mxu0 0
        %2659 = vmatpush1.bf16.msra.mxu0 %v2601
        %2660 = vmatprep.subr.bf16.mxu0 0
        %2661 = vmatpush1.bf16.msra.mxu0 %v2604
        %2662 = vmatprep.subr.bf16.mxu0 0
        %2663 = vmatpush1.bf16.msra.mxu0 0
        %2664 = vmatprep.subr.bf16.mxu0 0
        %2665 = vmatpush1.bf16.msra.mxu0 0
        %2666 = vmatprep.subr.bf16.mxu0 0
        %2667 = vmatpush1.bf16.msra.mxu0 0
        %2668 = vmatprep.subr.bf16.mxu0 0
        %2669 = vmatpush1.bf16.msra.mxu0 0
        %2670 = vmatprep.subr.bf16.mxu0 0
        %2671 = vmatpush1.bf16.msra.mxu0 0
        %2672 = vmatprep.subr.bf16.mxu0 0
        %2673 = vmatpush1.bf16.msra.mxu0 0
        %2674 = vmatprep.subr.bf16.mxu0 0
        %2675 = vmatpush1.bf16.msra.mxu0 0
        %2676 = vmatprep.subr.bf16.mxu0 0
        %2677 = vmatpush1.bf16.msra.mxu0 0
        %2678 = vmatprep.mubr.bf16.mxu0 0
        %2679 = vmatmul.mubr.bf16.gmra.mrb[0].mxu0 %v2576
        %v2680 = vpop.f32.mrb[0].mxu0
        %v2681 = vadd.f32 0.0, %v2680
        %v2682 = vpop.f32.mrb[0].mxu0
        %v2683 = vpop.f32.mrb[0].mxu0
        %v2684 = vpop.f32.mrb[0].mxu0
        %2685 = vdwg.mxu0
        %v2686 = vadd.f32 %v2577, %v2640
        %v2687 = vadd.f32 %v2578, %v2642
        %v2688 = vadd.f32 %v2579, %v2681
        %v2689 = vld [vmem:[%s1237 + $0x18] sm:$0xff]
        %v2690 = vld [vmem:[%s1237 + $0x38] sm:$0xff]
        %v2691 = vld [vmem:[%s1237 + $0x58] sm:$0xff]
        %v2692 = vld [vmem:[%s1237 + $0x78] sm:$0xff]
        %v2693 = vld [vmem:[%s1237 + $0x98] sm:$0xff]
        %v2694 = vld [vmem:[%s1237 + $0xb8] sm:$0xff]
        %v2695 = vld [vmem:[%s1237 + $0xd8] sm:$0xff]
        %v2696 = vld [vmem:[%s1237 + $0xf8] sm:$0xff]
        %2697 = vmatprep.subr.bf16.mxu0 0
        %2698 = vmatpush1.bf16.msra.mxu0 %v2689
        %2699 = vmatprep.subr.bf16.mxu0 0
        %2700 = vmatpush1.bf16.msra.mxu0 %v2690
        %2701 = vmatprep.subr.bf16.mxu0 0
        %2702 = vmatpush1.bf16.msra.mxu0 %v2691
        %2703 = vmatprep.subr.bf16.mxu0 0
        %2704 = vmatpush1.bf16.msra.mxu0 %v2692
        %2705 = vmatprep.subr.bf16.mxu0 0
        %2706 = vmatpush1.bf16.msra.mxu0 %v2693
        %2707 = vmatprep.subr.bf16.mxu0 0
        %2708 = vmatpush1.bf16.msra.mxu0 %v2694
        %2709 = vmatprep.subr.bf16.mxu0 0
        %2710 = vmatpush1.bf16.msra.mxu0 %v2695
        %2711 = vmatprep.subr.bf16.mxu0 0
        %2712 = vmatpush1.bf16.msra.mxu0 %v2696
        %2713 = vmatprep.subr.bf16.mxu0 0
        %2714 = vmatpush1.bf16.msra.mxu0 0
        %2715 = vmatprep.subr.bf16.mxu0 0
        %2716 = vmatpush1.bf16.msra.mxu0 0
        %2717 = vmatprep.subr.bf16.mxu0 0
        %2718 = vmatpush1.bf16.msra.mxu0 0
        %2719 = vmatprep.subr.bf16.mxu0 0
        %2720 = vmatpush1.bf16.msra.mxu0 0
        %2721 = vmatprep.subr.bf16.mxu0 0
        %2722 = vmatpush1.bf16.msra.mxu0 0
        %2723 = vmatprep.subr.bf16.mxu0 0
        %2724 = vmatpush1.bf16.msra.mxu0 0
        %2725 = vmatprep.subr.bf16.mxu0 0
        %2726 = vmatpush1.bf16.msra.mxu0 0
        %2727 = vmatprep.subr.bf16.mxu0 0
        %2728 = vmatpush1.bf16.msra.mxu0 0
        %2729 = vmatprep.mubr.bf16.mxu0 0
        %2730 = vmatmul.mubr.bf16.gmra.mrb[0].mxu0 %v2576
        %v2731 = vpop.f32.mrb[0].mxu0
        %v2732 = vadd.f32 0.0, %v2731
        %v2733 = vpop.f32.mrb[0].mxu0
        %v2734 = vpop.f32.mrb[0].mxu0
        %v2735 = vpop.f32.mrb[0].mxu0
        %2736 = vdwg.mxu0
        %v2737 = vadd.f32 %v2580, %v2732
        %v2738 = vxor.u32 %v2686, 2147483648
        %v2739 = vxor.u32 %v2687, 2147483648
        %v2740 = vxor.u32 %v2688, 2147483648
        %v2741 = vmul.f32 %v2738, 1.442695
        %v2742 = vpow.pop %v2741
        %v2743 = vmul.f32 %v2739, 1.442695
        %v2744 = vpow.pop %v2743
        %v2745 = vmul.f32 %v2740, 1.442695
        %v2746 = vpow.pop %v2745
        %v2747 = vadd.f32 %v2742, 1.0
        %v2748 = vadd.f32 %v2744, 1.0
        %v2749 = vadd.f32 %v2746, 1.0
        %v2750 = vrcp.pop %v2747
        %v2751 = vmul.f32 1.0, %v2750
        %v2752 = vrcp.pop %v2748
        %v2753 = vmul.f32 1.0, %v2752
        %v2754 = vrcp.pop %v2749
        %v2755 = vmul.f32 1.0, %v2754
        %v2756 = vtanh.pop %v2737
        %v2757 = vmul.f32 %v2753, %v2567
        %v2758 = vmul.f32 %v2751, %v2756
        %v2759 = vadd.f32 %v2757, %v2758
        %v2760 = vtanh.pop %v2759
        %v2761 = vmul.f32 %v2755, %v2760
        %s2762 = scalar_lea.vmem %s192, 56 [#allocation12]
        %2763 = vst [vmem:[%s2762] sm:$0xff] %v2761
        %s2764 = scalar_lea.vmem %s192, 120 [#allocation12]
        %2765 = vst [vmem:[%s2764] sm:$0xff] %v2759
        %s2766 = scalar_lea.vmem %s192, 184 [#allocation12]
        %2767 = vst [vmem:[%s2766] sm:$0xff] %v2755
        %2768 = vst [vmem:[#allocation5] sm:$0xff] %v2761
        %2769 = vst [vmem:[#allocation6] sm:$0xff] %v2759
        %s2770 = sand.u32 %s92, 1
        %s2771 = scalar_lea.sflag [#allocation9], %s2770
        %s2772 = sand.u32 %s92, 1
        %s2773 = smul.addr %s2772, 192
        %s2774 = scalar_lea.vmem [#allocation12], %s2773
        // Predicated region
        $region41: #{tpu_custom_call.1} parent=27 // pred_check
          %p2775 = pneg %p102
        $region42: #{tpu_custom_call.1} parent=27 // pred_check_branch
          %2777 = sbr.rel (%p2775) target = $region44
        $region43: #{tpu_custom_call.1} parent=27 // pred_region
          #allocation16 [shape = 'u32[6]{0}', space=smem, size = 0x18, scoped, tag = 'DMA stride descriptor']
          %s2778 = smul.u32 8, %s26
          %s2780 = ssub.s32 3072, 3072
          %2781 = vsyncadd %s2771, %s2780
          %s2782 = sadd.s32 %s25, %s2778
          %s2783 = smul.addr %s2782, 128
          %s2784 = scalar_lea.hbm %s3, %s2783
          %s2786 = sshll.u32 1, 14
          %s2787 = sxor.u32 4294967295, %s2786
          %s2790 = sshll.u32 7, 18
          %s2791 = sxor.u32 4294967295, %s2790
          %s2792 = sand.u32 0, %s2791
          %s2794 = sor.u32 %s2792, 0
          %s2796 = sshll.u32 3, 24
          %s2797 = sxor.u32 4294967295, %s2796
          %s2798 = sand.u32 %s2794, %s2797
          %s2800 = sor.u32 %s2798, 0
          %s2801 = sshll.u32 %s2774, 4
          %s2802 = int_to_ptr.vmem [resolvable:$true] %s2801
          %2808 = sst [smem:[#allocation16]] 1024
          %s2809 = scalar_lea.smem [#allocation16], 1
          %2810 = sst [smem:[%s2809]] 2048
          %s2811 = scalar_lea.smem [#allocation16], 2
          %2812 = sst [smem:[%s2811]] 8
          %s2813 = scalar_lea.smem [#allocation16], 3
          %2814 = sst [smem:[%s2813]] 128
          %s2815 = scalar_lea.smem [#allocation16], 4
          %2816 = sst [smem:[%s2815]] 128
          %s2817 = scalar_lea.smem [#allocation16], 5
          %2818 = sst [smem:[%s2817]] 8
          %2820 = dma.general %s2802, 3072, %s2784, %s2771, [#allocation15], [#allocation16], %s2800, 0
        $region44: #{tpu_custom_call.1} parent=27 // pred_fallthru
          _
      $region28: #{tpu_custom_call.1} parent=5 // pred_fallthru
        _
      %p2821 = scmp.le.s32.totalorder 2, %s16
      // Predicated region
      $region45: #{tpu_custom_call.1} parent=5 // pred_check
        %p2822 = pneg %p2821
      $region46: #{tpu_custom_call.1} parent=5 // pred_check_branch
        %2824 = sbr.rel (%p2822) target = $region48
      $region47: #{tpu_custom_call.1} parent=5 // pred_region
        %s2825 = ssub.s32 %s16, 2
        // Predicated region
        $region49: #{tpu_custom_call.1} parent=47 // pred_check
          %p2826 = pneg %p108
        $region50: #{tpu_custom_call.1} parent=47 // pred_check_branch
          %2828 = sbr.rel (%p2826) target = $region52
        $region51: #{tpu_custom_call.1} parent=47 // pred_region
          %s2829 = sand.u32 %s93, 1
          %s2830 = scalar_lea.sflag [#allocation9], %s2829
          %s2831 = sand.u32 %s93, 1
          %s2832 = smul.addr %s2831, 192
          %s2833 = scalar_lea.vmem [#allocation12], %s2832
          %2834 = dma.done %s2830, 3072
        $region52: #{tpu_custom_call.1} parent=47 // pred_fallthru
          _
      $region48: #{tpu_custom_call.1} parent=5 // pred_fallthru
        _
    $region6: #{tpu_custom_call.1} parent=1 // loop_footer
      %s20 = sadd.s32 1, %s16
    $region7: #{tpu_custom_call.1} parent=1 // loop_footer_branch
      %15 = sbr.rel target = $region3
    $region8: #{tpu_custom_call.1} parent=1 // loop_exit
      _
    %2835 = vsyncpa [#allocation8], 1
    %s2836 = scalar_lea.sflag [#allocation8], 1
    %2837 = vsyncpa %s2836, 1
    %2838 = vsyncpa [#allocation11], 1
    %2839 = vsyncpa [#allocation9], 1
    %s2840 = scalar_lea.sflag [#allocation9], 1
    %2841 = vsyncpa %s2840, 1
  %2842 = vsyncmov [#allocation3]
  %s2843 = vpop.sfrf %2842
  %p2844 = scmp.eq.s32.totalorder %s2843, 0
  %p2845 = pneg %p2844
  %2847 = shalt.err (%p2845)

</llo_original>
